<compile_context>
chip_gen: v5e
topology: v5e:2x2
jax: 0.10.0
libtpu: 0.0.40
codegen_flags: <defaults>
</compile_context>

<pallas_src>
import jax
import jax.numpy as jnp
from jax import lax
from jax.experimental import pallas as pl
from jax.experimental.pallas import tpu as pltpu
import numpy as np


# ----------------------------------------------------------------------------
# Fused Pallas kernel
# ----------------------------------------------------------------------------
def _fused_forward_kernel(x_ref,
                          bd_wih_ref, bd_b_ref, whh_f_ref, whh_b_ref,
                          uwih_ref, uwhh_ref, ub_ref,
                          w1_ref, b1_ref, w2_ref, b2_ref,
                          o_ref,
                          gx_ref, hf_hist_ref, hb_hist_ref, gxu_ref):
    """Whole SbuLSTMClassifier forward in one kernel.

    x_ref      : (T*B, F)   input rows in (t, b)-major order
    bd_wih_ref : (F, 8H)    [fwd | bwd] input-projection weights (gate order i,f,o,g)
    bd_b_ref   : (1, 8H)    combined b_ih + b_hh for both directions
    whh_*_ref  : (H, 4H)    hidden-projection weights per direction
    uwih_ref   : (2H, 4H)   uni-LSTM input projection (rows: [fwd-H | bwd-H])
    o_ref      : (B, C)     logits
    gx_ref     : (T*B, 8H)  hoisted bidirectional input projections
    h*_hist    : (T*B, H)   per-timestep hidden histories (fwd / bwd)
    gxu_ref    : (T*B, 4H)  hoisted uni-LSTM input projection
    """
    TB = x_ref.shape[0]
    H = whh_f_ref.shape[0]
    G = 4 * H
    B = o_ref.shape[0]
    T = TB // B

    # ---- hoisted input projection: one big MXU matmul for both directions ----
    x = x_ref[...]                                                   # (T*B, F)
    gx_ref[...] = (jnp.dot(x, bd_wih_ref[...], preferred_element_type=jnp.float32)
                   + bd_b_ref[...])

    def lstm_cell(gates, c):
        # Gate order (after wrapper-side permutation): i, f, o, g.
        # One sigmoid over the contiguous 3H block, one tanh over the H block.
        sg = jax.nn.sigmoid(gates[:, 0:3 * H])
        g_g = jnp.tanh(gates[:, 3 * H:4 * H])
        i_g = sg[:, 0 * H:1 * H]
        f_g = sg[:, 1 * H:2 * H]
        o_g = sg[:, 2 * H:3 * H]
        c_new = f_g * c + i_g * g_g
        h_new = o_g * jnp.tanh(c_new)
        return h_new, c_new

    zero = jnp.zeros((B, H), jnp.float32)

    # ---- bidirectional recurrence: fwd + bwd share one unrolled loop ----
    def bd_body(t, carry):
        hf, cf, hb, cb = carry
        rf = t * B                 # forward direction: original time t
        rb = (T - 1 - t) * B       # backward direction: original time T-1-t
        gates_f = gx_ref[pl.ds(rf, B), 0:G] + jnp.dot(
            hf, whh_f_ref[...], preferred_element_type=jnp.float32)
        hf, cf = lstm_cell(gates_f, cf)
        hf_hist_ref[pl.ds(rf, B), :] = hf
        gates_b = gx_ref[pl.ds(rb, B), G:2 * G] + jnp.dot(
            hb, whh_b_ref[...], preferred_element_type=jnp.float32)
        hb, cb = lstm_cell(gates_b, cb)
        hb_hist_ref[pl.ds(rb, B), :] = hb
        return hf, cf, hb, cb

    lax.fori_loop(0, T, bd_body, (zero, zero, zero, zero), unroll=True)

    # ---- hoisted uni-LSTM input projection over the full history ----
    # Equivalent to concat([hf, hb], -1) @ uni_wih, done as a split matmul so
    # no in-kernel concat / lane-subrange writes are needed.
    gxu_ref[...] = (
        jnp.dot(hf_hist_ref[...], uwih_ref[0:H, :],
                preferred_element_type=jnp.float32)
        + jnp.dot(hb_hist_ref[...], uwih_ref[H:2 * H, :],
                  preferred_element_type=jnp.float32)
        + ub_ref[...])

    def uni_body(t, carry):
        h, c = carry
        gates = gxu_ref[pl.ds(t * B, B), :] + jnp.dot(
            h, uwhh_ref[...], preferred_element_type=jnp.float32)
        return lstm_cell(gates, c)

    h_last, _ = lax.fori_loop(0, T, uni_body, (zero, zero), unroll=True)

    # ---- classifier: Linear -> ReLU -> (Dropout=identity) -> Linear ----
    hid = jnp.maximum(
        jnp.dot(h_last, w1_ref[...], preferred_element_type=jnp.float32)
        + b1_ref[...], 0.0)
    o_ref[...] = (jnp.dot(hid, w2_ref[...], preferred_element_type=jnp.float32)
                  + b2_ref[...]).astype(o_ref.dtype)


# ----------------------------------------------------------------------------
# Wrapper
# ----------------------------------------------------------------------------
def _perm_gates(w):
    """Permute last-axis gate blocks from PyTorch [i, f, g, o] to [i, f, o, g]."""
    i, f, g, o = jnp.split(w, 4, axis=-1)
    return jnp.concatenate([i, f, o, g], axis=-1)


def sbu_lstm_classifier_forward(x_nchw, params):
    """Full forward pass.  x_nchw: (B, 1, F, T) -> logits (B, num_classes)."""
    B, C_in, F, T = x_nchw.shape
    assert C_in == 1
    H = params["hidden_dim"]
    num_classes = params["w2"].shape[1]

    # (B,1,F,T) -> (T*B, F) rows in (t, b)-major order.  Tiny XLA copy; all
    # compute (both LSTMs + head) is fused into the single pallas_call.
    x2d = jnp.transpose(x_nchw.reshape(B, F, T), (2, 0, 1)).reshape(T * B, F)
    x2d = x2d.astype(jnp.float32)

    # Gate-permute + fuse both directions' input-projection weights once.
    bd_wih = jnp.concatenate(
        [_perm_gates(params["bd_wih_f"]), _perm_gates(params["bd_wih_b"])], axis=1)
    bd_b = jnp.concatenate(
        [_perm_gates(params["bd_b_f"]), _perm_gates(params["bd_b_b"])], axis=1)

    operands = (
        x2d,
        bd_wih, bd_b,
        _perm_gates(params["bd_whh_f"]), _perm_gates(params["bd_whh_b"]),
        _perm_gates(params["uni_wih"]), _perm_gates(params["uni_whh"]),
        _perm_gates(params["uni_b"]),
        params["w1"], params["b1"], params["w2"], params["b2"],
    )

    def full_spec(a):
        nd = a.ndim
        return pl.BlockSpec(a.shape, lambda *_, nd=nd: (0,) * nd)

    return pl.pallas_call(
        _fused_forward_kernel,
        out_shape=jax.ShapeDtypeStruct((B, num_classes), jnp.float32),
        in_specs=[full_spec(a) for a in operands],
        out_specs=pl.BlockSpec((B, num_classes), lambda *_: (0, 0)),
        scratch_shapes=[
            pltpu.VMEM((T * B, 8 * H), jnp.float32),   # gx (fwd | bwd)
            pltpu.VMEM((T * B, H), jnp.float32),       # hf_hist
            pltpu.VMEM((T * B, H), jnp.float32),       # hb_hist
            pltpu.VMEM((T * B, 4 * H), jnp.float32),   # gxu
        ],
    )(*operands)


# ----------------------------------------------------------------------------
# Pure-JAX reference (lax.scan) for verification
# ----------------------------------------------------------------------------
def _ref_lstm(x_tbf, w_ih, w_hh, b, hidden, reverse=False):
    T, B, F = x_tbf.shape
    H = hidden
    xs = x_tbf[::-1] if reverse else x_tbf

    def step(carry, x_t):
        h, c = carry
        gates = x_t @ w_ih + h @ w_hh + b[0]
        i_g = jax.nn.sigmoid(gates[:, 0 * H:1 * H])
        f_g = jax.nn.sigmoid(gates[:, 1 * H:2 * H])
        g_g = jnp.tanh(gates[:, 2 * H:3 * H])
        o_g = jax.nn.sigmoid(gates[:, 3 * H:4 * H])
        c_new = f_g * c + i_g * g_g
        h_new = o_g * jnp.tanh(c_new)
        return (h_new, c_new), h_new

    init = (jnp.zeros((B, H), jnp.float32), jnp.zeros((B, H), jnp.float32))
    _, hs = lax.scan(step, init, xs)
    return hs[::-1] if reverse else hs


def _ref_forward(x_nchw, params):
    B, C, F, T = x_nchw.shape
    x_tbf = jnp.transpose(x_nchw.reshape(B, F, T), (2, 0, 1)).astype(jnp.float32)
    H = params["hidden_dim"]
    fwd = _ref_lstm(x_tbf, params["bd_wih_f"], params["bd_whh_f"], params["bd_b_f"], H)
    bwd = _ref_lstm(x_tbf, params["bd_wih_b"], params["bd_whh_b"], params["bd_b_b"], H,
                    reverse=True)
    bd_out = jnp.concatenate([fwd, bwd], axis=-1)
    uni = _ref_lstm(bd_out, params["uni_wih"], params["uni_whh"], params["uni_b"], H)
    last = uni[T - 1]
    h1 = jnp.maximum(last @ params["w1"] + params["b1"][0], 0.0)
    return h1 @ params["w2"] + params["b2"][0]


# ----------------------------------------------------------------------------
# Deterministic parameter init (PyTorch-style uniform(-1/sqrt(H), 1/sqrt(H)))
# ----------------------------------------------------------------------------
def make_params(key, n_mels, hidden_dim, num_classes):
    H = hidden_dim
    k = 1.0 / np.sqrt(H)
    keys = jax.random.split(key, 16)
    u = lambda kk, shape, bound: jax.random.uniform(
        kk, shape, jnp.float32, minval=-bound, maxval=bound)

    return {
        "hidden_dim": H,
        # bidirectional LSTM (forward / backward directions), PyTorch gate
        # order [i, f, g, o]; wrapper permutes to the kernel's [i, f, o, g].
        "bd_wih_f": u(keys[0], (n_mels, 4 * H), k),
        "bd_whh_f": u(keys[1], (H, 4 * H), k),
        "bd_b_f":   u(keys[2], (1, 4 * H), k),      # b_ih + b_hh combined
        "bd_wih_b": u(keys[3], (n_mels, 4 * H), k),
        "bd_whh_b": u(keys[4], (H, 4 * H), k),
        "bd_b_b":   u(keys[5], (1, 4 * H), k),
        # unidirectional LSTM (input size 2H)
        "uni_wih":  u(keys[6], (2 * H, 4 * H), k),
        "uni_whh":  u(keys[7], (H, 4 * H), k),
        "uni_b":    u(keys[8], (1, 4 * H), k),
        # classifier head
        "w1": u(keys[9], (H, 64), 1.0 / np.sqrt(H)),
        "b1": u(keys[10], (1, 64), 1.0 / np.sqrt(H)),
        "w2": u(keys[11], (64, num_classes), 1.0 / np.sqrt(64)),
        "b2": u(keys[12], (1, num_classes), 1.0 / np.sqrt(64)),
    }


# ----------------------------------------------------------------------------
if __name__ == "__main__":
    B, C, n_mels, T = 2, 1, 16, 8
    hidden_dim, num_classes = 32, 10

    key = jax.random.PRNGKey(0)
    kx, kp = jax.random.split(key)
    x = jax.random.normal(kx, (B, C, n_mels, T), jnp.float32)
    params = make_params(kp, n_mels, hidden_dim, num_classes)

    logits = jax.block_until_ready(sbu_lstm_classifier_forward(x, params))
    ref = jax.block_until_ready(_ref_forward(x, params))

    assert logits.shape == (B, num_classes)
    np.testing.assert_allclose(np.asarray(logits), np.asarray(ref),
                               rtol=1e-4, atol=1e-4)
    print("KERNEL_OK")
</pallas_src>

<mosaic_0001>
module attributes {stable_mosaic.version = 11 : i64} {
  func.func @_fused_forward_kernel(%arg0: memref<16x16xf32, #tpu.memory_space<vmem>>, %arg1: memref<16x256xf32, #tpu.memory_space<vmem>>, %arg2: memref<1x256xf32, #tpu.memory_space<vmem>>, %arg3: memref<32x128xf32, #tpu.memory_space<vmem>>, %arg4: memref<32x128xf32, #tpu.memory_space<vmem>>, %arg5: memref<64x128xf32, #tpu.memory_space<vmem>>, %arg6: memref<32x128xf32, #tpu.memory_space<vmem>>, %arg7: memref<1x128xf32, #tpu.memory_space<vmem>>, %arg8: memref<32x64xf32, #tpu.memory_space<vmem>>, %arg9: memref<1x64xf32, #tpu.memory_space<vmem>>, %arg10: memref<64x10xf32, #tpu.memory_space<vmem>>, %arg11: memref<1x10xf32, #tpu.memory_space<vmem>>, %arg12: memref<2x10xf32, #tpu.memory_space<vmem>>, %arg13: memref<16x256xf32, #tpu.memory_space<vmem>>, %arg14: memref<16x32xf32, #tpu.memory_space<vmem>>, %arg15: memref<16x32xf32, #tpu.memory_space<vmem>>, %arg16: memref<16x128xf32, #tpu.memory_space<vmem>>) attributes {dimension_semantics = [], scalar_prefetch = 0 : i64, scratch_operands = 4 : i64, tpu.core_type = #tpu.core_type<tc>} {
    %c0 = arith.constant 0 : index
    %c0_0 = arith.constant 0 : index
    %0 = vector.load %arg0[%c0, %c0_0] : memref<16x16xf32, #tpu.memory_space<vmem>>, vector<16x16xf32>
    %c0_1 = arith.constant 0 : index
    %c0_2 = arith.constant 0 : index
    %1 = vector.load %arg1[%c0_1, %c0_2] : memref<16x256xf32, #tpu.memory_space<vmem>>, vector<16x256xf32>
    %cst = arith.constant dense<0.000000e+00> : vector<16x256xf32>
    %2 = tpu.matmul %0, %1, %cst {dimension_numbers = #tpu.dot_dimension_numbers<[1], [0], [0], [1], [0, 0, 1, 1], [], []>} : vector<16x16xf32>, vector<16x256xf32>, vector<16x256xf32> -> vector<16x256xf32>
    %c0_3 = arith.constant 0 : index
    %c0_4 = arith.constant 0 : index
    %3 = vector.load %arg2[%c0_3, %c0_4] : memref<1x256xf32, #tpu.memory_space<vmem>>, vector<1x256xf32>
    %4 = vector.broadcast %3 : vector<1x256xf32> to vector<16x256xf32>
    %5 = arith.addf %2, %4 : vector<16x256xf32>
    %c0_5 = arith.constant 0 : index
    %c0_6 = arith.constant 0 : index
    %6 = vector.load %arg13[%c0_5, %c0_6] : memref<16x256xf32, #tpu.memory_space<vmem>>, vector<16x256xf32>
    tpu.vector_store %arg13[%c0_5, %c0_6], %5 {strides = array<i32>} : memref<16x256xf32, #tpu.memory_space<vmem>>, vector<16x256xf32>,
    %cst_7 = arith.constant 0.000000e+00 : f32
    %7 = vector.broadcast %cst_7 : f32 to vector<2x32xf32>
    %c0_i32 = arith.constant 0 : i32
    %c2_i32 = arith.constant 2 : i32
    %8 = arith.muli %c0_i32, %c2_i32 : i32
    %c7_i32 = arith.constant 7 : i32
    %9 = arith.subi %c7_i32, %c0_i32 : i32
    %c2_i32_8 = arith.constant 2 : i32
    %10 = arith.muli %9, %c2_i32_8 : i32
    %11 = arith.index_cast %8 : i32 to index
    %c0_9 = arith.constant 0 : index
    %12 = vector.load %arg13[%11, %c0_9] : memref<16x256xf32, #tpu.memory_space<vmem>>, vector<2x128xf32>
    %c0_10 = arith.constant 0 : index
    %c0_11 = arith.constant 0 : index
    %13 = vector.load %arg3[%c0_10, %c0_11] : memref<32x128xf32, #tpu.memory_space<vmem>>, vector<32x128xf32>
    %cst_12 = arith.constant dense<0.000000e+00> : vector<2x128xf32>
    %14 = tpu.matmul %7, %13, %cst_12 {dimension_numbers = #tpu.dot_dimension_numbers<[1], [0], [0], [1], [0, 0, 1, 1], [], []>} : vector<2x32xf32>, vector<32x128xf32>, vector<2x128xf32> -> vector<2x128xf32>
    %15 = arith.addf %12, %14 : vector<2x128xf32>
    %16 = vector.extract_strided_slice %15 {offsets = [0, 0], sizes = [2, 96], strides = [1, 1]} : vector<2x128xf32> to vector<2x96xf32>
    %17 = arith.negf %16 : vector<2x96xf32>
    %18 = math.exp %17 : vector<2x96xf32>
    %cst_13 = arith.constant 1.000000e+00 : f32
    %19 = vector.broadcast %cst_13 : f32 to vector<2x96xf32>
    %20 = arith.addf %19, %18 : vector<2x96xf32>
    %21 = arith.divf %19, %20 : vector<2x96xf32>
    %22 = vector.extract_strided_slice %15 {offsets = [0, 96], sizes = [2, 32], strides = [1, 1]} : vector<2x128xf32> to vector<2x32xf32>
    %23 = math.tanh %22 : vector<2x32xf32>
    %24 = vector.extract_strided_slice %21 {offsets = [0, 0], sizes = [2, 32], strides = [1, 1]} : vector<2x96xf32> to vector<2x32xf32>
    %25 = vector.extract_strided_slice %21 {offsets = [0, 32], sizes = [2, 32], strides = [1, 1]} : vector<2x96xf32> to vector<2x32xf32>
    %26 = vector.extract_strided_slice %21 {offsets = [0, 64], sizes = [2, 32], strides = [1, 1]} : vector<2x96xf32> to vector<2x32xf32>
    %27 = arith.mulf %25, %7 : vector<2x32xf32>
    %28 = arith.mulf %24, %23 : vector<2x32xf32>
    %29 = arith.addf %27, %28 : vector<2x32xf32>
    %30 = math.tanh %29 : vector<2x32xf32>
    %31 = arith.mulf %26, %30 : vector<2x32xf32>
    %32 = arith.index_cast %8 : i32 to index
    %c0_14 = arith.constant 0 : index
    %33 = vector.load %arg14[%32, %c0_14] : memref<16x32xf32, #tpu.memory_space<vmem>>, vector<2x32xf32>
    tpu.vector_store %arg14[%32, %c0_14], %31 {strides = array<i32>} : memref<16x32xf32, #tpu.memory_space<vmem>>, vector<2x32xf32>,
    %34 = arith.index_cast %10 : i32 to index
    %c128 = arith.constant 128 : index
    %35 = vector.load %arg13[%34, %c128] : memref<16x256xf32, #tpu.memory_space<vmem>>, vector<2x128xf32>
    %c0_15 = arith.constant 0 : index
    %c0_16 = arith.constant 0 : index
    %36 = vector.load %arg4[%c0_15, %c0_16] : memref<32x128xf32, #tpu.memory_space<vmem>>, vector<32x128xf32>
    %cst_17 = arith.constant dense<0.000000e+00> : vector<2x128xf32>
    %37 = tpu.matmul %7, %36, %cst_17 {dimension_numbers = #tpu.dot_dimension_numbers<[1], [0], [0], [1], [0, 0, 1, 1], [], []>} : vector<2x32xf32>, vector<32x128xf32>, vector<2x128xf32> -> vector<2x128xf32>
    %38 = arith.addf %35, %37 : vector<2x128xf32>
    %39 = vector.extract_strided_slice %38 {offsets = [0, 0], sizes = [2, 96], strides = [1, 1]} : vector<2x128xf32> to vector<2x96xf32>
    %40 = arith.negf %39 : vector<2x96xf32>
    %41 = math.exp %40 : vector<2x96xf32>
    %cst_18 = arith.constant 1.000000e+00 : f32
    %42 = vector.broadcast %cst_18 : f32 to vector<2x96xf32>
    %43 = arith.addf %42, %41 : vector<2x96xf32>
    %44 = arith.divf %42, %43 : vector<2x96xf32>
    %45 = vector.extract_strided_slice %38 {offsets = [0, 96], sizes = [2, 32], strides = [1, 1]} : vector<2x128xf32> to vector<2x32xf32>
    %46 = math.tanh %45 : vector<2x32xf32>
    %47 = vector.extract_strided_slice %44 {offsets = [0, 0], sizes = [2, 32], strides = [1, 1]} : vector<2x96xf32> to vector<2x32xf32>
    %48 = vector.extract_strided_slice %44 {offsets = [0, 32], sizes = [2, 32], strides = [1, 1]} : vector<2x96xf32> to vector<2x32xf32>
    %49 = vector.extract_strided_slice %44 {offsets = [0, 64], sizes = [2, 32], strides = [1, 1]} : vector<2x96xf32> to vector<2x32xf32>
    %50 = arith.mulf %48, %7 : vector<2x32xf32>
    %51 = arith.mulf %47, %46 : vector<2x32xf32>
    %52 = arith.addf %50, %51 : vector<2x32xf32>
    %53 = math.tanh %52 : vector<2x32xf32>
    %54 = arith.mulf %49, %53 : vector<2x32xf32>
    %55 = arith.index_cast %10 : i32 to index
    %c0_19 = arith.constant 0 : index
    %56 = vector.load %arg15[%55, %c0_19] : memref<16x32xf32, #tpu.memory_space<vmem>>, vector<2x32xf32>
    tpu.vector_store %arg15[%55, %c0_19], %54 {strides = array<i32>} : memref<16x32xf32, #tpu.memory_space<vmem>>, vector<2x32xf32>,
    %c1_i32 = arith.constant 1 : i32
    %c2_i32_20 = arith.constant 2 : i32
    %57 = arith.muli %c1_i32, %c2_i32_20 : i32
    %c7_i32_21 = arith.constant 7 : i32
    %58 = arith.subi %c7_i32_21, %c1_i32 : i32
    %c2_i32_22 = arith.constant 2 : i32
    %59 = arith.muli %58, %c2_i32_22 : i32
    %60 = arith.index_cast %57 : i32 to index
    %c0_23 = arith.constant 0 : index
    %61 = vector.load %arg13[%60, %c0_23] : memref<16x256xf32, #tpu.memory_space<vmem>>, vector<2x128xf32>
    %c0_24 = arith.constant 0 : index
    %c0_25 = arith.constant 0 : index
    %62 = vector.load %arg3[%c0_24, %c0_25] : memref<32x128xf32, #tpu.memory_space<vmem>>, vector<32x128xf32>
    %cst_26 = arith.constant dense<0.000000e+00> : vector<2x128xf32>
    %63 = tpu.matmul %31, %62, %cst_26 {dimension_numbers = #tpu.dot_dimension_numbers<[1], [0], [0], [1], [0, 0, 1, 1], [], []>} : vector<2x32xf32>, vector<32x128xf32>, vector<2x128xf32> -> vector<2x128xf32>
    %64 = arith.addf %61, %63 : vector<2x128xf32>
    %65 = vector.extract_strided_slice %64 {offsets = [0, 0], sizes = [2, 96], strides = [1, 1]} : vector<2x128xf32> to vector<2x96xf32>
    %66 = arith.negf %65 : vector<2x96xf32>
    %67 = math.exp %66 : vector<2x96xf32>
    %cst_27 = arith.constant 1.000000e+00 : f32
    %68 = vector.broadcast %cst_27 : f32 to vector<2x96xf32>
    %69 = arith.addf %68, %67 : vector<2x96xf32>
    %70 = arith.divf %68, %69 : vector<2x96xf32>
    %71 = vector.extract_strided_slice %64 {offsets = [0, 96], sizes = [2, 32], strides = [1, 1]} : vector<2x128xf32> to vector<2x32xf32>
    %72 = math.tanh %71 : vector<2x32xf32>
    %73 = vector.extract_strided_slice %70 {offsets = [0, 0], sizes = [2, 32], strides = [1, 1]} : vector<2x96xf32> to vector<2x32xf32>
    %74 = vector.extract_strided_slice %70 {offsets = [0, 32], sizes = [2, 32], strides = [1, 1]} : vector<2x96xf32> to vector<2x32xf32>
    %75 = vector.extract_strided_slice %70 {offsets = [0, 64], sizes = [2, 32], strides = [1, 1]} : vector<2x96xf32> to vector<2x32xf32>
    %76 = arith.mulf %74, %29 : vector<2x32xf32>
    %77 = arith.mulf %73, %72 : vector<2x32xf32>
    %78 = arith.addf %76, %77 : vector<2x32xf32>
    %79 = math.tanh %78 : vector<2x32xf32>
    %80 = arith.mulf %75, %79 : vector<2x32xf32>
    %81 = arith.index_cast %57 : i32 to index
    %c0_28 = arith.constant 0 : index
    %82 = vector.load %arg14[%81, %c0_28] : memref<16x32xf32, #tpu.memory_space<vmem>>, vector<2x32xf32>
    tpu.vector_store %arg14[%81, %c0_28], %80 {strides = array<i32>} : memref<16x32xf32, #tpu.memory_space<vmem>>, vector<2x32xf32>,
    %83 = arith.index_cast %59 : i32 to index
    %c128_29 = arith.constant 128 : index
    %84 = vector.load %arg13[%83, %c128_29] : memref<16x256xf32, #tpu.memory_space<vmem>>, vector<2x128xf32>
    %c0_30 = arith.constant 0 : index
    %c0_31 = arith.constant 0 : index
    %85 = vector.load %arg4[%c0_30, %c0_31] : memref<32x128xf32, #tpu.memory_space<vmem>>, vector<32x128xf32>
    %cst_32 = arith.constant dense<0.000000e+00> : vector<2x128xf32>
    %86 = tpu.matmul %54, %85, %cst_32 {dimension_numbers = #tpu.dot_dimension_numbers<[1], [0], [0], [1], [0, 0, 1, 1], [], []>} : vector<2x32xf32>, vector<32x128xf32>, vector<2x128xf32> -> vector<2x128xf32>
    %87 = arith.addf %84, %86 : vector<2x128xf32>
    %88 = vector.extract_strided_slice %87 {offsets = [0, 0], sizes = [2, 96], strides = [1, 1]} : vector<2x128xf32> to vector<2x96xf32>
    %89 = arith.negf %88 : vector<2x96xf32>
    %90 = math.exp %89 : vector<2x96xf32>
    %cst_33 = arith.constant 1.000000e+00 : f32
    %91 = vector.broadcast %cst_33 : f32 to vector<2x96xf32>
    %92 = arith.addf %91, %90 : vector<2x96xf32>
    %93 = arith.divf %91, %92 : vector<2x96xf32>
    %94 = vector.extract_strided_slice %87 {offsets = [0, 96], sizes = [2, 32], strides = [1, 1]} : vector<2x128xf32> to vector<2x32xf32>
    %95 = math.tanh %94 : vector<2x32xf32>
    %96 = vector.extract_strided_slice %93 {offsets = [0, 0], sizes = [2, 32], strides = [1, 1]} : vector<2x96xf32> to vector<2x32xf32>
    %97 = vector.extract_strided_slice %93 {offsets = [0, 32], sizes = [2, 32], strides = [1, 1]} : vector<2x96xf32> to vector<2x32xf32>
    %98 = vector.extract_strided_slice %93 {offsets = [0, 64], sizes = [2, 32], strides = [1, 1]} : vector<2x96xf32> to vector<2x32xf32>
    %99 = arith.mulf %97, %52 : vector<2x32xf32>
    %100 = arith.mulf %96, %95 : vector<2x32xf32>
    %101 = arith.addf %99, %100 : vector<2x32xf32>
    %102 = math.tanh %101 : vector<2x32xf32>
    %103 = arith.mulf %98, %102 : vector<2x32xf32>
    %104 = arith.index_cast %59 : i32 to index
    %c0_34 = arith.constant 0 : index
    %105 = vector.load %arg15[%104, %c0_34] : memref<16x32xf32, #tpu.memory_space<vmem>>, vector<2x32xf32>
    tpu.vector_store %arg15[%104, %c0_34], %103 {strides = array<i32>} : memref<16x32xf32, #tpu.memory_space<vmem>>, vector<2x32xf32>,
    %c2_i32_35 = arith.constant 2 : i32
    %c2_i32_36 = arith.constant 2 : i32
    %106 = arith.muli %c2_i32_35, %c2_i32_36 : i32
    %c7_i32_37 = arith.constant 7 : i32
    %107 = arith.subi %c7_i32_37, %c2_i32_35 : i32
    %c2_i32_38 = arith.constant 2 : i32
    %108 = arith.muli %107, %c2_i32_38 : i32
    %109 = arith.index_cast %106 : i32 to index
    %c0_39 = arith.constant 0 : index
    %110 = vector.load %arg13[%109, %c0_39] : memref<16x256xf32, #tpu.memory_space<vmem>>, vector<2x128xf32>
    %c0_40 = arith.constant 0 : index
    %c0_41 = arith.constant 0 : index
    %111 = vector.load %arg3[%c0_40, %c0_41] : memref<32x128xf32, #tpu.memory_space<vmem>>, vector<32x128xf32>
    %cst_42 = arith.constant dense<0.000000e+00> : vector<2x128xf32>
    %112 = tpu.matmul %80, %111, %cst_42 {dimension_numbers = #tpu.dot_dimension_numbers<[1], [0], [0], [1], [0, 0, 1, 1], [], []>} : vector<2x32xf32>, vector<32x128xf32>, vector<2x128xf32> -> vector<2x128xf32>
    %113 = arith.addf %110, %112 : vector<2x128xf32>
    %114 = vector.extract_strided_slice %113 {offsets = [0, 0], sizes = [2, 96], strides = [1, 1]} : vector<2x128xf32> to vector<2x96xf32>
    %115 = arith.negf %114 : vector<2x96xf32>
    %116 = math.exp %115 : vector<2x96xf32>
    %cst_43 = arith.constant 1.000000e+00 : f32
    %117 = vector.broadcast %cst_43 : f32 to vector<2x96xf32>
    %118 = arith.addf %117, %116 : vector<2x96xf32>
    %119 = arith.divf %117, %118 : vector<2x96xf32>
    %120 = vector.extract_strided_slice %113 {offsets = [0, 96], sizes = [2, 32], strides = [1, 1]} : vector<2x128xf32> to vector<2x32xf32>
    %121 = math.tanh %120 : vector<2x32xf32>
    %122 = vector.extract_strided_slice %119 {offsets = [0, 0], sizes = [2, 32], strides = [1, 1]} : vector<2x96xf32> to vector<2x32xf32>
    %123 = vector.extract_strided_slice %119 {offsets = [0, 32], sizes = [2, 32], strides = [1, 1]} : vector<2x96xf32> to vector<2x32xf32>
    %124 = vector.extract_strided_slice %119 {offsets = [0, 64], sizes = [2, 32], strides = [1, 1]} : vector<2x96xf32> to vector<2x32xf32>
    %125 = arith.mulf %123, %78 : vector<2x32xf32>
    %126 = arith.mulf %122, %121 : vector<2x32xf32>
    %127 = arith.addf %125, %126 : vector<2x32xf32>
    %128 = math.tanh %127 : vector<2x32xf32>
    %129 = arith.mulf %124, %128 : vector<2x32xf32>
    %130 = arith.index_cast %106 : i32 to index
    %c0_44 = arith.constant 0 : index
    %131 = vector.load %arg14[%130, %c0_44] : memref<16x32xf32, #tpu.memory_space<vmem>>, vector<2x32xf32>
    tpu.vector_store %arg14[%130, %c0_44], %129 {strides = array<i32>} : memref<16x32xf32, #tpu.memory_space<vmem>>, vector<2x32xf32>,
    %132 = arith.index_cast %108 : i32 to index
    %c128_45 = arith.constant 128 : index
    %133 = vector.load %arg13[%132, %c128_45] : memref<16x256xf32, #tpu.memory_space<vmem>>, vector<2x128xf32>
    %c0_46 = arith.constant 0 : index
    %c0_47 = arith.constant 0 : index
    %134 = vector.load %arg4[%c0_46, %c0_47] : memref<32x128xf32, #tpu.memory_space<vmem>>, vector<32x128xf32>
    %cst_48 = arith.constant dense<0.000000e+00> : vector<2x128xf32>
    %135 = tpu.matmul %103, %134, %cst_48 {dimension_numbers = #tpu.dot_dimension_numbers<[1], [0], [0], [1], [0, 0, 1, 1], [], []>} : vector<2x32xf32>, vector<32x128xf32>, vector<2x128xf32> -> vector<2x128xf32>
    %136 = arith.addf %133, %135 : vector<2x128xf32>
    %137 = vector.extract_strided_slice %136 {offsets = [0, 0], sizes = [2, 96], strides = [1, 1]} : vector<2x128xf32> to vector<2x96xf32>
    %138 = arith.negf %137 : vector<2x96xf32>
    %139 = math.exp %138 : vector<2x96xf32>
    %cst_49 = arith.constant 1.000000e+00 : f32
    %140 = vector.broadcast %cst_49 : f32 to vector<2x96xf32>
    %141 = arith.addf %140, %139 : vector<2x96xf32>
    %142 = arith.divf %140, %141 : vector<2x96xf32>
    %143 = vector.extract_strided_slice %136 {offsets = [0, 96], sizes = [2, 32], strides = [1, 1]} : vector<2x128xf32> to vector<2x32xf32>
    %144 = math.tanh %143 : vector<2x32xf32>
    %145 = vector.extract_strided_slice %142 {offsets = [0, 0], sizes = [2, 32], strides = [1, 1]} : vector<2x96xf32> to vector<2x32xf32>
    %146 = vector.extract_strided_slice %142 {offsets = [0, 32], sizes = [2, 32], strides = [1, 1]} : vector<2x96xf32> to vector<2x32xf32>
    %147 = vector.extract_strided_slice %142 {offsets = [0, 64], sizes = [2, 32], strides = [1, 1]} : vector<2x96xf32> to vector<2x32xf32>
    %148 = arith.mulf %146, %101 : vector<2x32xf32>
    %149 = arith.mulf %145, %144 : vector<2x32xf32>
    %150 = arith.addf %148, %149 : vector<2x32xf32>
    %151 = math.tanh %150 : vector<2x32xf32>
    %152 = arith.mulf %147, %151 : vector<2x32xf32>
    %153 = arith.index_cast %108 : i32 to index
    %c0_50 = arith.constant 0 : index
    %154 = vector.load %arg15[%153, %c0_50] : memref<16x32xf32, #tpu.memory_space<vmem>>, vector<2x32xf32>
    tpu.vector_store %arg15[%153, %c0_50], %152 {strides = array<i32>} : memref<16x32xf32, #tpu.memory_space<vmem>>, vector<2x32xf32>,
    %c3_i32 = arith.constant 3 : i32
    %c2_i32_51 = arith.constant 2 : i32
    %155 = arith.muli %c3_i32, %c2_i32_51 : i32
    %c7_i32_52 = arith.constant 7 : i32
    %156 = arith.subi %c7_i32_52, %c3_i32 : i32
    %c2_i32_53 = arith.constant 2 : i32
    %157 = arith.muli %156, %c2_i32_53 : i32
    %158 = arith.index_cast %155 : i32 to index
    %c0_54 = arith.constant 0 : index
    %159 = vector.load %arg13[%158, %c0_54] : memref<16x256xf32, #tpu.memory_space<vmem>>, vector<2x128xf32>
    %c0_55 = arith.constant 0 : index
    %c0_56 = arith.constant 0 : index
    %160 = vector.load %arg3[%c0_55, %c0_56] : memref<32x128xf32, #tpu.memory_space<vmem>>, vector<32x128xf32>
    %cst_57 = arith.constant dense<0.000000e+00> : vector<2x128xf32>
    %161 = tpu.matmul %129, %160, %cst_57 {dimension_numbers = #tpu.dot_dimension_numbers<[1], [0], [0], [1], [0, 0, 1, 1], [], []>} : vector<2x32xf32>, vector<32x128xf32>, vector<2x128xf32> -> vector<2x128xf32>
    %162 = arith.addf %159, %161 : vector<2x128xf32>
    %163 = vector.extract_strided_slice %162 {offsets = [0, 0], sizes = [2, 96], strides = [1, 1]} : vector<2x128xf32> to vector<2x96xf32>
    %164 = arith.negf %163 : vector<2x96xf32>
    %165 = math.exp %164 : vector<2x96xf32>
    %cst_58 = arith.constant 1.000000e+00 : f32
    %166 = vector.broadcast %cst_58 : f32 to vector<2x96xf32>
    %167 = arith.addf %166, %165 : vector<2x96xf32>
    %168 = arith.divf %166, %167 : vector<2x96xf32>
    %169 = vector.extract_strided_slice %162 {offsets = [0, 96], sizes = [2, 32], strides = [1, 1]} : vector<2x128xf32> to vector<2x32xf32>
    %170 = math.tanh %169 : vector<2x32xf32>
    %171 = vector.extract_strided_slice %168 {offsets = [0, 0], sizes = [2, 32], strides = [1, 1]} : vector<2x96xf32> to vector<2x32xf32>
    %172 = vector.extract_strided_slice %168 {offsets = [0, 32], sizes = [2, 32], strides = [1, 1]} : vector<2x96xf32> to vector<2x32xf32>
    %173 = vector.extract_strided_slice %168 {offsets = [0, 64], sizes = [2, 32], strides = [1, 1]} : vector<2x96xf32> to vector<2x32xf32>
    %174 = arith.mulf %172, %127 : vector<2x32xf32>
    %175 = arith.mulf %171, %170 : vector<2x32xf32>
    %176 = arith.addf %174, %175 : vector<2x32xf32>
    %177 = math.tanh %176 : vector<2x32xf32>
    %178 = arith.mulf %173, %177 : vector<2x32xf32>
    %179 = arith.index_cast %155 : i32 to index
    %c0_59 = arith.constant 0 : index
    %180 = vector.load %arg14[%179, %c0_59] : memref<16x32xf32, #tpu.memory_space<vmem>>, vector<2x32xf32>
    tpu.vector_store %arg14[%179, %c0_59], %178 {strides = array<i32>} : memref<16x32xf32, #tpu.memory_space<vmem>>, vector<2x32xf32>,
    %181 = arith.index_cast %157 : i32 to index
    %c128_60 = arith.constant 128 : index
    %182 = vector.load %arg13[%181, %c128_60] : memref<16x256xf32, #tpu.memory_space<vmem>>, vector<2x128xf32>
    %c0_61 = arith.constant 0 : index
    %c0_62 = arith.constant 0 : index
    %183 = vector.load %arg4[%c0_61, %c0_62] : memref<32x128xf32, #tpu.memory_space<vmem>>, vector<32x128xf32>
    %cst_63 = arith.constant dense<0.000000e+00> : vector<2x128xf32>
    %184 = tpu.matmul %152, %183, %cst_63 {dimension_numbers = #tpu.dot_dimension_numbers<[1], [0], [0], [1], [0, 0, 1, 1], [], []>} : vector<2x32xf32>, vector<32x128xf32>, vector<2x128xf32> -> vector<2x128xf32>
    %185 = arith.addf %182, %184 : vector<2x128xf32>
    %186 = vector.extract_strided_slice %185 {offsets = [0, 0], sizes = [2, 96], strides = [1, 1]} : vector<2x128xf32> to vector<2x96xf32>
    %187 = arith.negf %186 : vector<2x96xf32>
    %188 = math.exp %187 : vector<2x96xf32>
    %cst_64 = arith.constant 1.000000e+00 : f32
    %189 = vector.broadcast %cst_64 : f32 to vector<2x96xf32>
    %190 = arith.addf %189, %188 : vector<2x96xf32>
    %191 = arith.divf %189, %190 : vector<2x96xf32>
    %192 = vector.extract_strided_slice %185 {offsets = [0, 96], sizes = [2, 32], strides = [1, 1]} : vector<2x128xf32> to vector<2x32xf32>
    %193 = math.tanh %192 : vector<2x32xf32>
    %194 = vector.extract_strided_slice %191 {offsets = [0, 0], sizes = [2, 32], strides = [1, 1]} : vector<2x96xf32> to vector<2x32xf32>
    %195 = vector.extract_strided_slice %191 {offsets = [0, 32], sizes = [2, 32], strides = [1, 1]} : vector<2x96xf32> to vector<2x32xf32>
    %196 = vector.extract_strided_slice %191 {offsets = [0, 64], sizes = [2, 32], strides = [1, 1]} : vector<2x96xf32> to vector<2x32xf32>
    %197 = arith.mulf %195, %150 : vector<2x32xf32>
    %198 = arith.mulf %194, %193 : vector<2x32xf32>
    %199 = arith.addf %197, %198 : vector<2x32xf32>
    %200 = math.tanh %199 : vector<2x32xf32>
    %201 = arith.mulf %196, %200 : vector<2x32xf32>
    %202 = arith.index_cast %157 : i32 to index
    %c0_65 = arith.constant 0 : index
    %203 = vector.load %arg15[%202, %c0_65] : memref<16x32xf32, #tpu.memory_space<vmem>>, vector<2x32xf32>
    tpu.vector_store %arg15[%202, %c0_65], %201 {strides = array<i32>} : memref<16x32xf32, #tpu.memory_space<vmem>>, vector<2x32xf32>,
    %c4_i32 = arith.constant 4 : i32
    %c2_i32_66 = arith.constant 2 : i32
    %204 = arith.muli %c4_i32, %c2_i32_66 : i32
    %c7_i32_67 = arith.constant 7 : i32
    %205 = arith.subi %c7_i32_67, %c4_i32 : i32
    %c2_i32_68 = arith.constant 2 : i32
    %206 = arith.muli %205, %c2_i32_68 : i32
    %207 = arith.index_cast %204 : i32 to index
    %c0_69 = arith.constant 0 : index
    %208 = vector.load %arg13[%207, %c0_69] : memref<16x256xf32, #tpu.memory_space<vmem>>, vector<2x128xf32>
    %c0_70 = arith.constant 0 : index
    %c0_71 = arith.constant 0 : index
    %209 = vector.load %arg3[%c0_70, %c0_71] : memref<32x128xf32, #tpu.memory_space<vmem>>, vector<32x128xf32>
    %cst_72 = arith.constant dense<0.000000e+00> : vector<2x128xf32>
    %210 = tpu.matmul %178, %209, %cst_72 {dimension_numbers = #tpu.dot_dimension_numbers<[1], [0], [0], [1], [0, 0, 1, 1], [], []>} : vector<2x32xf32>, vector<32x128xf32>, vector<2x128xf32> -> vector<2x128xf32>
    %211 = arith.addf %208, %210 : vector<2x128xf32>
    %212 = vector.extract_strided_slice %211 {offsets = [0, 0], sizes = [2, 96], strides = [1, 1]} : vector<2x128xf32> to vector<2x96xf32>
    %213 = arith.negf %212 : vector<2x96xf32>
    %214 = math.exp %213 : vector<2x96xf32>
    %cst_73 = arith.constant 1.000000e+00 : f32
    %215 = vector.broadcast %cst_73 : f32 to vector<2x96xf32>
    %216 = arith.addf %215, %214 : vector<2x96xf32>
    %217 = arith.divf %215, %216 : vector<2x96xf32>
    %218 = vector.extract_strided_slice %211 {offsets = [0, 96], sizes = [2, 32], strides = [1, 1]} : vector<2x128xf32> to vector<2x32xf32>
    %219 = math.tanh %218 : vector<2x32xf32>
    %220 = vector.extract_strided_slice %217 {offsets = [0, 0], sizes = [2, 32], strides = [1, 1]} : vector<2x96xf32> to vector<2x32xf32>
    %221 = vector.extract_strided_slice %217 {offsets = [0, 32], sizes = [2, 32], strides = [1, 1]} : vector<2x96xf32> to vector<2x32xf32>
    %222 = vector.extract_strided_slice %217 {offsets = [0, 64], sizes = [2, 32], strides = [1, 1]} : vector<2x96xf32> to vector<2x32xf32>
    %223 = arith.mulf %221, %176 : vector<2x32xf32>
    %224 = arith.mulf %220, %219 : vector<2x32xf32>
    %225 = arith.addf %223, %224 : vector<2x32xf32>
    %226 = math.tanh %225 : vector<2x32xf32>
    %227 = arith.mulf %222, %226 : vector<2x32xf32>
    %228 = arith.index_cast %204 : i32 to index
    %c0_74 = arith.constant 0 : index
    %229 = vector.load %arg14[%228, %c0_74] : memref<16x32xf32, #tpu.memory_space<vmem>>, vector<2x32xf32>
    tpu.vector_store %arg14[%228, %c0_74], %227 {strides = array<i32>} : memref<16x32xf32, #tpu.memory_space<vmem>>, vector<2x32xf32>,
    %230 = arith.index_cast %206 : i32 to index
    %c128_75 = arith.constant 128 : index
    %231 = vector.load %arg13[%230, %c128_75] : memref<16x256xf32, #tpu.memory_space<vmem>>, vector<2x128xf32>
    %c0_76 = arith.constant 0 : index
    %c0_77 = arith.constant 0 : index
    %232 = vector.load %arg4[%c0_76, %c0_77] : memref<32x128xf32, #tpu.memory_space<vmem>>, vector<32x128xf32>
    %cst_78 = arith.constant dense<0.000000e+00> : vector<2x128xf32>
    %233 = tpu.matmul %201, %232, %cst_78 {dimension_numbers = #tpu.dot_dimension_numbers<[1], [0], [0], [1], [0, 0, 1, 1], [], []>} : vector<2x32xf32>, vector<32x128xf32>, vector<2x128xf32> -> vector<2x128xf32>
    %234 = arith.addf %231, %233 : vector<2x128xf32>
    %235 = vector.extract_strided_slice %234 {offsets = [0, 0], sizes = [2, 96], strides = [1, 1]} : vector<2x128xf32> to vector<2x96xf32>
    %236 = arith.negf %235 : vector<2x96xf32>
    %237 = math.exp %236 : vector<2x96xf32>
    %cst_79 = arith.constant 1.000000e+00 : f32
    %238 = vector.broadcast %cst_79 : f32 to vector<2x96xf32>
    %239 = arith.addf %238, %237 : vector<2x96xf32>
    %240 = arith.divf %238, %239 : vector<2x96xf32>
    %241 = vector.extract_strided_slice %234 {offsets = [0, 96], sizes = [2, 32], strides = [1, 1]} : vector<2x128xf32> to vector<2x32xf32>
    %242 = math.tanh %241 : vector<2x32xf32>
    %243 = vector.extract_strided_slice %240 {offsets = [0, 0], sizes = [2, 32], strides = [1, 1]} : vector<2x96xf32> to vector<2x32xf32>
    %244 = vector.extract_strided_slice %240 {offsets = [0, 32], sizes = [2, 32], strides = [1, 1]} : vector<2x96xf32> to vector<2x32xf32>
    %245 = vector.extract_strided_slice %240 {offsets = [0, 64], sizes = [2, 32], strides = [1, 1]} : vector<2x96xf32> to vector<2x32xf32>
    %246 = arith.mulf %244, %199 : vector<2x32xf32>
    %247 = arith.mulf %243, %242 : vector<2x32xf32>
    %248 = arith.addf %246, %247 : vector<2x32xf32>
    %249 = math.tanh %248 : vector<2x32xf32>
    %250 = arith.mulf %245, %249 : vector<2x32xf32>
    %251 = arith.index_cast %206 : i32 to index
    %c0_80 = arith.constant 0 : index
    %252 = vector.load %arg15[%251, %c0_80] : memref<16x32xf32, #tpu.memory_space<vmem>>, vector<2x32xf32>
    tpu.vector_store %arg15[%251, %c0_80], %250 {strides = array<i32>} : memref<16x32xf32, #tpu.memory_space<vmem>>, vector<2x32xf32>,
    %c5_i32 = arith.constant 5 : i32
    %c2_i32_81 = arith.constant 2 : i32
    %253 = arith.muli %c5_i32, %c2_i32_81 : i32
    %c7_i32_82 = arith.constant 7 : i32
    %254 = arith.subi %c7_i32_82, %c5_i32 : i32
    %c2_i32_83 = arith.constant 2 : i32
    %255 = arith.muli %254, %c2_i32_83 : i32
    %256 = arith.index_cast %253 : i32 to index
    %c0_84 = arith.constant 0 : index
    %257 = vector.load %arg13[%256, %c0_84] : memref<16x256xf32, #tpu.memory_space<vmem>>, vector<2x128xf32>
    %c0_85 = arith.constant 0 : index
    %c0_86 = arith.constant 0 : index
    %258 = vector.load %arg3[%c0_85, %c0_86] : memref<32x128xf32, #tpu.memory_space<vmem>>, vector<32x128xf32>
    %cst_87 = arith.constant dense<0.000000e+00> : vector<2x128xf32>
    %259 = tpu.matmul %227, %258, %cst_87 {dimension_numbers = #tpu.dot_dimension_numbers<[1], [0], [0], [1], [0, 0, 1, 1], [], []>} : vector<2x32xf32>, vector<32x128xf32>, vector<2x128xf32> -> vector<2x128xf32>
    %260 = arith.addf %257, %259 : vector<2x128xf32>
    %261 = vector.extract_strided_slice %260 {offsets = [0, 0], sizes = [2, 96], strides = [1, 1]} : vector<2x128xf32> to vector<2x96xf32>
    %262 = arith.negf %261 : vector<2x96xf32>
    %263 = math.exp %262 : vector<2x96xf32>
    %cst_88 = arith.constant 1.000000e+00 : f32
    %264 = vector.broadcast %cst_88 : f32 to vector<2x96xf32>
    %265 = arith.addf %264, %263 : vector<2x96xf32>
    %266 = arith.divf %264, %265 : vector<2x96xf32>
    %267 = vector.extract_strided_slice %260 {offsets = [0, 96], sizes = [2, 32], strides = [1, 1]} : vector<2x128xf32> to vector<2x32xf32>
    %268 = math.tanh %267 : vector<2x32xf32>
    %269 = vector.extract_strided_slice %266 {offsets = [0, 0], sizes = [2, 32], strides = [1, 1]} : vector<2x96xf32> to vector<2x32xf32>
    %270 = vector.extract_strided_slice %266 {offsets = [0, 32], sizes = [2, 32], strides = [1, 1]} : vector<2x96xf32> to vector<2x32xf32>
    %271 = vector.extract_strided_slice %266 {offsets = [0, 64], sizes = [2, 32], strides = [1, 1]} : vector<2x96xf32> to vector<2x32xf32>
    %272 = arith.mulf %270, %225 : vector<2x32xf32>
    %273 = arith.mulf %269, %268 : vector<2x32xf32>
    %274 = arith.addf %272, %273 : vector<2x32xf32>
    %275 = math.tanh %274 : vector<2x32xf32>
    %276 = arith.mulf %271, %275 : vector<2x32xf32>
    %277 = arith.index_cast %253 : i32 to index
    %c0_89 = arith.constant 0 : index
    %278 = vector.load %arg14[%277, %c0_89] : memref<16x32xf32, #tpu.memory_space<vmem>>, vector<2x32xf32>
    tpu.vector_store %arg14[%277, %c0_89], %276 {strides = array<i32>} : memref<16x32xf32, #tpu.memory_space<vmem>>, vector<2x32xf32>,
    %279 = arith.index_cast %255 : i32 to index
    %c128_90 = arith.constant 128 : index
    %280 = vector.load %arg13[%279, %c128_90] : memref<16x256xf32, #tpu.memory_space<vmem>>, vector<2x128xf32>
    %c0_91 = arith.constant 0 : index
    %c0_92 = arith.constant 0 : index
    %281 = vector.load %arg4[%c0_91, %c0_92] : memref<32x128xf32, #tpu.memory_space<vmem>>, vector<32x128xf32>
    %cst_93 = arith.constant dense<0.000000e+00> : vector<2x128xf32>
    %282 = tpu.matmul %250, %281, %cst_93 {dimension_numbers = #tpu.dot_dimension_numbers<[1], [0], [0], [1], [0, 0, 1, 1], [], []>} : vector<2x32xf32>, vector<32x128xf32>, vector<2x128xf32> -> vector<2x128xf32>
    %283 = arith.addf %280, %282 : vector<2x128xf32>
    %284 = vector.extract_strided_slice %283 {offsets = [0, 0], sizes = [2, 96], strides = [1, 1]} : vector<2x128xf32> to vector<2x96xf32>
    %285 = arith.negf %284 : vector<2x96xf32>
    %286 = math.exp %285 : vector<2x96xf32>
    %cst_94 = arith.constant 1.000000e+00 : f32
    %287 = vector.broadcast %cst_94 : f32 to vector<2x96xf32>
    %288 = arith.addf %287, %286 : vector<2x96xf32>
    %289 = arith.divf %287, %288 : vector<2x96xf32>
    %290 = vector.extract_strided_slice %283 {offsets = [0, 96], sizes = [2, 32], strides = [1, 1]} : vector<2x128xf32> to vector<2x32xf32>
    %291 = math.tanh %290 : vector<2x32xf32>
    %292 = vector.extract_strided_slice %289 {offsets = [0, 0], sizes = [2, 32], strides = [1, 1]} : vector<2x96xf32> to vector<2x32xf32>
    %293 = vector.extract_strided_slice %289 {offsets = [0, 32], sizes = [2, 32], strides = [1, 1]} : vector<2x96xf32> to vector<2x32xf32>
    %294 = vector.extract_strided_slice %289 {offsets = [0, 64], sizes = [2, 32], strides = [1, 1]} : vector<2x96xf32> to vector<2x32xf32>
    %295 = arith.mulf %293, %248 : vector<2x32xf32>
    %296 = arith.mulf %292, %291 : vector<2x32xf32>
    %297 = arith.addf %295, %296 : vector<2x32xf32>
    %298 = math.tanh %297 : vector<2x32xf32>
    %299 = arith.mulf %294, %298 : vector<2x32xf32>
    %300 = arith.index_cast %255 : i32 to index
    %c0_95 = arith.constant 0 : index
    %301 = vector.load %arg15[%300, %c0_95] : memref<16x32xf32, #tpu.memory_space<vmem>>, vector<2x32xf32>
    tpu.vector_store %arg15[%300, %c0_95], %299 {strides = array<i32>} : memref<16x32xf32, #tpu.memory_space<vmem>>, vector<2x32xf32>,
    %c6_i32 = arith.constant 6 : i32
    %c2_i32_96 = arith.constant 2 : i32
    %302 = arith.muli %c6_i32, %c2_i32_96 : i32
    %c7_i32_97 = arith.constant 7 : i32
    %303 = arith.subi %c7_i32_97, %c6_i32 : i32
    %c2_i32_98 = arith.constant 2 : i32
    %304 = arith.muli %303, %c2_i32_98 : i32
    %305 = arith.index_cast %302 : i32 to index
    %c0_99 = arith.constant 0 : index
    %306 = vector.load %arg13[%305, %c0_99] : memref<16x256xf32, #tpu.memory_space<vmem>>, vector<2x128xf32>
    %c0_100 = arith.constant 0 : index
    %c0_101 = arith.constant 0 : index
    %307 = vector.load %arg3[%c0_100, %c0_101] : memref<32x128xf32, #tpu.memory_space<vmem>>, vector<32x128xf32>
    %cst_102 = arith.constant dense<0.000000e+00> : vector<2x128xf32>
    %308 = tpu.matmul %276, %307, %cst_102 {dimension_numbers = #tpu.dot_dimension_numbers<[1], [0], [0], [1], [0, 0, 1, 1], [], []>} : vector<2x32xf32>, vector<32x128xf32>, vector<2x128xf32> -> vector<2x128xf32>
    %309 = arith.addf %306, %308 : vector<2x128xf32>
    %310 = vector.extract_strided_slice %309 {offsets = [0, 0], sizes = [2, 96], strides = [1, 1]} : vector<2x128xf32> to vector<2x96xf32>
    %311 = arith.negf %310 : vector<2x96xf32>
    %312 = math.exp %311 : vector<2x96xf32>
    %cst_103 = arith.constant 1.000000e+00 : f32
    %313 = vector.broadcast %cst_103 : f32 to vector<2x96xf32>
    %314 = arith.addf %313, %312 : vector<2x96xf32>
    %315 = arith.divf %313, %314 : vector<2x96xf32>
    %316 = vector.extract_strided_slice %309 {offsets = [0, 96], sizes = [2, 32], strides = [1, 1]} : vector<2x128xf32> to vector<2x32xf32>
    %317 = math.tanh %316 : vector<2x32xf32>
    %318 = vector.extract_strided_slice %315 {offsets = [0, 0], sizes = [2, 32], strides = [1, 1]} : vector<2x96xf32> to vector<2x32xf32>
    %319 = vector.extract_strided_slice %315 {offsets = [0, 32], sizes = [2, 32], strides = [1, 1]} : vector<2x96xf32> to vector<2x32xf32>
    %320 = vector.extract_strided_slice %315 {offsets = [0, 64], sizes = [2, 32], strides = [1, 1]} : vector<2x96xf32> to vector<2x32xf32>
    %321 = arith.mulf %319, %274 : vector<2x32xf32>
    %322 = arith.mulf %318, %317 : vector<2x32xf32>
    %323 = arith.addf %321, %322 : vector<2x32xf32>
    %324 = math.tanh %323 : vector<2x32xf32>
    %325 = arith.mulf %320, %324 : vector<2x32xf32>
    %326 = arith.index_cast %302 : i32 to index
    %c0_104 = arith.constant 0 : index
    %327 = vector.load %arg14[%326, %c0_104] : memref<16x32xf32, #tpu.memory_space<vmem>>, vector<2x32xf32>
    tpu.vector_store %arg14[%326, %c0_104], %325 {strides = array<i32>} : memref<16x32xf32, #tpu.memory_space<vmem>>, vector<2x32xf32>,
    %328 = arith.index_cast %304 : i32 to index
    %c128_105 = arith.constant 128 : index
    %329 = vector.load %arg13[%328, %c128_105] : memref<16x256xf32, #tpu.memory_space<vmem>>, vector<2x128xf32>
    %c0_106 = arith.constant 0 : index
    %c0_107 = arith.constant 0 : index
    %330 = vector.load %arg4[%c0_106, %c0_107] : memref<32x128xf32, #tpu.memory_space<vmem>>, vector<32x128xf32>
    %cst_108 = arith.constant dense<0.000000e+00> : vector<2x128xf32>
    %331 = tpu.matmul %299, %330, %cst_108 {dimension_numbers = #tpu.dot_dimension_numbers<[1], [0], [0], [1], [0, 0, 1, 1], [], []>} : vector<2x32xf32>, vector<32x128xf32>, vector<2x128xf32> -> vector<2x128xf32>
    %332 = arith.addf %329, %331 : vector<2x128xf32>
    %333 = vector.extract_strided_slice %332 {offsets = [0, 0], sizes = [2, 96], strides = [1, 1]} : vector<2x128xf32> to vector<2x96xf32>
    %334 = arith.negf %333 : vector<2x96xf32>
    %335 = math.exp %334 : vector<2x96xf32>
    %cst_109 = arith.constant 1.000000e+00 : f32
    %336 = vector.broadcast %cst_109 : f32 to vector<2x96xf32>
    %337 = arith.addf %336, %335 : vector<2x96xf32>
    %338 = arith.divf %336, %337 : vector<2x96xf32>
    %339 = vector.extract_strided_slice %332 {offsets = [0, 96], sizes = [2, 32], strides = [1, 1]} : vector<2x128xf32> to vector<2x32xf32>
    %340 = math.tanh %339 : vector<2x32xf32>
    %341 = vector.extract_strided_slice %338 {offsets = [0, 0], sizes = [2, 32], strides = [1, 1]} : vector<2x96xf32> to vector<2x32xf32>
    %342 = vector.extract_strided_slice %338 {offsets = [0, 32], sizes = [2, 32], strides = [1, 1]} : vector<2x96xf32> to vector<2x32xf32>
    %343 = vector.extract_strided_slice %338 {offsets = [0, 64], sizes = [2, 32], strides = [1, 1]} : vector<2x96xf32> to vector<2x32xf32>
    %344 = arith.mulf %342, %297 : vector<2x32xf32>
    %345 = arith.mulf %341, %340 : vector<2x32xf32>
    %346 = arith.addf %344, %345 : vector<2x32xf32>
    %347 = math.tanh %346 : vector<2x32xf32>
    %348 = arith.mulf %343, %347 : vector<2x32xf32>
    %349 = arith.index_cast %304 : i32 to index
    %c0_110 = arith.constant 0 : index
    %350 = vector.load %arg15[%349, %c0_110] : memref<16x32xf32, #tpu.memory_space<vmem>>, vector<2x32xf32>
    tpu.vector_store %arg15[%349, %c0_110], %348 {strides = array<i32>} : memref<16x32xf32, #tpu.memory_space<vmem>>, vector<2x32xf32>,
    %c7_i32_111 = arith.constant 7 : i32
    %c2_i32_112 = arith.constant 2 : i32
    %351 = arith.muli %c7_i32_111, %c2_i32_112 : i32
    %c7_i32_113 = arith.constant 7 : i32
    %352 = arith.subi %c7_i32_113, %c7_i32_111 : i32
    %c2_i32_114 = arith.constant 2 : i32
    %353 = arith.muli %352, %c2_i32_114 : i32
    %354 = arith.index_cast %351 : i32 to index
    %c0_115 = arith.constant 0 : index
    %355 = vector.load %arg13[%354, %c0_115] : memref<16x256xf32, #tpu.memory_space<vmem>>, vector<2x128xf32>
    %c0_116 = arith.constant 0 : index
    %c0_117 = arith.constant 0 : index
    %356 = vector.load %arg3[%c0_116, %c0_117] : memref<32x128xf32, #tpu.memory_space<vmem>>, vector<32x128xf32>
    %cst_118 = arith.constant dense<0.000000e+00> : vector<2x128xf32>
    %357 = tpu.matmul %325, %356, %cst_118 {dimension_numbers = #tpu.dot_dimension_numbers<[1], [0], [0], [1], [0, 0, 1, 1], [], []>} : vector<2x32xf32>, vector<32x128xf32>, vector<2x128xf32> -> vector<2x128xf32>
    %358 = arith.addf %355, %357 : vector<2x128xf32>
    %359 = vector.extract_strided_slice %358 {offsets = [0, 0], sizes = [2, 96], strides = [1, 1]} : vector<2x128xf32> to vector<2x96xf32>
    %360 = arith.negf %359 : vector<2x96xf32>
    %361 = math.exp %360 : vector<2x96xf32>
    %cst_119 = arith.constant 1.000000e+00 : f32
    %362 = vector.broadcast %cst_119 : f32 to vector<2x96xf32>
    %363 = arith.addf %362, %361 : vector<2x96xf32>
    %364 = arith.divf %362, %363 : vector<2x96xf32>
    %365 = vector.extract_strided_slice %358 {offsets = [0, 96], sizes = [2, 32], strides = [1, 1]} : vector<2x128xf32> to vector<2x32xf32>
    %366 = math.tanh %365 : vector<2x32xf32>
    %367 = vector.extract_strided_slice %364 {offsets = [0, 0], sizes = [2, 32], strides = [1, 1]} : vector<2x96xf32> to vector<2x32xf32>
    %368 = vector.extract_strided_slice %364 {offsets = [0, 32], sizes = [2, 32], strides = [1, 1]} : vector<2x96xf32> to vector<2x32xf32>
    %369 = vector.extract_strided_slice %364 {offsets = [0, 64], sizes = [2, 32], strides = [1, 1]} : vector<2x96xf32> to vector<2x32xf32>
    %370 = arith.mulf %368, %323 : vector<2x32xf32>
    %371 = arith.mulf %367, %366 : vector<2x32xf32>
    %372 = arith.addf %370, %371 : vector<2x32xf32>
    %373 = math.tanh %372 : vector<2x32xf32>
    %374 = arith.mulf %369, %373 : vector<2x32xf32>
    %375 = arith.index_cast %351 : i32 to index
    %c0_120 = arith.constant 0 : index
    %376 = vector.load %arg14[%375, %c0_120] : memref<16x32xf32, #tpu.memory_space<vmem>>, vector<2x32xf32>
    tpu.vector_store %arg14[%375, %c0_120], %374 {strides = array<i32>} : memref<16x32xf32, #tpu.memory_space<vmem>>, vector<2x32xf32>,
    %377 = arith.index_cast %353 : i32 to index
    %c128_121 = arith.constant 128 : index
    %378 = vector.load %arg13[%377, %c128_121] : memref<16x256xf32, #tpu.memory_space<vmem>>, vector<2x128xf32>
    %c0_122 = arith.constant 0 : index
    %c0_123 = arith.constant 0 : index
    %379 = vector.load %arg4[%c0_122, %c0_123] : memref<32x128xf32, #tpu.memory_space<vmem>>, vector<32x128xf32>
    %cst_124 = arith.constant dense<0.000000e+00> : vector<2x128xf32>
    %380 = tpu.matmul %348, %379, %cst_124 {dimension_numbers = #tpu.dot_dimension_numbers<[1], [0], [0], [1], [0, 0, 1, 1], [], []>} : vector<2x32xf32>, vector<32x128xf32>, vector<2x128xf32> -> vector<2x128xf32>
    %381 = arith.addf %378, %380 : vector<2x128xf32>
    %382 = vector.extract_strided_slice %381 {offsets = [0, 0], sizes = [2, 96], strides = [1, 1]} : vector<2x128xf32> to vector<2x96xf32>
    %383 = arith.negf %382 : vector<2x96xf32>
    %384 = math.exp %383 : vector<2x96xf32>
    %cst_125 = arith.constant 1.000000e+00 : f32
    %385 = vector.broadcast %cst_125 : f32 to vector<2x96xf32>
    %386 = arith.addf %385, %384 : vector<2x96xf32>
    %387 = arith.divf %385, %386 : vector<2x96xf32>
    %388 = vector.extract_strided_slice %381 {offsets = [0, 96], sizes = [2, 32], strides = [1, 1]} : vector<2x128xf32> to vector<2x32xf32>
    %389 = math.tanh %388 : vector<2x32xf32>
    %390 = vector.extract_strided_slice %387 {offsets = [0, 0], sizes = [2, 32], strides = [1, 1]} : vector<2x96xf32> to vector<2x32xf32>
    %391 = vector.extract_strided_slice %387 {offsets = [0, 32], sizes = [2, 32], strides = [1, 1]} : vector<2x96xf32> to vector<2x32xf32>
    %392 = vector.extract_strided_slice %387 {offsets = [0, 64], sizes = [2, 32], strides = [1, 1]} : vector<2x96xf32> to vector<2x32xf32>
    %393 = arith.mulf %391, %346 : vector<2x32xf32>
    %394 = arith.mulf %390, %389 : vector<2x32xf32>
    %395 = arith.addf %393, %394 : vector<2x32xf32>
    %396 = math.tanh %395 : vector<2x32xf32>
    %397 = arith.mulf %392, %396 : vector<2x32xf32>
    %398 = arith.index_cast %353 : i32 to index
    %c0_126 = arith.constant 0 : index
    %399 = vector.load %arg15[%398, %c0_126] : memref<16x32xf32, #tpu.memory_space<vmem>>, vector<2x32xf32>
    tpu.vector_store %arg15[%398, %c0_126], %397 {strides = array<i32>} : memref<16x32xf32, #tpu.memory_space<vmem>>, vector<2x32xf32>,
    %c8_i32 = arith.constant 8 : i32
    %c0_127 = arith.constant 0 : index
    %c0_128 = arith.constant 0 : index
    %400 = vector.load %arg14[%c0_127, %c0_128] : memref<16x32xf32, #tpu.memory_space<vmem>>, vector<16x32xf32>
    %c0_129 = arith.constant 0 : index
    %c0_130 = arith.constant 0 : index
    %401 = vector.load %arg5[%c0_129, %c0_130] : memref<64x128xf32, #tpu.memory_space<vmem>>, vector<32x128xf32>
    %cst_131 = arith.constant dense<0.000000e+00> : vector<16x128xf32>
    %402 = tpu.matmul %400, %401, %cst_131 {dimension_numbers = #tpu.dot_dimension_numbers<[1], [0], [0], [1], [0, 0, 1, 1], [], []>} : vector<16x32xf32>, vector<32x128xf32>, vector<16x128xf32> -> vector<16x128xf32>
    %c0_132 = arith.constant 0 : index
    %c0_133 = arith.constant 0 : index
    %403 = vector.load %arg15[%c0_132, %c0_133] : memref<16x32xf32, #tpu.memory_space<vmem>>, vector<16x32xf32>
    %c32 = arith.constant 32 : index
    %c0_134 = arith.constant 0 : index
    %404 = vector.load %arg5[%c32, %c0_134] : memref<64x128xf32, #tpu.memory_space<vmem>>, vector<32x128xf32>
    %cst_135 = arith.constant dense<0.000000e+00> : vector<16x128xf32>
    %405 = tpu.matmul %403, %404, %cst_135 {dimension_numbers = #tpu.dot_dimension_numbers<[1], [0], [0], [1], [0, 0, 1, 1], [], []>} : vector<16x32xf32>, vector<32x128xf32>, vector<16x128xf32> -> vector<16x128xf32>
    %406 = arith.addf %402, %405 : vector<16x128xf32>
    %c0_136 = arith.constant 0 : index
    %c0_137 = arith.constant 0 : index
    %407 = vector.load %arg7[%c0_136, %c0_137] : memref<1x128xf32, #tpu.memory_space<vmem>>, vector<1x128xf32>
    %408 = vector.broadcast %407 : vector<1x128xf32> to vector<16x128xf32>
    %409 = arith.addf %406, %408 : vector<16x128xf32>
    %c0_138 = arith.constant 0 : index
    %c0_139 = arith.constant 0 : index
    %410 = vector.load %arg16[%c0_138, %c0_139] : memref<16x128xf32, #tpu.memory_space<vmem>>, vector<16x128xf32>
    tpu.vector_store %arg16[%c0_138, %c0_139], %409 {strides = array<i32>} : memref<16x128xf32, #tpu.memory_space<vmem>>, vector<16x128xf32>,
    %c0_i32_140 = arith.constant 0 : i32
    %c2_i32_141 = arith.constant 2 : i32
    %411 = arith.muli %c0_i32_140, %c2_i32_141 : i32
    %412 = arith.index_cast %411 : i32 to index
    %c0_142 = arith.constant 0 : index
    %413 = vector.load %arg16[%412, %c0_142] : memref<16x128xf32, #tpu.memory_space<vmem>>, vector<2x128xf32>
    %c0_143 = arith.constant 0 : index
    %c0_144 = arith.constant 0 : index
    %414 = vector.load %arg6[%c0_143, %c0_144] : memref<32x128xf32, #tpu.memory_space<vmem>>, vector<32x128xf32>
    %cst_145 = arith.constant dense<0.000000e+00> : vector<2x128xf32>
    %415 = tpu.matmul %7, %414, %cst_145 {dimension_numbers = #tpu.dot_dimension_numbers<[1], [0], [0], [1], [0, 0, 1, 1], [], []>} : vector<2x32xf32>, vector<32x128xf32>, vector<2x128xf32> -> vector<2x128xf32>
    %416 = arith.addf %413, %415 : vector<2x128xf32>
    %417 = vector.extract_strided_slice %416 {offsets = [0, 0], sizes = [2, 96], strides = [1, 1]} : vector<2x128xf32> to vector<2x96xf32>
    %418 = arith.negf %417 : vector<2x96xf32>
    %419 = math.exp %418 : vector<2x96xf32>
    %cst_146 = arith.constant 1.000000e+00 : f32
    %420 = vector.broadcast %cst_146 : f32 to vector<2x96xf32>
    %421 = arith.addf %420, %419 : vector<2x96xf32>
    %422 = arith.divf %420, %421 : vector<2x96xf32>
    %423 = vector.extract_strided_slice %416 {offsets = [0, 96], sizes = [2, 32], strides = [1, 1]} : vector<2x128xf32> to vector<2x32xf32>
    %424 = math.tanh %423 : vector<2x32xf32>
    %425 = vector.extract_strided_slice %422 {offsets = [0, 0], sizes = [2, 32], strides = [1, 1]} : vector<2x96xf32> to vector<2x32xf32>
    %426 = vector.extract_strided_slice %422 {offsets = [0, 32], sizes = [2, 32], strides = [1, 1]} : vector<2x96xf32> to vector<2x32xf32>
    %427 = vector.extract_strided_slice %422 {offsets = [0, 64], sizes = [2, 32], strides = [1, 1]} : vector<2x96xf32> to vector<2x32xf32>
    %428 = arith.mulf %426, %7 : vector<2x32xf32>
    %429 = arith.mulf %425, %424 : vector<2x32xf32>
    %430 = arith.addf %428, %429 : vector<2x32xf32>
    %431 = math.tanh %430 : vector<2x32xf32>
    %432 = arith.mulf %427, %431 : vector<2x32xf32>
    %c1_i32_147 = arith.constant 1 : i32
    %c2_i32_148 = arith.constant 2 : i32
    %433 = arith.muli %c1_i32_147, %c2_i32_148 : i32
    %434 = arith.index_cast %433 : i32 to index
    %c0_149 = arith.constant 0 : index
    %435 = vector.load %arg16[%434, %c0_149] : memref<16x128xf32, #tpu.memory_space<vmem>>, vector<2x128xf32>
    %c0_150 = arith.constant 0 : index
    %c0_151 = arith.constant 0 : index
    %436 = vector.load %arg6[%c0_150, %c0_151] : memref<32x128xf32, #tpu.memory_space<vmem>>, vector<32x128xf32>
    %cst_152 = arith.constant dense<0.000000e+00> : vector<2x128xf32>
    %437 = tpu.matmul %432, %436, %cst_152 {dimension_numbers = #tpu.dot_dimension_numbers<[1], [0], [0], [1], [0, 0, 1, 1], [], []>} : vector<2x32xf32>, vector<32x128xf32>, vector<2x128xf32> -> vector<2x128xf32>
    %438 = arith.addf %435, %437 : vector<2x128xf32>
    %439 = vector.extract_strided_slice %438 {offsets = [0, 0], sizes = [2, 96], strides = [1, 1]} : vector<2x128xf32> to vector<2x96xf32>
    %440 = arith.negf %439 : vector<2x96xf32>
    %441 = math.exp %440 : vector<2x96xf32>
    %cst_153 = arith.constant 1.000000e+00 : f32
    %442 = vector.broadcast %cst_153 : f32 to vector<2x96xf32>
    %443 = arith.addf %442, %441 : vector<2x96xf32>
    %444 = arith.divf %442, %443 : vector<2x96xf32>
    %445 = vector.extract_strided_slice %438 {offsets = [0, 96], sizes = [2, 32], strides = [1, 1]} : vector<2x128xf32> to vector<2x32xf32>
    %446 = math.tanh %445 : vector<2x32xf32>
    %447 = vector.extract_strided_slice %444 {offsets = [0, 0], sizes = [2, 32], strides = [1, 1]} : vector<2x96xf32> to vector<2x32xf32>
    %448 = vector.extract_strided_slice %444 {offsets = [0, 32], sizes = [2, 32], strides = [1, 1]} : vector<2x96xf32> to vector<2x32xf32>
    %449 = vector.extract_strided_slice %444 {offsets = [0, 64], sizes = [2, 32], strides = [1, 1]} : vector<2x96xf32> to vector<2x32xf32>
    %450 = arith.mulf %448, %430 : vector<2x32xf32>
    %451 = arith.mulf %447, %446 : vector<2x32xf32>
    %452 = arith.addf %450, %451 : vector<2x32xf32>
    %453 = math.tanh %452 : vector<2x32xf32>
    %454 = arith.mulf %449, %453 : vector<2x32xf32>
    %c2_i32_154 = arith.constant 2 : i32
    %c2_i32_155 = arith.constant 2 : i32
    %455 = arith.muli %c2_i32_154, %c2_i32_155 : i32
    %456 = arith.index_cast %455 : i32 to index
    %c0_156 = arith.constant 0 : index
    %457 = vector.load %arg16[%456, %c0_156] : memref<16x128xf32, #tpu.memory_space<vmem>>, vector<2x128xf32>
    %c0_157 = arith.constant 0 : index
    %c0_158 = arith.constant 0 : index
    %458 = vector.load %arg6[%c0_157, %c0_158] : memref<32x128xf32, #tpu.memory_space<vmem>>, vector<32x128xf32>
    %cst_159 = arith.constant dense<0.000000e+00> : vector<2x128xf32>
    %459 = tpu.matmul %454, %458, %cst_159 {dimension_numbers = #tpu.dot_dimension_numbers<[1], [0], [0], [1], [0, 0, 1, 1], [], []>} : vector<2x32xf32>, vector<32x128xf32>, vector<2x128xf32> -> vector<2x128xf32>
    %460 = arith.addf %457, %459 : vector<2x128xf32>
    %461 = vector.extract_strided_slice %460 {offsets = [0, 0], sizes = [2, 96], strides = [1, 1]} : vector<2x128xf32> to vector<2x96xf32>
    %462 = arith.negf %461 : vector<2x96xf32>
    %463 = math.exp %462 : vector<2x96xf32>
    %cst_160 = arith.constant 1.000000e+00 : f32
    %464 = vector.broadcast %cst_160 : f32 to vector<2x96xf32>
    %465 = arith.addf %464, %463 : vector<2x96xf32>
    %466 = arith.divf %464, %465 : vector<2x96xf32>
    %467 = vector.extract_strided_slice %460 {offsets = [0, 96], sizes = [2, 32], strides = [1, 1]} : vector<2x128xf32> to vector<2x32xf32>
    %468 = math.tanh %467 : vector<2x32xf32>
    %469 = vector.extract_strided_slice %466 {offsets = [0, 0], sizes = [2, 32], strides = [1, 1]} : vector<2x96xf32> to vector<2x32xf32>
    %470 = vector.extract_strided_slice %466 {offsets = [0, 32], sizes = [2, 32], strides = [1, 1]} : vector<2x96xf32> to vector<2x32xf32>
    %471 = vector.extract_strided_slice %466 {offsets = [0, 64], sizes = [2, 32], strides = [1, 1]} : vector<2x96xf32> to vector<2x32xf32>
    %472 = arith.mulf %470, %452 : vector<2x32xf32>
    %473 = arith.mulf %469, %468 : vector<2x32xf32>
    %474 = arith.addf %472, %473 : vector<2x32xf32>
    %475 = math.tanh %474 : vector<2x32xf32>
    %476 = arith.mulf %471, %475 : vector<2x32xf32>
    %c3_i32_161 = arith.constant 3 : i32
    %c2_i32_162 = arith.constant 2 : i32
    %477 = arith.muli %c3_i32_161, %c2_i32_162 : i32
    %478 = arith.index_cast %477 : i32 to index
    %c0_163 = arith.constant 0 : index
    %479 = vector.load %arg16[%478, %c0_163] : memref<16x128xf32, #tpu.memory_space<vmem>>, vector<2x128xf32>
    %c0_164 = arith.constant 0 : index
    %c0_165 = arith.constant 0 : index
    %480 = vector.load %arg6[%c0_164, %c0_165] : memref<32x128xf32, #tpu.memory_space<vmem>>, vector<32x128xf32>
    %cst_166 = arith.constant dense<0.000000e+00> : vector<2x128xf32>
    %481 = tpu.matmul %476, %480, %cst_166 {dimension_numbers = #tpu.dot_dimension_numbers<[1], [0], [0], [1], [0, 0, 1, 1], [], []>} : vector<2x32xf32>, vector<32x128xf32>, vector<2x128xf32> -> vector<2x128xf32>
    %482 = arith.addf %479, %481 : vector<2x128xf32>
    %483 = vector.extract_strided_slice %482 {offsets = [0, 0], sizes = [2, 96], strides = [1, 1]} : vector<2x128xf32> to vector<2x96xf32>
    %484 = arith.negf %483 : vector<2x96xf32>
    %485 = math.exp %484 : vector<2x96xf32>
    %cst_167 = arith.constant 1.000000e+00 : f32
    %486 = vector.broadcast %cst_167 : f32 to vector<2x96xf32>
    %487 = arith.addf %486, %485 : vector<2x96xf32>
    %488 = arith.divf %486, %487 : vector<2x96xf32>
    %489 = vector.extract_strided_slice %482 {offsets = [0, 96], sizes = [2, 32], strides = [1, 1]} : vector<2x128xf32> to vector<2x32xf32>
    %490 = math.tanh %489 : vector<2x32xf32>
    %491 = vector.extract_strided_slice %488 {offsets = [0, 0], sizes = [2, 32], strides = [1, 1]} : vector<2x96xf32> to vector<2x32xf32>
    %492 = vector.extract_strided_slice %488 {offsets = [0, 32], sizes = [2, 32], strides = [1, 1]} : vector<2x96xf32> to vector<2x32xf32>
    %493 = vector.extract_strided_slice %488 {offsets = [0, 64], sizes = [2, 32], strides = [1, 1]} : vector<2x96xf32> to vector<2x32xf32>
    %494 = arith.mulf %492, %474 : vector<2x32xf32>
    %495 = arith.mulf %491, %490 : vector<2x32xf32>
    %496 = arith.addf %494, %495 : vector<2x32xf32>
    %497 = math.tanh %496 : vector<2x32xf32>
    %498 = arith.mulf %493, %497 : vector<2x32xf32>
    %c4_i32_168 = arith.constant 4 : i32
    %c2_i32_169 = arith.constant 2 : i32
    %499 = arith.muli %c4_i32_168, %c2_i32_169 : i32
    %500 = arith.index_cast %499 : i32 to index
    %c0_170 = arith.constant 0 : index
    %501 = vector.load %arg16[%500, %c0_170] : memref<16x128xf32, #tpu.memory_space<vmem>>, vector<2x128xf32>
    %c0_171 = arith.constant 0 : index
    %c0_172 = arith.constant 0 : index
    %502 = vector.load %arg6[%c0_171, %c0_172] : memref<32x128xf32, #tpu.memory_space<vmem>>, vector<32x128xf32>
    %cst_173 = arith.constant dense<0.000000e+00> : vector<2x128xf32>
    %503 = tpu.matmul %498, %502, %cst_173 {dimension_numbers = #tpu.dot_dimension_numbers<[1], [0], [0], [1], [0, 0, 1, 1], [], []>} : vector<2x32xf32>, vector<32x128xf32>, vector<2x128xf32> -> vector<2x128xf32>
    %504 = arith.addf %501, %503 : vector<2x128xf32>
    %505 = vector.extract_strided_slice %504 {offsets = [0, 0], sizes = [2, 96], strides = [1, 1]} : vector<2x128xf32> to vector<2x96xf32>
    %506 = arith.negf %505 : vector<2x96xf32>
    %507 = math.exp %506 : vector<2x96xf32>
    %cst_174 = arith.constant 1.000000e+00 : f32
    %508 = vector.broadcast %cst_174 : f32 to vector<2x96xf32>
    %509 = arith.addf %508, %507 : vector<2x96xf32>
    %510 = arith.divf %508, %509 : vector<2x96xf32>
    %511 = vector.extract_strided_slice %504 {offsets = [0, 96], sizes = [2, 32], strides = [1, 1]} : vector<2x128xf32> to vector<2x32xf32>
    %512 = math.tanh %511 : vector<2x32xf32>
    %513 = vector.extract_strided_slice %510 {offsets = [0, 0], sizes = [2, 32], strides = [1, 1]} : vector<2x96xf32> to vector<2x32xf32>
    %514 = vector.extract_strided_slice %510 {offsets = [0, 32], sizes = [2, 32], strides = [1, 1]} : vector<2x96xf32> to vector<2x32xf32>
    %515 = vector.extract_strided_slice %510 {offsets = [0, 64], sizes = [2, 32], strides = [1, 1]} : vector<2x96xf32> to vector<2x32xf32>
    %516 = arith.mulf %514, %496 : vector<2x32xf32>
    %517 = arith.mulf %513, %512 : vector<2x32xf32>
    %518 = arith.addf %516, %517 : vector<2x32xf32>
    %519 = math.tanh %518 : vector<2x32xf32>
    %520 = arith.mulf %515, %519 : vector<2x32xf32>
    %c5_i32_175 = arith.constant 5 : i32
    %c2_i32_176 = arith.constant 2 : i32
    %521 = arith.muli %c5_i32_175, %c2_i32_176 : i32
    %522 = arith.index_cast %521 : i32 to index
    %c0_177 = arith.constant 0 : index
    %523 = vector.load %arg16[%522, %c0_177] : memref<16x128xf32, #tpu.memory_space<vmem>>, vector<2x128xf32>
    %c0_178 = arith.constant 0 : index
    %c0_179 = arith.constant 0 : index
    %524 = vector.load %arg6[%c0_178, %c0_179] : memref<32x128xf32, #tpu.memory_space<vmem>>, vector<32x128xf32>
    %cst_180 = arith.constant dense<0.000000e+00> : vector<2x128xf32>
    %525 = tpu.matmul %520, %524, %cst_180 {dimension_numbers = #tpu.dot_dimension_numbers<[1], [0], [0], [1], [0, 0, 1, 1], [], []>} : vector<2x32xf32>, vector<32x128xf32>, vector<2x128xf32> -> vector<2x128xf32>
    %526 = arith.addf %523, %525 : vector<2x128xf32>
    %527 = vector.extract_strided_slice %526 {offsets = [0, 0], sizes = [2, 96], strides = [1, 1]} : vector<2x128xf32> to vector<2x96xf32>
    %528 = arith.negf %527 : vector<2x96xf32>
    %529 = math.exp %528 : vector<2x96xf32>
    %cst_181 = arith.constant 1.000000e+00 : f32
    %530 = vector.broadcast %cst_181 : f32 to vector<2x96xf32>
    %531 = arith.addf %530, %529 : vector<2x96xf32>
    %532 = arith.divf %530, %531 : vector<2x96xf32>
    %533 = vector.extract_strided_slice %526 {offsets = [0, 96], sizes = [2, 32], strides = [1, 1]} : vector<2x128xf32> to vector<2x32xf32>
    %534 = math.tanh %533 : vector<2x32xf32>
    %535 = vector.extract_strided_slice %532 {offsets = [0, 0], sizes = [2, 32], strides = [1, 1]} : vector<2x96xf32> to vector<2x32xf32>
    %536 = vector.extract_strided_slice %532 {offsets = [0, 32], sizes = [2, 32], strides = [1, 1]} : vector<2x96xf32> to vector<2x32xf32>
    %537 = vector.extract_strided_slice %532 {offsets = [0, 64], sizes = [2, 32], strides = [1, 1]} : vector<2x96xf32> to vector<2x32xf32>
    %538 = arith.mulf %536, %518 : vector<2x32xf32>
    %539 = arith.mulf %535, %534 : vector<2x32xf32>
    %540 = arith.addf %538, %539 : vector<2x32xf32>
    %541 = math.tanh %540 : vector<2x32xf32>
    %542 = arith.mulf %537, %541 : vector<2x32xf32>
    %c6_i32_182 = arith.constant 6 : i32
    %c2_i32_183 = arith.constant 2 : i32
    %543 = arith.muli %c6_i32_182, %c2_i32_183 : i32
    %544 = arith.index_cast %543 : i32 to index
    %c0_184 = arith.constant 0 : index
    %545 = vector.load %arg16[%544, %c0_184] : memref<16x128xf32, #tpu.memory_space<vmem>>, vector<2x128xf32>
    %c0_185 = arith.constant 0 : index
    %c0_186 = arith.constant 0 : index
    %546 = vector.load %arg6[%c0_185, %c0_186] : memref<32x128xf32, #tpu.memory_space<vmem>>, vector<32x128xf32>
    %cst_187 = arith.constant dense<0.000000e+00> : vector<2x128xf32>
    %547 = tpu.matmul %542, %546, %cst_187 {dimension_numbers = #tpu.dot_dimension_numbers<[1], [0], [0], [1], [0, 0, 1, 1], [], []>} : vector<2x32xf32>, vector<32x128xf32>, vector<2x128xf32> -> vector<2x128xf32>
    %548 = arith.addf %545, %547 : vector<2x128xf32>
    %549 = vector.extract_strided_slice %548 {offsets = [0, 0], sizes = [2, 96], strides = [1, 1]} : vector<2x128xf32> to vector<2x96xf32>
    %550 = arith.negf %549 : vector<2x96xf32>
    %551 = math.exp %550 : vector<2x96xf32>
    %cst_188 = arith.constant 1.000000e+00 : f32
    %552 = vector.broadcast %cst_188 : f32 to vector<2x96xf32>
    %553 = arith.addf %552, %551 : vector<2x96xf32>
    %554 = arith.divf %552, %553 : vector<2x96xf32>
    %555 = vector.extract_strided_slice %548 {offsets = [0, 96], sizes = [2, 32], strides = [1, 1]} : vector<2x128xf32> to vector<2x32xf32>
    %556 = math.tanh %555 : vector<2x32xf32>
    %557 = vector.extract_strided_slice %554 {offsets = [0, 0], sizes = [2, 32], strides = [1, 1]} : vector<2x96xf32> to vector<2x32xf32>
    %558 = vector.extract_strided_slice %554 {offsets = [0, 32], sizes = [2, 32], strides = [1, 1]} : vector<2x96xf32> to vector<2x32xf32>
    %559 = vector.extract_strided_slice %554 {offsets = [0, 64], sizes = [2, 32], strides = [1, 1]} : vector<2x96xf32> to vector<2x32xf32>
    %560 = arith.mulf %558, %540 : vector<2x32xf32>
    %561 = arith.mulf %557, %556 : vector<2x32xf32>
    %562 = arith.addf %560, %561 : vector<2x32xf32>
    %563 = math.tanh %562 : vector<2x32xf32>
    %564 = arith.mulf %559, %563 : vector<2x32xf32>
    %c7_i32_189 = arith.constant 7 : i32
    %c2_i32_190 = arith.constant 2 : i32
    %565 = arith.muli %c7_i32_189, %c2_i32_190 : i32
    %566 = arith.index_cast %565 : i32 to index
    %c0_191 = arith.constant 0 : index
    %567 = vector.load %arg16[%566, %c0_191] : memref<16x128xf32, #tpu.memory_space<vmem>>, vector<2x128xf32>
    %c0_192 = arith.constant 0 : index
    %c0_193 = arith.constant 0 : index
    %568 = vector.load %arg6[%c0_192, %c0_193] : memref<32x128xf32, #tpu.memory_space<vmem>>, vector<32x128xf32>
    %cst_194 = arith.constant dense<0.000000e+00> : vector<2x128xf32>
    %569 = tpu.matmul %564, %568, %cst_194 {dimension_numbers = #tpu.dot_dimension_numbers<[1], [0], [0], [1], [0, 0, 1, 1], [], []>} : vector<2x32xf32>, vector<32x128xf32>, vector<2x128xf32> -> vector<2x128xf32>
    %570 = arith.addf %567, %569 : vector<2x128xf32>
    %571 = vector.extract_strided_slice %570 {offsets = [0, 0], sizes = [2, 96], strides = [1, 1]} : vector<2x128xf32> to vector<2x96xf32>
    %572 = arith.negf %571 : vector<2x96xf32>
    %573 = math.exp %572 : vector<2x96xf32>
    %cst_195 = arith.constant 1.000000e+00 : f32
    %574 = vector.broadcast %cst_195 : f32 to vector<2x96xf32>
    %575 = arith.addf %574, %573 : vector<2x96xf32>
    %576 = arith.divf %574, %575 : vector<2x96xf32>
    %577 = vector.extract_strided_slice %570 {offsets = [0, 96], sizes = [2, 32], strides = [1, 1]} : vector<2x128xf32> to vector<2x32xf32>
    %578 = math.tanh %577 : vector<2x32xf32>
    %579 = vector.extract_strided_slice %576 {offsets = [0, 0], sizes = [2, 32], strides = [1, 1]} : vector<2x96xf32> to vector<2x32xf32>
    %580 = vector.extract_strided_slice %576 {offsets = [0, 32], sizes = [2, 32], strides = [1, 1]} : vector<2x96xf32> to vector<2x32xf32>
    %581 = vector.extract_strided_slice %576 {offsets = [0, 64], sizes = [2, 32], strides = [1, 1]} : vector<2x96xf32> to vector<2x32xf32>
    %582 = arith.mulf %580, %562 : vector<2x32xf32>
    %583 = arith.mulf %579, %578 : vector<2x32xf32>
    %584 = arith.addf %582, %583 : vector<2x32xf32>
    %585 = math.tanh %584 : vector<2x32xf32>
    %586 = arith.mulf %581, %585 : vector<2x32xf32>
    %c8_i32_196 = arith.constant 8 : i32
    %c0_197 = arith.constant 0 : index
    %c0_198 = arith.constant 0 : index
    %587 = vector.load %arg8[%c0_197, %c0_198] : memref<32x64xf32, #tpu.memory_space<vmem>>, vector<32x64xf32>
    %cst_199 = arith.constant dense<0.000000e+00> : vector<2x64xf32>
    %588 = tpu.matmul %586, %587, %cst_199 {dimension_numbers = #tpu.dot_dimension_numbers<[1], [0], [0], [1], [0, 0, 1, 1], [], []>} : vector<2x32xf32>, vector<32x64xf32>, vector<2x64xf32> -> vector<2x64xf32>
    %c0_200 = arith.constant 0 : index
    %c0_201 = arith.constant 0 : index
    %589 = vector.load %arg9[%c0_200, %c0_201] : memref<1x64xf32, #tpu.memory_space<vmem>>, vector<1x64xf32>
    %590 = vector.broadcast %589 : vector<1x64xf32> to vector<2x64xf32>
    %591 = arith.addf %588, %590 : vector<2x64xf32>
    %cst_202 = arith.constant 0.000000e+00 : f32
    %592 = vector.broadcast %cst_202 : f32 to vector<2x64xf32>
    %593 = arith.maximumf %591, %592 : vector<2x64xf32>
    %c0_203 = arith.constant 0 : index
    %c0_204 = arith.constant 0 : index
    %594 = vector.load %arg10[%c0_203, %c0_204] : memref<64x10xf32, #tpu.memory_space<vmem>>, vector<64x10xf32>
    %cst_205 = arith.constant dense<0.000000e+00> : vector<2x10xf32>
    %595 = tpu.matmul %593, %594, %cst_205 {dimension_numbers = #tpu.dot_dimension_numbers<[1], [0], [0], [1], [0, 0, 1, 1], [], []>} : vector<2x64xf32>, vector<64x10xf32>, vector<2x10xf32> -> vector<2x10xf32>
    %c0_206 = arith.constant 0 : index
    %c0_207 = arith.constant 0 : index
    %596 = vector.load %arg11[%c0_206, %c0_207] : memref<1x10xf32, #tpu.memory_space<vmem>>, vector<1x10xf32>
    %597 = vector.broadcast %596 : vector<1x10xf32> to vector<2x10xf32>
    %598 = arith.addf %595, %597 : vector<2x10xf32>
    %c0_208 = arith.constant 0 : index
    %c0_209 = arith.constant 0 : index
    %599 = vector.load %arg12[%c0_208, %c0_209] : memref<2x10xf32, #tpu.memory_space<vmem>>, vector<2x10xf32>
    tpu.vector_store %arg12[%c0_208, %c0_209], %598 {strides = array<i32>} : memref<2x10xf32, #tpu.memory_space<vmem>>, vector<2x10xf32>,
    return
  }
}

</mosaic_0001>

<llo_original>
// kernel: tpu_custom_call.1
$region0: #{tpu_custom_call.1}
  #allocation0 [shape = 'u32[]', space=smem, size = 0x4, offset = 0x4, fixed_abs, tag = 'smem constant byte address 0x4 - core index']
  #allocation1 [shape = 'u32[72,128]{1,0:T(1,128)}', space=vmem, size = 0x9000, scoped, tag = 'internal scratch']
  #allocation2 [shape = 'f32[16,256]{1,0:T(8,128)}', space=vmem, size = 0x4000, scoped, tag = 'scratch operand']
  #allocation3 [shape = 'f32[16,32]{1,0:T(8,128)}', space=vmem, size = 0x2000, scoped, tag = 'scratch operand']
  #allocation4 [shape = 'f32[16,32]{1,0:T(8,128)}', space=vmem, size = 0x2000, scoped, tag = 'scratch operand']
  #allocation5 [shape = 'f32[16,128]{1,0:T(8,128)}', space=vmem, size = 0x2000, scoped, tag = 'scratch operand']
  %s0 = inlined_call_operand.vmem [shape: f32[16,16], index: 0, kind: input, shape index: {}]
  %s1 = inlined_call_operand.hbm [shape: f32[16,256], index: 1, kind: input, shape index: {}]
  %s2 = inlined_call_operand.vmem [shape: f32[1,256], index: 2, kind: input, shape index: {}]
  %s3 = inlined_call_operand.hbm [shape: f32[32,128], index: 3, kind: input, shape index: {}]
  %s4 = inlined_call_operand.hbm [shape: f32[32,128], index: 4, kind: input, shape index: {}]
  %s5 = inlined_call_operand.vmem [shape: f32[64,128], index: 5, kind: input, shape index: {}]
  %s6 = inlined_call_operand.hbm [shape: f32[32,128], index: 6, kind: input, shape index: {}]
  %s7 = inlined_call_operand.vmem [shape: f32[1,128], index: 7, kind: input, shape index: {}]
  %s8 = inlined_call_operand.hbm [shape: f32[32,64], index: 8, kind: input, shape index: {}]
  %s9 = inlined_call_operand.vmem [shape: f32[1,64], index: 9, kind: input, shape index: {}]
  %s10 = inlined_call_operand.vmem [shape: f32[64,10], index: 10, kind: input, shape index: {}]
  %s11 = inlined_call_operand.vmem [shape: f32[1,10], index: 11, kind: input, shape index: {}]
  %s12 = inlined_call_operand.hbm [shape: f32[2,10], index: 12, kind: output, shape index: {}]
  %s13 = sld [smem:[#allocation0]]
  $region78: #{tpu_custom_call.1} parent=0
    _
  %s15 = ssub.s32 1, %s13
  %s16 = scalar_select 0, %s15, %s13
  $region1: #{tpu_custom_call.1} parent=0
    #allocation6 [shape = 'u8[16384]{0}', space=vmem, size = 0x4000, scoped, tag = 'input window, operand 1, single buffered']
    #allocation7 [shape = 's32[1]{0}', space=sflag, size = 0x4, scoped, tag = 'scoped memory for tpu_custom_call.1']
    #allocation8 [shape = 's32[1]{0}', space=sflag, size = 0x4, scoped, tag = 'scoped memory for tpu_custom_call.1']
    #allocation9 [shape = 'u8[16384]{0}', space=vmem, size = 0x4000, scoped, tag = 'input window, operand 3, single buffered']
    #allocation10 [shape = 's32[1]{0}', space=sflag, size = 0x4, scoped, tag = 'scoped memory for tpu_custom_call.1']
    #allocation11 [shape = 'u8[16384]{0}', space=vmem, size = 0x4000, scoped, tag = 'input window, operand 4, single buffered']
    #allocation12 [shape = 'u8[16384]{0}', space=vmem, size = 0x4000, scoped, tag = 'input window, operand 6, single buffered']
    #allocation13 [shape = 's32[1]{0}', space=sflag, size = 0x4, scoped, tag = 'scoped memory for tpu_custom_call.1']
    #allocation14 [shape = 'u8[16384]{0}', space=vmem, size = 0x4000, scoped, tag = 'input window, operand 8, single buffered']
    #allocation15 [shape = 'u8[1024]{0}', space=vmem, size = 0x400, scoped, tag = 'output window, operand 0, single buffered']
    %17 = vsyncpa [#allocation7], 0
    %18 = vsyncpa [#allocation10], 0
    %19 = vsyncpa [#allocation13], 0
    %20 = vsyncpa [#allocation8], 0
    // Predicated region
    $region2: #{tpu_custom_call.1} parent=1 // pred_check
      _
    $region3: #{tpu_custom_call.1} parent=1 // pred_check_branch
      %22 = sbr.rel (0) target = $region5
    $region4: #{tpu_custom_call.1} parent=1 // pred_region
      _
    $region5: #{tpu_custom_call.1} parent=1 // pred_fallthru
      _
    // Predicated region
    $region6: #{tpu_custom_call.1} parent=1 // pred_check
      _
    $region7: #{tpu_custom_call.1} parent=1 // pred_check_branch
      %24 = sbr.rel (0) target = $region9
    $region8: #{tpu_custom_call.1} parent=1 // pred_region
      %26 = vsyncadd [#allocation7], 0
      %s27 = sshll.u32 %s1, 4
      %s28 = int_to_ptr.hbm [resolvable:$true] %s27
      %s29 = sshll.u32 [#allocation6], 4
      %s30 = int_to_ptr.vmem [resolvable:$true] %s29
      %35 = dma.hbm_to_vmem [thread:$0]  %s28, 512, %s30, [#allocation7], 256, 256, 16
    $region9: #{tpu_custom_call.1} parent=1 // pred_fallthru
      _
    // Predicated region
    $region10: #{tpu_custom_call.1} parent=1 // pred_check
      _
    $region11: #{tpu_custom_call.1} parent=1 // pred_check_branch
      %37 = sbr.rel (0) target = $region13
    $region12: #{tpu_custom_call.1} parent=1 // pred_region
      _
    $region13: #{tpu_custom_call.1} parent=1 // pred_fallthru
      _
    // Predicated region
    $region14: #{tpu_custom_call.1} parent=1 // pred_check
      _
    $region15: #{tpu_custom_call.1} parent=1 // pred_check_branch
      %39 = sbr.rel (0) target = $region17
    $region16: #{tpu_custom_call.1} parent=1 // pred_region
      %41 = vsyncadd [#allocation10], 0
      %s42 = sshll.u32 %s3, 4
      %s43 = int_to_ptr.hbm [resolvable:$true] %s42
      %s44 = sshll.u32 [#allocation9], 4
      %s45 = int_to_ptr.vmem [resolvable:$true] %s44
      %50 = dma.hbm_to_vmem [thread:$0]  %s43, 512, %s45, [#allocation10], 128, 128, 8
    $region17: #{tpu_custom_call.1} parent=1 // pred_fallthru
      _
    // Predicated region
    $region18: #{tpu_custom_call.1} parent=1 // pred_check
      _
    $region19: #{tpu_custom_call.1} parent=1 // pred_check_branch
      %52 = sbr.rel (0) target = $region21
    $region20: #{tpu_custom_call.1} parent=1 // pred_region
      %54 = vsyncadd [#allocation10], 0
      %s55 = sshll.u32 %s4, 4
      %s56 = int_to_ptr.hbm [resolvable:$true] %s55
      %s57 = sshll.u32 [#allocation11], 4
      %s58 = int_to_ptr.vmem [resolvable:$true] %s57
      %63 = dma.hbm_to_vmem [thread:$0]  %s56, 512, %s58, [#allocation10], 128, 128, 8
    $region21: #{tpu_custom_call.1} parent=1 // pred_fallthru
      _
    // Predicated region
    $region22: #{tpu_custom_call.1} parent=1 // pred_check
      _
    $region23: #{tpu_custom_call.1} parent=1 // pred_check_branch
      %65 = sbr.rel (0) target = $region25
    $region24: #{tpu_custom_call.1} parent=1 // pred_region
      _
    $region25: #{tpu_custom_call.1} parent=1 // pred_fallthru
      _
    // Predicated region
    $region26: #{tpu_custom_call.1} parent=1 // pred_check
      _
    $region27: #{tpu_custom_call.1} parent=1 // pred_check_branch
      %67 = sbr.rel (0) target = $region29
    $region28: #{tpu_custom_call.1} parent=1 // pred_region
      %69 = vsyncadd [#allocation13], 0
      %s70 = sshll.u32 %s6, 4
      %s71 = int_to_ptr.hbm [resolvable:$true] %s70
      %s72 = sshll.u32 [#allocation12], 4
      %s73 = int_to_ptr.vmem [resolvable:$true] %s72
      %78 = dma.hbm_to_vmem [thread:$0]  %s71, 512, %s73, [#allocation13], 128, 128, 8
    $region29: #{tpu_custom_call.1} parent=1 // pred_fallthru
      _
    // Predicated region
    $region30: #{tpu_custom_call.1} parent=1 // pred_check
      _
    $region31: #{tpu_custom_call.1} parent=1 // pred_check_branch
      %80 = sbr.rel (0) target = $region33
    $region32: #{tpu_custom_call.1} parent=1 // pred_region
      _
    $region33: #{tpu_custom_call.1} parent=1 // pred_fallthru
      _
    // Predicated region
    $region34: #{tpu_custom_call.1} parent=1 // pred_check
      _
    $region35: #{tpu_custom_call.1} parent=1 // pred_check_branch
      %82 = sbr.rel (0) target = $region37
    $region36: #{tpu_custom_call.1} parent=1 // pred_region
      %84 = vsyncadd [#allocation13], 0
      %s85 = sshll.u32 %s8, 4
      %s86 = int_to_ptr.hbm [resolvable:$true] %s85
      %s87 = sshll.u32 [#allocation14], 4
      %s88 = int_to_ptr.vmem [resolvable:$true] %s87
      %93 = dma.hbm_to_vmem [thread:$0]  %s86, 512, %s88, [#allocation13], 128, 128, 8
    $region37: #{tpu_custom_call.1} parent=1 // pred_fallthru
      _
    // Predicated region
    $region38: #{tpu_custom_call.1} parent=1 // pred_check
      _
    $region39: #{tpu_custom_call.1} parent=1 // pred_check_branch
      %95 = sbr.rel (0) target = $region41
    $region40: #{tpu_custom_call.1} parent=1 // pred_region
      _
    $region41: #{tpu_custom_call.1} parent=1 // pred_fallthru
      _
    // Predicated region
    $region42: #{tpu_custom_call.1} parent=1 // pred_check
      _
    $region43: #{tpu_custom_call.1} parent=1 // pred_check_branch
      %97 = sbr.rel (0) target = $region45
    $region44: #{tpu_custom_call.1} parent=1 // pred_region
      _
    $region45: #{tpu_custom_call.1} parent=1 // pred_fallthru
      _
    // Predicated region
    $region46: #{tpu_custom_call.1} parent=1 // pred_check
      _
    $region47: #{tpu_custom_call.1} parent=1 // pred_check_branch
      %99 = sbr.rel (0) target = $region49
    $region48: #{tpu_custom_call.1} parent=1 // pred_region
      _
    $region49: #{tpu_custom_call.1} parent=1 // pred_fallthru
      _
    // Predicated region
    $region50: #{tpu_custom_call.1} parent=1 // pred_check
      _
    $region51: #{tpu_custom_call.1} parent=1 // pred_check_branch
      %101 = sbr.rel (0) target = $region53
    $region52: #{tpu_custom_call.1} parent=1 // pred_region
      %103 = dma.done [#allocation7], 512
    $region53: #{tpu_custom_call.1} parent=1 // pred_fallthru
      _
    // Predicated region
    $region54: #{tpu_custom_call.1} parent=1 // pred_check
      _
    $region55: #{tpu_custom_call.1} parent=1 // pred_check_branch
      %105 = sbr.rel (0) target = $region57
    $region56: #{tpu_custom_call.1} parent=1 // pred_region
      %107 = dma.done [#allocation10], 512
    $region57: #{tpu_custom_call.1} parent=1 // pred_fallthru
      _
    // Predicated region
    $region58: #{tpu_custom_call.1} parent=1 // pred_check
      _
    $region59: #{tpu_custom_call.1} parent=1 // pred_check_branch
      %109 = sbr.rel (0) target = $region61
    $region60: #{tpu_custom_call.1} parent=1 // pred_region
      %111 = dma.done [#allocation10], 512
    $region61: #{tpu_custom_call.1} parent=1 // pred_fallthru
      _
    // Predicated region
    $region62: #{tpu_custom_call.1} parent=1 // pred_check
      _
    $region63: #{tpu_custom_call.1} parent=1 // pred_check_branch
      %113 = sbr.rel (0) target = $region65
    $region64: #{tpu_custom_call.1} parent=1 // pred_region
      %115 = dma.done [#allocation13], 512
    $region65: #{tpu_custom_call.1} parent=1 // pred_fallthru
      _
    // Predicated region
    $region66: #{tpu_custom_call.1} parent=1 // pred_check
      _
    $region67: #{tpu_custom_call.1} parent=1 // pred_check_branch
      %117 = sbr.rel (0) target = $region69
    $region68: #{tpu_custom_call.1} parent=1 // pred_region
      %119 = dma.done [#allocation13], 512
    $region69: #{tpu_custom_call.1} parent=1 // pred_fallthru
      _
    %v120 = vld [vmem:[%s0] sm:$0xff]
    %v121 = vld [vmem:[%s0 + $0x8] sm:$0xff]
    %v122 = vld [vmem:[#allocation6] sm:$0xff]
    %v123 = vld [vmem:[#allocation6 + $0x8] sm:$0xff]
    %v124 = vld [vmem:[#allocation6 + $0x10] sm:$0xff]
    %v125 = vld [vmem:[#allocation6 + $0x18] sm:$0xff]
    %v126 = vld [vmem:[%s2] sm:$0x3]
    %v128 = vperm.slane %v126, 0
    %v129 = vperm.slane %v126, 1
    %vm132 = vcmask 130048
    %v134 = vsel %vm132, %v120, 0
    %v137 = vsel %vm132, %v121, 0
    %139 = vmatpush.msra.mxu0 0.0
    %140 = vmatpush.msra.mxu0 0.0
    %141 = vmatpush.msra.mxu0 0.0
    %142 = vmatpush.msra.mxu0 0.0
    %143 = vmatpush.msra.mxu0 0.0
    %144 = vmatpush.msra.mxu0 0.0
    %145 = vmatpush.msra.mxu0 0.0
    %146 = vmatpush.msra.mxu0 0.0
    %147 = vmatpush.msra.mxu0 0.0
    %148 = vmatpush.msra.mxu0 0.0
    %149 = vmatpush.msra.mxu0 0.0
    %150 = vmatpush.msra.mxu0 0.0
    %151 = vmatpush.msra.mxu0 0.0
    %152 = vmatpush.msra.mxu0 0.0
    %153 = vmatpush.msra.mxu0 %v124
    %154 = vmatpush.msra.mxu0 %v122
    %155 = vmatmul.f32.gmra.mxu0 %v134
    %v156 = vpop.f32.mrf.mxu0
    %v157 = vadd.f32 %v128, %v156
    %158 = vmatmul.f32.gmra.mxu0 %v137
    %v159 = vpop.f32.mrf.mxu0
    %v160 = vadd.f32 %v128, %v159
    %161 = vdwg.mxu0
    %162 = vmatpush.msra.mxu0 0.0
    %163 = vmatpush.msra.mxu0 0.0
    %164 = vmatpush.msra.mxu0 0.0
    %165 = vmatpush.msra.mxu0 0.0
    %166 = vmatpush.msra.mxu0 0.0
    %167 = vmatpush.msra.mxu0 0.0
    %168 = vmatpush.msra.mxu0 0.0
    %169 = vmatpush.msra.mxu0 0.0
    %170 = vmatpush.msra.mxu0 0.0
    %171 = vmatpush.msra.mxu0 0.0
    %172 = vmatpush.msra.mxu0 0.0
    %173 = vmatpush.msra.mxu0 0.0
    %174 = vmatpush.msra.mxu0 0.0
    %175 = vmatpush.msra.mxu0 0.0
    %176 = vmatpush.msra.mxu0 %v125
    %177 = vmatpush.msra.mxu0 %v123
    %178 = vmatmul.f32.gmra.mxu0 %v134
    %v179 = vpop.f32.mrf.mxu0
    %v180 = vadd.f32 %v129, %v179
    %181 = vmatmul.f32.gmra.mxu0 %v137
    %v182 = vpop.f32.mrf.mxu0
    %v183 = vadd.f32 %v129, %v182
    %184 = vdwg.mxu0
    %185 = vst [vmem:[#allocation2] sm:$0xff] %v157
    %186 = vst [vmem:[#allocation2 + $0x8] sm:$0xff] %v180
    %187 = vst [vmem:[#allocation2 + $0x10] sm:$0xff] %v160
    %188 = vst [vmem:[#allocation2 + $0x18] sm:$0xff] %v183
    %v189 = vld [vmem:[#allocation2] sm:$0x3]
    %v190 = vld [vmem:[#allocation9] sm:$0xff]
    %v191 = vld [vmem:[#allocation9 + $0x8] sm:$0xff]
    %v192 = vld [vmem:[#allocation9 + $0x10] sm:$0xff]
    %v193 = vld [vmem:[#allocation9 + $0x18] sm:$0xff]
    %vm194 = vcmask 261120
    %v196 = vsel %vm194, 0.0, 0
    %198 = vmatpush.msra.mxu0 0.0
    %199 = vmatpush.msra.mxu0 0.0
    %200 = vmatpush.msra.mxu0 0.0
    %201 = vmatpush.msra.mxu0 0.0
    %202 = vmatpush.msra.mxu0 0.0
    %203 = vmatpush.msra.mxu0 0.0
    %204 = vmatpush.msra.mxu0 0.0
    %205 = vmatpush.msra.mxu0 0.0
    %206 = vmatpush.msra.mxu0 0.0
    %207 = vmatpush.msra.mxu0 0.0
    %208 = vmatpush.msra.mxu0 0.0
    %209 = vmatpush.msra.mxu0 0.0
    %210 = vmatpush.msra.mxu0 %v193
    %211 = vmatpush.msra.mxu0 %v192
    %212 = vmatpush.msra.mxu0 %v191
    %213 = vmatpush.msra.mxu0 %v190
    %214 = vmatmul.f32.gmra.mxu0 %v196
    %v215 = vpop.f32.mrf.mxu0
    %v216 = vadd.f32 0.0, %v215
    %217 = vdwg.mxu0
    %v218 = vadd.f32 %v189, %v216
    %v219 = vxor.u32 %v218, 2147483648
    %v220 = vmul.f32 %v219, 1.442695
    %v221 = vpow.pop %v220
    %v222 = vadd.f32 %v221, 1.0
    %v223 = vrcp.pop %v222
    %v224 = vmul.f32 %v222, %v223
    %v225 = vsub.f32 1.0, %v224
    %v226 = vmul.f32 %v223, %v225
    %v227 = vadd.f32 %v223, %v226
    %vm228 = vweird.f32 %v222
    %vm229 = vweird.f32 %v223
    %vm230 = vmor %vm228, %vm229
    %v231 = vsel %vm230, %v223, %v227
    %v232 = vand.u32 2147483647, %v222
    %vm233 = vcmp.eq.f32.partialorder %v232, 8.507059e+37
    %v234 = vand.u32 %v222, 2147483648
    %v235 = vor.u32 1.1754944e-38, %v234
    %v236 = vsel %vm233, %v235, %v231
    %v237 = vmul.f32 1.0, %v236
    %v238 = vtanh.pop %v218
    %v239 = vmul.f32 %v237, 0.0
    %241 = vrot.lane.b32.xlu0 %v238, 32
    %v242 = vpop.permute.xlu0 %241
    %v244 = vmul.f32 %v237, %v242
    %246 = vrot.lane.b32.xlu0 %v244, 32
    %v247 = vpop.permute.xlu0 %246
    %v249 = vadd.f32 %v239, %v247
    %v250 = vtanh.pop %v249
    %252 = vrot.lane.b32.xlu0 %v250, 32
    %v253 = vpop.permute.xlu0 %252
    %v255 = vmul.f32 %v237, %v253
    %257 = vrot.lane.b32.xlu0 %v255, 64
    %v258 = vpop.permute.xlu0 %257
    %vm260 = vcmask 254976
    %261 = vst.msk [vmem:[#allocation3] sm:$0x3] %vm260, %v258
    %v262 = vld [vmem:[#allocation2 + $0x18] sm:$0xc0]
    %v263 = vld [vmem:[#allocation11] sm:$0xff]
    %v264 = vld [vmem:[#allocation11 + $0x8] sm:$0xff]
    %v265 = vld [vmem:[#allocation11 + $0x10] sm:$0xff]
    %v266 = vld [vmem:[#allocation11 + $0x18] sm:$0xff]
    %267 = vmatpush.msra.mxu0 0.0
    %268 = vmatpush.msra.mxu0 0.0
    %269 = vmatpush.msra.mxu0 0.0
    %270 = vmatpush.msra.mxu0 0.0
    %271 = vmatpush.msra.mxu0 0.0
    %272 = vmatpush.msra.mxu0 0.0
    %273 = vmatpush.msra.mxu0 0.0
    %274 = vmatpush.msra.mxu0 0.0
    %275 = vmatpush.msra.mxu0 0.0
    %276 = vmatpush.msra.mxu0 0.0
    %277 = vmatpush.msra.mxu0 0.0
    %278 = vmatpush.msra.mxu0 0.0
    %279 = vmatpush.msra.mxu0 %v266
    %280 = vmatpush.msra.mxu0 %v265
    %281 = vmatpush.msra.mxu0 %v264
    %282 = vmatpush.msra.mxu0 %v263
    %283 = vmatmul.f32.gmra.mxu0 %v196
    %v284 = vpop.f32.mrf.mxu0
    %v285 = vadd.f32 0.0, %v284
    %286 = vdwg.mxu0
    %v288 = vrot.slane %v285, 2
    %v290 = vadd.f32 %v262, %v288
    %v291 = vxor.u32 %v290, 2147483648
    %v292 = vmul.f32 %v291, 1.442695
    %v293 = vpow.pop %v292
    %v294 = vadd.f32 %v293, 1.0
    %v295 = vrcp.pop %v294
    %v296 = vmul.f32 %v294, %v295
    %v297 = vsub.f32 1.0, %v296
    %v298 = vmul.f32 %v295, %v297
    %v299 = vadd.f32 %v295, %v298
    %vm300 = vweird.f32 %v294
    %vm301 = vweird.f32 %v295
    %vm302 = vmor %vm300, %vm301
    %v303 = vsel %vm302, %v295, %v299
    %v304 = vand.u32 2147483647, %v294
    %vm305 = vcmp.eq.f32.partialorder %v304, 8.507059e+37
    %v306 = vand.u32 %v294, 2147483648
    %v307 = vor.u32 1.1754944e-38, %v306
    %v308 = vsel %vm305, %v307, %v303
    %v309 = vmul.f32 1.0, %v308
    %v310 = vtanh.pop %v290
    %v311 = vmul.f32 %v309, 0.0
    %313 = vrot.lane.b32.xlu0 %v310, 32
    %v314 = vpop.permute.xlu0 %313
    %v316 = vmul.f32 %v309, %v314
    %318 = vrot.lane.b32.xlu0 %v316, 32
    %v319 = vpop.permute.xlu0 %318
    %v321 = vadd.f32 %v311, %v319
    %v322 = vtanh.pop %v321
    %324 = vrot.lane.b32.xlu0 %v322, 32
    %v325 = vpop.permute.xlu0 %324
    %v327 = vmul.f32 %v309, %v325
    %329 = vrot.lane.b32.xlu0 %v327, 64
    %v330 = vpop.permute.xlu0 %329
    %vm332 = vcmask 261126
    %333 = vst.msk [vmem:[#allocation4 + $0x8] sm:$0xc0] %vm332, %v330
    %v334 = vld [vmem:[#allocation2] sm:$0xc]
    %v335 = vld [vmem:[#allocation9] sm:$0xff]
    %v336 = vld [vmem:[#allocation9 + $0x8] sm:$0xff]
    %v337 = vld [vmem:[#allocation9 + $0x10] sm:$0xff]
    %v338 = vld [vmem:[#allocation9 + $0x18] sm:$0xff]
    %v339 = vsel %vm194, %v258, 0
    %341 = vmatpush.msra.mxu0 0.0
    %342 = vmatpush.msra.mxu0 0.0
    %343 = vmatpush.msra.mxu0 0.0
    %344 = vmatpush.msra.mxu0 0.0
    %345 = vmatpush.msra.mxu0 0.0
    %346 = vmatpush.msra.mxu0 0.0
    %347 = vmatpush.msra.mxu0 0.0
    %348 = vmatpush.msra.mxu0 0.0
    %349 = vmatpush.msra.mxu0 0.0
    %350 = vmatpush.msra.mxu0 0.0
    %351 = vmatpush.msra.mxu0 0.0
    %352 = vmatpush.msra.mxu0 0.0
    %353 = vmatpush.msra.mxu0 %v338
    %354 = vmatpush.msra.mxu0 %v337
    %355 = vmatpush.msra.mxu0 %v336
    %356 = vmatpush.msra.mxu0 %v335
    %357 = vmatmul.f32.gmra.mxu0 %v339
    %v358 = vpop.f32.mrf.mxu0
    %v359 = vadd.f32 0.0, %v358
    %360 = vdwg.mxu0
    %v362 = vrot.slane %v359, 6
    %v364 = vadd.f32 %v334, %v362
    %v365 = vxor.u32 %v364, 2147483648
    %v366 = vmul.f32 %v365, 1.442695
    %v367 = vpow.pop %v366
    %v368 = vadd.f32 %v367, 1.0
    %v369 = vrcp.pop %v368
    %v370 = vmul.f32 %v368, %v369
    %v371 = vsub.f32 1.0, %v370
    %v372 = vmul.f32 %v369, %v371
    %v373 = vadd.f32 %v369, %v372
    %vm374 = vweird.f32 %v368
    %vm375 = vweird.f32 %v369
    %vm376 = vmor %vm374, %vm375
    %v377 = vsel %vm376, %v369, %v373
    %v378 = vand.u32 2147483647, %v368
    %vm379 = vcmp.eq.f32.partialorder %v378, 8.507059e+37
    %v380 = vand.u32 %v368, 2147483648
    %v381 = vor.u32 1.1754944e-38, %v380
    %v382 = vsel %vm379, %v381, %v377
    %v383 = vmul.f32 1.0, %v382
    %v384 = vtanh.pop %v364
    %v386 = vrot.slane %v249, 6
    %v388 = vmul.f32 %v383, %v386
    %390 = vrot.lane.b32.xlu0 %v384, 32
    %v391 = vpop.permute.xlu0 %390
    %v393 = vmul.f32 %v383, %v391
    %395 = vrot.lane.b32.xlu0 %v393, 32
    %v396 = vpop.permute.xlu0 %395
    %v398 = vadd.f32 %v388, %v396
    %v399 = vtanh.pop %v398
    %401 = vrot.lane.b32.xlu0 %v399, 32
    %v402 = vpop.permute.xlu0 %401
    %v404 = vmul.f32 %v383, %v402
    %406 = vrot.lane.b32.xlu0 %v404, 64
    %v407 = vpop.permute.xlu0 %406
    %vm409 = vcmask 257026
    %410 = vst.msk [vmem:[#allocation3] sm:$0xc] %vm409, %v407
    %v411 = vld [vmem:[#allocation2 + $0x18] sm:$0x30]
    %v412 = vld [vmem:[#allocation11] sm:$0xff]
    %v413 = vld [vmem:[#allocation11 + $0x8] sm:$0xff]
    %v414 = vld [vmem:[#allocation11 + $0x10] sm:$0xff]
    %v415 = vld [vmem:[#allocation11 + $0x18] sm:$0xff]
    %v416 = vrot.slane %v327, 6
    %417 = vrot.lane.b32.xlu0 %v416, 64
    %v418 = vpop.permute.xlu0 %417
    %v419 = vsel %vm194, %v418, 0
    %421 = vmatpush.msra.mxu0 0.0
    %422 = vmatpush.msra.mxu0 0.0
    %423 = vmatpush.msra.mxu0 0.0
    %424 = vmatpush.msra.mxu0 0.0
    %425 = vmatpush.msra.mxu0 0.0
    %426 = vmatpush.msra.mxu0 0.0
    %427 = vmatpush.msra.mxu0 0.0
    %428 = vmatpush.msra.mxu0 0.0
    %429 = vmatpush.msra.mxu0 0.0
    %430 = vmatpush.msra.mxu0 0.0
    %431 = vmatpush.msra.mxu0 0.0
    %432 = vmatpush.msra.mxu0 0.0
    %433 = vmatpush.msra.mxu0 %v415
    %434 = vmatpush.msra.mxu0 %v414
    %435 = vmatpush.msra.mxu0 %v413
    %436 = vmatpush.msra.mxu0 %v412
    %437 = vmatmul.f32.gmra.mxu0 %v419
    %v438 = vpop.f32.mrf.mxu0
    %v439 = vadd.f32 0.0, %v438
    %440 = vdwg.mxu0
    %v442 = vrot.slane %v439, 4
    %v444 = vadd.f32 %v411, %v442
    %v445 = vxor.u32 %v444, 2147483648
    %v446 = vmul.f32 %v445, 1.442695
    %v447 = vpow.pop %v446
    %v448 = vadd.f32 %v447, 1.0
    %v449 = vrcp.pop %v448
    %v450 = vmul.f32 %v448, %v449
    %v451 = vsub.f32 1.0, %v450
    %v452 = vmul.f32 %v449, %v451
    %v453 = vadd.f32 %v449, %v452
    %vm454 = vweird.f32 %v448
    %vm455 = vweird.f32 %v449
    %vm456 = vmor %vm454, %vm455
    %v457 = vsel %vm456, %v449, %v453
    %v458 = vand.u32 2147483647, %v448
    %vm459 = vcmp.eq.f32.partialorder %v458, 8.507059e+37
    %v460 = vand.u32 %v448, 2147483648
    %v461 = vor.u32 1.1754944e-38, %v460
    %v462 = vsel %vm459, %v461, %v457
    %v463 = vmul.f32 1.0, %v462
    %v464 = vtanh.pop %v444
    %v466 = vrot.slane %v321, 2
    %v468 = vmul.f32 %v463, %v466
    %470 = vrot.lane.b32.xlu0 %v464, 32
    %v471 = vpop.permute.xlu0 %470
    %v473 = vmul.f32 %v463, %v471
    %475 = vrot.lane.b32.xlu0 %v473, 32
    %v476 = vpop.permute.xlu0 %475
    %v478 = vadd.f32 %v468, %v476
    %v479 = vtanh.pop %v478
    %481 = vrot.lane.b32.xlu0 %v479, 32
    %v482 = vpop.permute.xlu0 %481
    %v484 = vmul.f32 %v463, %v482
    %486 = vrot.lane.b32.xlu0 %v484, 64
    %v487 = vpop.permute.xlu0 %486
    %vm489 = vcmask 259076
    %490 = vst.msk [vmem:[#allocation4 + $0x8] sm:$0x30] %vm489, %v487
    %v491 = vld [vmem:[#allocation2] sm:$0x30]
    %v492 = vld [vmem:[#allocation9] sm:$0xff]
    %v493 = vld [vmem:[#allocation9 + $0x8] sm:$0xff]
    %v494 = vld [vmem:[#allocation9 + $0x10] sm:$0xff]
    %v495 = vld [vmem:[#allocation9 + $0x18] sm:$0xff]
    %v496 = vrot.slane %v404, 2
    %497 = vrot.lane.b32.xlu0 %v496, 64
    %v498 = vpop.permute.xlu0 %497
    %v499 = vsel %vm194, %v498, 0
    %501 = vmatpush.msra.mxu0 0.0
    %502 = vmatpush.msra.mxu0 0.0
    %503 = vmatpush.msra.mxu0 0.0
    %504 = vmatpush.msra.mxu0 0.0
    %505 = vmatpush.msra.mxu0 0.0
    %506 = vmatpush.msra.mxu0 0.0
    %507 = vmatpush.msra.mxu0 0.0
    %508 = vmatpush.msra.mxu0 0.0
    %509 = vmatpush.msra.mxu0 0.0
    %510 = vmatpush.msra.mxu0 0.0
    %511 = vmatpush.msra.mxu0 0.0
    %512 = vmatpush.msra.mxu0 0.0
    %513 = vmatpush.msra.mxu0 %v495
    %514 = vmatpush.msra.mxu0 %v494
    %515 = vmatpush.msra.mxu0 %v493
    %516 = vmatpush.msra.mxu0 %v492
    %517 = vmatmul.f32.gmra.mxu0 %v499
    %v518 = vpop.f32.mrf.mxu0
    %v519 = vadd.f32 0.0, %v518
    %520 = vdwg.mxu0
    %v522 = vrot.slane %v519, 4
    %v524 = vadd.f32 %v491, %v522
    %v525 = vxor.u32 %v524, 2147483648
    %v526 = vmul.f32 %v525, 1.442695
    %v527 = vpow.pop %v526
    %v528 = vadd.f32 %v527, 1.0
    %v529 = vrcp.pop %v528
    %v530 = vmul.f32 %v528, %v529
    %v531 = vsub.f32 1.0, %v530
    %v532 = vmul.f32 %v529, %v531
    %v533 = vadd.f32 %v529, %v532
    %vm534 = vweird.f32 %v528
    %vm535 = vweird.f32 %v529
    %vm536 = vmor %vm534, %vm535
    %v537 = vsel %vm536, %v529, %v533
    %v538 = vand.u32 2147483647, %v528
    %vm539 = vcmp.eq.f32.partialorder %v538, 8.507059e+37
    %v540 = vand.u32 %v528, 2147483648
    %v541 = vor.u32 1.1754944e-38, %v540
    %v542 = vsel %vm539, %v541, %v537
    %v543 = vmul.f32 1.0, %v542
    %v544 = vtanh.pop %v524
    %v546 = vrot.slane %v398, 6
    %v548 = vmul.f32 %v543, %v546
    %550 = vrot.lane.b32.xlu0 %v544, 32
    %v551 = vpop.permute.xlu0 %550
    %v553 = vmul.f32 %v543, %v551
    %555 = vrot.lane.b32.xlu0 %v553, 32
    %v556 = vpop.permute.xlu0 %555
    %v558 = vadd.f32 %v548, %v556
    %v559 = vtanh.pop %v558
    %561 = vrot.lane.b32.xlu0 %v559, 32
    %v562 = vpop.permute.xlu0 %561
    %v564 = vmul.f32 %v543, %v562
    %566 = vrot.lane.b32.xlu0 %v564, 64
    %v567 = vpop.permute.xlu0 %566
    %569 = vst.msk [vmem:[#allocation3] sm:$0x30] %vm489, %v567
    %v570 = vld [vmem:[#allocation2 + $0x18] sm:$0xc]
    %v571 = vld [vmem:[#allocation11] sm:$0xff]
    %v572 = vld [vmem:[#allocation11 + $0x8] sm:$0xff]
    %v573 = vld [vmem:[#allocation11 + $0x10] sm:$0xff]
    %v574 = vld [vmem:[#allocation11 + $0x18] sm:$0xff]
    %v575 = vrot.slane %v484, 4
    %576 = vrot.lane.b32.xlu0 %v575, 64
    %v577 = vpop.permute.xlu0 %576
    %v578 = vsel %vm194, %v577, 0
    %580 = vmatpush.msra.mxu0 0.0
    %581 = vmatpush.msra.mxu0 0.0
    %582 = vmatpush.msra.mxu0 0.0
    %583 = vmatpush.msra.mxu0 0.0
    %584 = vmatpush.msra.mxu0 0.0
    %585 = vmatpush.msra.mxu0 0.0
    %586 = vmatpush.msra.mxu0 0.0
    %587 = vmatpush.msra.mxu0 0.0
    %588 = vmatpush.msra.mxu0 0.0
    %589 = vmatpush.msra.mxu0 0.0
    %590 = vmatpush.msra.mxu0 0.0
    %591 = vmatpush.msra.mxu0 0.0
    %592 = vmatpush.msra.mxu0 %v574
    %593 = vmatpush.msra.mxu0 %v573
    %594 = vmatpush.msra.mxu0 %v572
    %595 = vmatpush.msra.mxu0 %v571
    %596 = vmatmul.f32.gmra.mxu0 %v578
    %v597 = vpop.f32.mrf.mxu0
    %v598 = vadd.f32 0.0, %v597
    %599 = vdwg.mxu0
    %v601 = vrot.slane %v598, 6
    %v603 = vadd.f32 %v570, %v601
    %v604 = vxor.u32 %v603, 2147483648
    %v605 = vmul.f32 %v604, 1.442695
    %v606 = vpow.pop %v605
    %v607 = vadd.f32 %v606, 1.0
    %v608 = vrcp.pop %v607
    %v609 = vmul.f32 %v607, %v608
    %v610 = vsub.f32 1.0, %v609
    %v611 = vmul.f32 %v608, %v610
    %v612 = vadd.f32 %v608, %v611
    %vm613 = vweird.f32 %v607
    %vm614 = vweird.f32 %v608
    %vm615 = vmor %vm613, %vm614
    %v616 = vsel %vm615, %v608, %v612
    %v617 = vand.u32 2147483647, %v607
    %vm618 = vcmp.eq.f32.partialorder %v617, 8.507059e+37
    %v619 = vand.u32 %v607, 2147483648
    %v620 = vor.u32 1.1754944e-38, %v619
    %v621 = vsel %vm618, %v620, %v616
    %v622 = vmul.f32 1.0, %v621
    %v623 = vtanh.pop %v603
    %v625 = vrot.slane %v478, 2
    %v627 = vmul.f32 %v622, %v625
    %629 = vrot.lane.b32.xlu0 %v623, 32
    %v630 = vpop.permute.xlu0 %629
    %v632 = vmul.f32 %v622, %v630
    %634 = vrot.lane.b32.xlu0 %v632, 32
    %v635 = vpop.permute.xlu0 %634
    %v637 = vadd.f32 %v627, %v635
    %v638 = vtanh.pop %v637
    %640 = vrot.lane.b32.xlu0 %v638, 32
    %v641 = vpop.permute.xlu0 %640
    %v643 = vmul.f32 %v622, %v641
    %645 = vrot.lane.b32.xlu0 %v643, 64
    %v646 = vpop.permute.xlu0 %645
    %648 = vst.msk [vmem:[#allocation4 + $0x8] sm:$0xc] %vm409, %v646
    %v649 = vld [vmem:[#allocation2] sm:$0xc0]
    %v650 = vld [vmem:[#allocation9] sm:$0xff]
    %v651 = vld [vmem:[#allocation9 + $0x8] sm:$0xff]
    %v652 = vld [vmem:[#allocation9 + $0x10] sm:$0xff]
    %v653 = vld [vmem:[#allocation9 + $0x18] sm:$0xff]
    %v654 = vrot.slane %v564, 4
    %655 = vrot.lane.b32.xlu0 %v654, 64
    %v656 = vpop.permute.xlu0 %655
    %v657 = vsel %vm194, %v656, 0
    %659 = vmatpush.msra.mxu0 0.0
    %660 = vmatpush.msra.mxu0 0.0
    %661 = vmatpush.msra.mxu0 0.0
    %662 = vmatpush.msra.mxu0 0.0
    %663 = vmatpush.msra.mxu0 0.0
    %664 = vmatpush.msra.mxu0 0.0
    %665 = vmatpush.msra.mxu0 0.0
    %666 = vmatpush.msra.mxu0 0.0
    %667 = vmatpush.msra.mxu0 0.0
    %668 = vmatpush.msra.mxu0 0.0
    %669 = vmatpush.msra.mxu0 0.0
    %670 = vmatpush.msra.mxu0 0.0
    %671 = vmatpush.msra.mxu0 %v653
    %672 = vmatpush.msra.mxu0 %v652
    %673 = vmatpush.msra.mxu0 %v651
    %674 = vmatpush.msra.mxu0 %v650
    %675 = vmatmul.f32.gmra.mxu0 %v657
    %v676 = vpop.f32.mrf.mxu0
    %v677 = vadd.f32 0.0, %v676
    %678 = vdwg.mxu0
    %v680 = vrot.slane %v677, 2
    %v682 = vadd.f32 %v649, %v680
    %v683 = vxor.u32 %v682, 2147483648
    %v684 = vmul.f32 %v683, 1.442695
    %v685 = vpow.pop %v684
    %v686 = vadd.f32 %v685, 1.0
    %v687 = vrcp.pop %v686
    %v688 = vmul.f32 %v686, %v687
    %v689 = vsub.f32 1.0, %v688
    %v690 = vmul.f32 %v687, %v689
    %v691 = vadd.f32 %v687, %v690
    %vm692 = vweird.f32 %v686
    %vm693 = vweird.f32 %v687
    %vm694 = vmor %vm692, %vm693
    %v695 = vsel %vm694, %v687, %v691
    %v696 = vand.u32 2147483647, %v686
    %vm697 = vcmp.eq.f32.partialorder %v696, 8.507059e+37
    %v698 = vand.u32 %v686, 2147483648
    %v699 = vor.u32 1.1754944e-38, %v698
    %v700 = vsel %vm697, %v699, %v695
    %v701 = vmul.f32 1.0, %v700
    %v702 = vtanh.pop %v682
    %v704 = vrot.slane %v558, 6
    %v706 = vmul.f32 %v701, %v704
    %708 = vrot.lane.b32.xlu0 %v702, 32
    %v709 = vpop.permute.xlu0 %708
    %v711 = vmul.f32 %v701, %v709
    %713 = vrot.lane.b32.xlu0 %v711, 32
    %v714 = vpop.permute.xlu0 %713
    %v716 = vadd.f32 %v706, %v714
    %v717 = vtanh.pop %v716
    %719 = vrot.lane.b32.xlu0 %v717, 32
    %v720 = vpop.permute.xlu0 %719
    %v722 = vmul.f32 %v701, %v720
    %724 = vrot.lane.b32.xlu0 %v722, 64
    %v725 = vpop.permute.xlu0 %724
    %727 = vst.msk [vmem:[#allocation3] sm:$0xc0] %vm332, %v725
    %v728 = vld [vmem:[#allocation2 + $0x18] sm:$0x3]
    %v729 = vld [vmem:[#allocation11] sm:$0xff]
    %v730 = vld [vmem:[#allocation11 + $0x8] sm:$0xff]
    %v731 = vld [vmem:[#allocation11 + $0x10] sm:$0xff]
    %v732 = vld [vmem:[#allocation11 + $0x18] sm:$0xff]
    %v733 = vrot.slane %v643, 2
    %734 = vrot.lane.b32.xlu0 %v733, 64
    %v735 = vpop.permute.xlu0 %734
    %v736 = vsel %vm194, %v735, 0
    %738 = vmatpush.msra.mxu0 0.0
    %739 = vmatpush.msra.mxu0 0.0
    %740 = vmatpush.msra.mxu0 0.0
    %741 = vmatpush.msra.mxu0 0.0
    %742 = vmatpush.msra.mxu0 0.0
    %743 = vmatpush.msra.mxu0 0.0
    %744 = vmatpush.msra.mxu0 0.0
    %745 = vmatpush.msra.mxu0 0.0
    %746 = vmatpush.msra.mxu0 0.0
    %747 = vmatpush.msra.mxu0 0.0
    %748 = vmatpush.msra.mxu0 0.0
    %749 = vmatpush.msra.mxu0 0.0
    %750 = vmatpush.msra.mxu0 %v732
    %751 = vmatpush.msra.mxu0 %v731
    %752 = vmatpush.msra.mxu0 %v730
    %753 = vmatpush.msra.mxu0 %v729
    %754 = vmatmul.f32.gmra.mxu0 %v736
    %v755 = vpop.f32.mrf.mxu0
    %v756 = vadd.f32 0.0, %v755
    %757 = vdwg.mxu0
    %v758 = vadd.f32 %v728, %v756
    %v759 = vxor.u32 %v758, 2147483648
    %v760 = vmul.f32 %v759, 1.442695
    %v761 = vpow.pop %v760
    %v762 = vadd.f32 %v761, 1.0
    %v763 = vrcp.pop %v762
    %v764 = vmul.f32 %v762, %v763
    %v765 = vsub.f32 1.0, %v764
    %v766 = vmul.f32 %v763, %v765
    %v767 = vadd.f32 %v763, %v766
    %vm768 = vweird.f32 %v762
    %vm769 = vweird.f32 %v763
    %vm770 = vmor %vm768, %vm769
    %v771 = vsel %vm770, %v763, %v767
    %v772 = vand.u32 2147483647, %v762
    %vm773 = vcmp.eq.f32.partialorder %v772, 8.507059e+37
    %v774 = vand.u32 %v762, 2147483648
    %v775 = vor.u32 1.1754944e-38, %v774
    %v776 = vsel %vm773, %v775, %v771
    %v777 = vmul.f32 1.0, %v776
    %v778 = vtanh.pop %v758
    %v780 = vrot.slane %v637, 2
    %v782 = vmul.f32 %v777, %v780
    %784 = vrot.lane.b32.xlu0 %v778, 32
    %v785 = vpop.permute.xlu0 %784
    %v787 = vmul.f32 %v777, %v785
    %789 = vrot.lane.b32.xlu0 %v787, 32
    %v790 = vpop.permute.xlu0 %789
    %v792 = vadd.f32 %v782, %v790
    %v793 = vtanh.pop %v792
    %795 = vrot.lane.b32.xlu0 %v793, 32
    %v796 = vpop.permute.xlu0 %795
    %v798 = vmul.f32 %v777, %v796
    %800 = vrot.lane.b32.xlu0 %v798, 64
    %v801 = vpop.permute.xlu0 %800
    %803 = vst.msk [vmem:[#allocation4 + $0x8] sm:$0x3] %vm260, %v801
    %v804 = vld [vmem:[#allocation2 + $0x10] sm:$0x3]
    %v805 = vld [vmem:[#allocation9] sm:$0xff]
    %v806 = vld [vmem:[#allocation9 + $0x8] sm:$0xff]
    %v807 = vld [vmem:[#allocation9 + $0x10] sm:$0xff]
    %v808 = vld [vmem:[#allocation9 + $0x18] sm:$0xff]
    %v809 = vrot.slane %v722, 6
    %810 = vrot.lane.b32.xlu0 %v809, 64
    %v811 = vpop.permute.xlu0 %810
    %v812 = vsel %vm194, %v811, 0
    %814 = vmatpush.msra.mxu0 0.0
    %815 = vmatpush.msra.mxu0 0.0
    %816 = vmatpush.msra.mxu0 0.0
    %817 = vmatpush.msra.mxu0 0.0
    %818 = vmatpush.msra.mxu0 0.0
    %819 = vmatpush.msra.mxu0 0.0
    %820 = vmatpush.msra.mxu0 0.0
    %821 = vmatpush.msra.mxu0 0.0
    %822 = vmatpush.msra.mxu0 0.0
    %823 = vmatpush.msra.mxu0 0.0
    %824 = vmatpush.msra.mxu0 0.0
    %825 = vmatpush.msra.mxu0 0.0
    %826 = vmatpush.msra.mxu0 %v808
    %827 = vmatpush.msra.mxu0 %v807
    %828 = vmatpush.msra.mxu0 %v806
    %829 = vmatpush.msra.mxu0 %v805
    %830 = vmatmul.f32.gmra.mxu0 %v812
    %v831 = vpop.f32.mrf.mxu0
    %v832 = vadd.f32 0.0, %v831
    %833 = vdwg.mxu0
    %v834 = vadd.f32 %v804, %v832
    %v835 = vxor.u32 %v834, 2147483648
    %v836 = vmul.f32 %v835, 1.442695
    %v837 = vpow.pop %v836
    %v838 = vadd.f32 %v837, 1.0
    %v839 = vrcp.pop %v838
    %v840 = vmul.f32 %v838, %v839
    %v841 = vsub.f32 1.0, %v840
    %v842 = vmul.f32 %v839, %v841
    %v843 = vadd.f32 %v839, %v842
    %vm844 = vweird.f32 %v838
    %vm845 = vweird.f32 %v839
    %vm846 = vmor %vm844, %vm845
    %v847 = vsel %vm846, %v839, %v843
    %v848 = vand.u32 2147483647, %v838
    %vm849 = vcmp.eq.f32.partialorder %v848, 8.507059e+37
    %v850 = vand.u32 %v838, 2147483648
    %v851 = vor.u32 1.1754944e-38, %v850
    %v852 = vsel %vm849, %v851, %v847
    %v853 = vmul.f32 1.0, %v852
    %v854 = vtanh.pop %v834
    %v856 = vrot.slane %v716, 6
    %v858 = vmul.f32 %v853, %v856
    %860 = vrot.lane.b32.xlu0 %v854, 32
    %v861 = vpop.permute.xlu0 %860
    %v863 = vmul.f32 %v853, %v861
    %865 = vrot.lane.b32.xlu0 %v863, 32
    %v866 = vpop.permute.xlu0 %865
    %v868 = vadd.f32 %v858, %v866
    %v869 = vtanh.pop %v868
    %871 = vrot.lane.b32.xlu0 %v869, 32
    %v872 = vpop.permute.xlu0 %871
    %v874 = vmul.f32 %v853, %v872
    %876 = vrot.lane.b32.xlu0 %v874, 64
    %v877 = vpop.permute.xlu0 %876
    %879 = vst.msk [vmem:[#allocation3 + $0x8] sm:$0x3] %vm260, %v877
    %v880 = vld [vmem:[#allocation2 + $0x8] sm:$0xc0]
    %v881 = vld [vmem:[#allocation11] sm:$0xff]
    %v882 = vld [vmem:[#allocation11 + $0x8] sm:$0xff]
    %v883 = vld [vmem:[#allocation11 + $0x10] sm:$0xff]
    %v884 = vld [vmem:[#allocation11 + $0x18] sm:$0xff]
    %v885 = vsel %vm194, %v801, 0
    %887 = vmatpush.msra.mxu0 0.0
    %888 = vmatpush.msra.mxu0 0.0
    %889 = vmatpush.msra.mxu0 0.0
    %890 = vmatpush.msra.mxu0 0.0
    %891 = vmatpush.msra.mxu0 0.0
    %892 = vmatpush.msra.mxu0 0.0
    %893 = vmatpush.msra.mxu0 0.0
    %894 = vmatpush.msra.mxu0 0.0
    %895 = vmatpush.msra.mxu0 0.0
    %896 = vmatpush.msra.mxu0 0.0
    %897 = vmatpush.msra.mxu0 0.0
    %898 = vmatpush.msra.mxu0 0.0
    %899 = vmatpush.msra.mxu0 %v884
    %900 = vmatpush.msra.mxu0 %v883
    %901 = vmatpush.msra.mxu0 %v882
    %902 = vmatpush.msra.mxu0 %v881
    %903 = vmatmul.f32.gmra.mxu0 %v885
    %v904 = vpop.f32.mrf.mxu0
    %v905 = vadd.f32 0.0, %v904
    %906 = vdwg.mxu0
    %v908 = vrot.slane %v905, 2
    %v910 = vadd.f32 %v880, %v908
    %v911 = vxor.u32 %v910, 2147483648
    %v912 = vmul.f32 %v911, 1.442695
    %v913 = vpow.pop %v912
    %v914 = vadd.f32 %v913, 1.0
    %v915 = vrcp.pop %v914
    %v916 = vmul.f32 %v914, %v915
    %v917 = vsub.f32 1.0, %v916
    %v918 = vmul.f32 %v915, %v917
    %v919 = vadd.f32 %v915, %v918
    %vm920 = vweird.f32 %v914
    %vm921 = vweird.f32 %v915
    %vm922 = vmor %vm920, %vm921
    %v923 = vsel %vm922, %v915, %v919
    %v924 = vand.u32 2147483647, %v914
    %vm925 = vcmp.eq.f32.partialorder %v924, 8.507059e+37
    %v926 = vand.u32 %v914, 2147483648
    %v927 = vor.u32 1.1754944e-38, %v926
    %v928 = vsel %vm925, %v927, %v923
    %v929 = vmul.f32 1.0, %v928
    %v930 = vtanh.pop %v910
    %v932 = vrot.slane %v792, 2
    %v934 = vmul.f32 %v929, %v932
    %936 = vrot.lane.b32.xlu0 %v930, 32
    %v937 = vpop.permute.xlu0 %936
    %v939 = vmul.f32 %v929, %v937
    %941 = vrot.lane.b32.xlu0 %v939, 32
    %v942 = vpop.permute.xlu0 %941
    %v944 = vadd.f32 %v934, %v942
    %v945 = vtanh.pop %v944
    %947 = vrot.lane.b32.xlu0 %v945, 32
    %v948 = vpop.permute.xlu0 %947
    %v950 = vmul.f32 %v929, %v948
    %952 = vrot.lane.b32.xlu0 %v950, 64
    %v953 = vpop.permute.xlu0 %952
    %955 = vst.msk [vmem:[#allocation4] sm:$0xc0] %vm332, %v953
    %v956 = vld [vmem:[#allocation2 + $0x10] sm:$0xc]
    %v957 = vld [vmem:[#allocation9] sm:$0xff]
    %v958 = vld [vmem:[#allocation9 + $0x8] sm:$0xff]
    %v959 = vld [vmem:[#allocation9 + $0x10] sm:$0xff]
    %v960 = vld [vmem:[#allocation9 + $0x18] sm:$0xff]
    %v961 = vsel %vm194, %v877, 0
    %963 = vmatpush.msra.mxu0 0.0
    %964 = vmatpush.msra.mxu0 0.0
    %965 = vmatpush.msra.mxu0 0.0
    %966 = vmatpush.msra.mxu0 0.0
    %967 = vmatpush.msra.mxu0 0.0
    %968 = vmatpush.msra.mxu0 0.0
    %969 = vmatpush.msra.mxu0 0.0
    %970 = vmatpush.msra.mxu0 0.0
    %971 = vmatpush.msra.mxu0 0.0
    %972 = vmatpush.msra.mxu0 0.0
    %973 = vmatpush.msra.mxu0 0.0
    %974 = vmatpush.msra.mxu0 0.0
    %975 = vmatpush.msra.mxu0 %v960
    %976 = vmatpush.msra.mxu0 %v959
    %977 = vmatpush.msra.mxu0 %v958
    %978 = vmatpush.msra.mxu0 %v957
    %979 = vmatmul.f32.gmra.mxu0 %v961
    %v980 = vpop.f32.mrf.mxu0
    %v981 = vadd.f32 0.0, %v980
    %982 = vdwg.mxu0
    %v984 = vrot.slane %v981, 6
    %v986 = vadd.f32 %v956, %v984
    %v987 = vxor.u32 %v986, 2147483648
    %v988 = vmul.f32 %v987, 1.442695
    %v989 = vpow.pop %v988
    %v990 = vadd.f32 %v989, 1.0
    %v991 = vrcp.pop %v990
    %v992 = vmul.f32 %v990, %v991
    %v993 = vsub.f32 1.0, %v992
    %v994 = vmul.f32 %v991, %v993
    %v995 = vadd.f32 %v991, %v994
    %vm996 = vweird.f32 %v990
    %vm997 = vweird.f32 %v991
    %vm998 = vmor %vm996, %vm997
    %v999 = vsel %vm998, %v991, %v995
    %v1000 = vand.u32 2147483647, %v990
    %vm1001 = vcmp.eq.f32.partialorder %v1000, 8.507059e+37
    %v1002 = vand.u32 %v990, 2147483648
    %v1003 = vor.u32 1.1754944e-38, %v1002
    %v1004 = vsel %vm1001, %v1003, %v999
    %v1005 = vmul.f32 1.0, %v1004
    %v1006 = vtanh.pop %v986
    %v1008 = vrot.slane %v868, 6
    %v1010 = vmul.f32 %v1005, %v1008
    %1012 = vrot.lane.b32.xlu0 %v1006, 32
    %v1013 = vpop.permute.xlu0 %1012
    %v1015 = vmul.f32 %v1005, %v1013
    %1017 = vrot.lane.b32.xlu0 %v1015, 32
    %v1018 = vpop.permute.xlu0 %1017
    %v1020 = vadd.f32 %v1010, %v1018
    %v1021 = vtanh.pop %v1020
    %1023 = vrot.lane.b32.xlu0 %v1021, 32
    %v1024 = vpop.permute.xlu0 %1023
    %v1026 = vmul.f32 %v1005, %v1024
    %1028 = vrot.lane.b32.xlu0 %v1026, 64
    %v1029 = vpop.permute.xlu0 %1028
    %1031 = vst.msk [vmem:[#allocation3 + $0x8] sm:$0xc] %vm409, %v1029
    %v1032 = vld [vmem:[#allocation2 + $0x8] sm:$0x30]
    %v1033 = vld [vmem:[#allocation11] sm:$0xff]
    %v1034 = vld [vmem:[#allocation11 + $0x8] sm:$0xff]
    %v1035 = vld [vmem:[#allocation11 + $0x10] sm:$0xff]
    %v1036 = vld [vmem:[#allocation11 + $0x18] sm:$0xff]
    %v1037 = vrot.slane %v950, 6
    %1038 = vrot.lane.b32.xlu0 %v1037, 64
    %v1039 = vpop.permute.xlu0 %1038
    %v1040 = vsel %vm194, %v1039, 0
    %1042 = vmatpush.msra.mxu0 0.0
    %1043 = vmatpush.msra.mxu0 0.0
    %1044 = vmatpush.msra.mxu0 0.0
    %1045 = vmatpush.msra.mxu0 0.0
    %1046 = vmatpush.msra.mxu0 0.0
    %1047 = vmatpush.msra.mxu0 0.0
    %1048 = vmatpush.msra.mxu0 0.0
    %1049 = vmatpush.msra.mxu0 0.0
    %1050 = vmatpush.msra.mxu0 0.0
    %1051 = vmatpush.msra.mxu0 0.0
    %1052 = vmatpush.msra.mxu0 0.0
    %1053 = vmatpush.msra.mxu0 0.0
    %1054 = vmatpush.msra.mxu0 %v1036
    %1055 = vmatpush.msra.mxu0 %v1035
    %1056 = vmatpush.msra.mxu0 %v1034
    %1057 = vmatpush.msra.mxu0 %v1033
    %1058 = vmatmul.f32.gmra.mxu0 %v1040
    %v1059 = vpop.f32.mrf.mxu0
    %v1060 = vadd.f32 0.0, %v1059
    %1061 = vdwg.mxu0
    %v1063 = vrot.slane %v1060, 4
    %v1065 = vadd.f32 %v1032, %v1063
    %v1066 = vxor.u32 %v1065, 2147483648
    %v1067 = vmul.f32 %v1066, 1.442695
    %v1068 = vpow.pop %v1067
    %v1069 = vadd.f32 %v1068, 1.0
    %v1070 = vrcp.pop %v1069
    %v1071 = vmul.f32 %v1069, %v1070
    %v1072 = vsub.f32 1.0, %v1071
    %v1073 = vmul.f32 %v1070, %v1072
    %v1074 = vadd.f32 %v1070, %v1073
    %vm1075 = vweird.f32 %v1069
    %vm1076 = vweird.f32 %v1070
    %vm1077 = vmor %vm1075, %vm1076
    %v1078 = vsel %vm1077, %v1070, %v1074
    %v1079 = vand.u32 2147483647, %v1069
    %vm1080 = vcmp.eq.f32.partialorder %v1079, 8.507059e+37
    %v1081 = vand.u32 %v1069, 2147483648
    %v1082 = vor.u32 1.1754944e-38, %v1081
    %v1083 = vsel %vm1080, %v1082, %v1078
    %v1084 = vmul.f32 1.0, %v1083
    %v1085 = vtanh.pop %v1065
    %v1087 = vrot.slane %v944, 2
    %v1089 = vmul.f32 %v1084, %v1087
    %1091 = vrot.lane.b32.xlu0 %v1085, 32
    %v1092 = vpop.permute.xlu0 %1091
    %v1094 = vmul.f32 %v1084, %v1092
    %1096 = vrot.lane.b32.xlu0 %v1094, 32
    %v1097 = vpop.permute.xlu0 %1096
    %v1099 = vadd.f32 %v1089, %v1097
    %v1100 = vtanh.pop %v1099
    %1102 = vrot.lane.b32.xlu0 %v1100, 32
    %v1103 = vpop.permute.xlu0 %1102
    %v1105 = vmul.f32 %v1084, %v1103
    %1107 = vrot.lane.b32.xlu0 %v1105, 64
    %v1108 = vpop.permute.xlu0 %1107
    %1110 = vst.msk [vmem:[#allocation4] sm:$0x30] %vm489, %v1108
    %v1111 = vld [vmem:[#allocation2 + $0x10] sm:$0x30]
    %v1112 = vld [vmem:[#allocation9] sm:$0xff]
    %v1113 = vld [vmem:[#allocation9 + $0x8] sm:$0xff]
    %v1114 = vld [vmem:[#allocation9 + $0x10] sm:$0xff]
    %v1115 = vld [vmem:[#allocation9 + $0x18] sm:$0xff]
    %v1116 = vrot.slane %v1026, 2
    %1117 = vrot.lane.b32.xlu0 %v1116, 64
    %v1118 = vpop.permute.xlu0 %1117
    %v1119 = vsel %vm194, %v1118, 0
    %1121 = vmatpush.msra.mxu0 0.0
    %1122 = vmatpush.msra.mxu0 0.0
    %1123 = vmatpush.msra.mxu0 0.0
    %1124 = vmatpush.msra.mxu0 0.0
    %1125 = vmatpush.msra.mxu0 0.0
    %1126 = vmatpush.msra.mxu0 0.0
    %1127 = vmatpush.msra.mxu0 0.0
    %1128 = vmatpush.msra.mxu0 0.0
    %1129 = vmatpush.msra.mxu0 0.0
    %1130 = vmatpush.msra.mxu0 0.0
    %1131 = vmatpush.msra.mxu0 0.0
    %1132 = vmatpush.msra.mxu0 0.0
    %1133 = vmatpush.msra.mxu0 %v1115
    %1134 = vmatpush.msra.mxu0 %v1114
    %1135 = vmatpush.msra.mxu0 %v1113
    %1136 = vmatpush.msra.mxu0 %v1112
    %1137 = vmatmul.f32.gmra.mxu0 %v1119
    %v1138 = vpop.f32.mrf.mxu0
    %v1139 = vadd.f32 0.0, %v1138
    %1140 = vdwg.mxu0
    %v1142 = vrot.slane %v1139, 4
    %v1144 = vadd.f32 %v1111, %v1142
    %v1145 = vxor.u32 %v1144, 2147483648
    %v1146 = vmul.f32 %v1145, 1.442695
    %v1147 = vpow.pop %v1146
    %v1148 = vadd.f32 %v1147, 1.0
    %v1149 = vrcp.pop %v1148
    %v1150 = vmul.f32 %v1148, %v1149
    %v1151 = vsub.f32 1.0, %v1150
    %v1152 = vmul.f32 %v1149, %v1151
    %v1153 = vadd.f32 %v1149, %v1152
    %vm1154 = vweird.f32 %v1148
    %vm1155 = vweird.f32 %v1149
    %vm1156 = vmor %vm1154, %vm1155
    %v1157 = vsel %vm1156, %v1149, %v1153
    %v1158 = vand.u32 2147483647, %v1148
    %vm1159 = vcmp.eq.f32.partialorder %v1158, 8.507059e+37
    %v1160 = vand.u32 %v1148, 2147483648
    %v1161 = vor.u32 1.1754944e-38, %v1160
    %v1162 = vsel %vm1159, %v1161, %v1157
    %v1163 = vmul.f32 1.0, %v1162
    %v1164 = vtanh.pop %v1144
    %v1166 = vrot.slane %v1020, 6
    %v1168 = vmul.f32 %v1163, %v1166
    %1170 = vrot.lane.b32.xlu0 %v1164, 32
    %v1171 = vpop.permute.xlu0 %1170
    %v1173 = vmul.f32 %v1163, %v1171
    %1175 = vrot.lane.b32.xlu0 %v1173, 32
    %v1176 = vpop.permute.xlu0 %1175
    %v1178 = vadd.f32 %v1168, %v1176
    %v1179 = vtanh.pop %v1178
    %1181 = vrot.lane.b32.xlu0 %v1179, 32
    %v1182 = vpop.permute.xlu0 %1181
    %v1184 = vmul.f32 %v1163, %v1182
    %1186 = vrot.lane.b32.xlu0 %v1184, 64
    %v1187 = vpop.permute.xlu0 %1186
    %1189 = vst.msk [vmem:[#allocation3 + $0x8] sm:$0x30] %vm489, %v1187
    %v1190 = vld [vmem:[#allocation2 + $0x8] sm:$0xc]
    %v1191 = vld [vmem:[#allocation11] sm:$0xff]
    %v1192 = vld [vmem:[#allocation11 + $0x8] sm:$0xff]
    %v1193 = vld [vmem:[#allocation11 + $0x10] sm:$0xff]
    %v1194 = vld [vmem:[#allocation11 + $0x18] sm:$0xff]
    %v1195 = vrot.slane %v1105, 4
    %1196 = vrot.lane.b32.xlu0 %v1195, 64
    %v1197 = vpop.permute.xlu0 %1196
    %v1198 = vsel %vm194, %v1197, 0
    %1200 = vmatpush.msra.mxu0 0.0
    %1201 = vmatpush.msra.mxu0 0.0
    %1202 = vmatpush.msra.mxu0 0.0
    %1203 = vmatpush.msra.mxu0 0.0
    %1204 = vmatpush.msra.mxu0 0.0
    %1205 = vmatpush.msra.mxu0 0.0
    %1206 = vmatpush.msra.mxu0 0.0
    %1207 = vmatpush.msra.mxu0 0.0
    %1208 = vmatpush.msra.mxu0 0.0
    %1209 = vmatpush.msra.mxu0 0.0
    %1210 = vmatpush.msra.mxu0 0.0
    %1211 = vmatpush.msra.mxu0 0.0
    %1212 = vmatpush.msra.mxu0 %v1194
    %1213 = vmatpush.msra.mxu0 %v1193
    %1214 = vmatpush.msra.mxu0 %v1192
    %1215 = vmatpush.msra.mxu0 %v1191
    %1216 = vmatmul.f32.gmra.mxu0 %v1198
    %v1217 = vpop.f32.mrf.mxu0
    %v1218 = vadd.f32 0.0, %v1217
    %1219 = vdwg.mxu0
    %v1221 = vrot.slane %v1218, 6
    %v1223 = vadd.f32 %v1190, %v1221
    %v1224 = vxor.u32 %v1223, 2147483648
    %v1225 = vmul.f32 %v1224, 1.442695
    %v1226 = vpow.pop %v1225
    %v1227 = vadd.f32 %v1226, 1.0
    %v1228 = vrcp.pop %v1227
    %v1229 = vmul.f32 %v1227, %v1228
    %v1230 = vsub.f32 1.0, %v1229
    %v1231 = vmul.f32 %v1228, %v1230
    %v1232 = vadd.f32 %v1228, %v1231
    %vm1233 = vweird.f32 %v1227
    %vm1234 = vweird.f32 %v1228
    %vm1235 = vmor %vm1233, %vm1234
    %v1236 = vsel %vm1235, %v1228, %v1232
    %v1237 = vand.u32 2147483647, %v1227
    %vm1238 = vcmp.eq.f32.partialorder %v1237, 8.507059e+37
    %v1239 = vand.u32 %v1227, 2147483648
    %v1240 = vor.u32 1.1754944e-38, %v1239
    %v1241 = vsel %vm1238, %v1240, %v1236
    %v1242 = vmul.f32 1.0, %v1241
    %v1243 = vtanh.pop %v1223
    %v1245 = vrot.slane %v1099, 2
    %v1247 = vmul.f32 %v1242, %v1245
    %1249 = vrot.lane.b32.xlu0 %v1243, 32
    %v1250 = vpop.permute.xlu0 %1249
    %v1252 = vmul.f32 %v1242, %v1250
    %1254 = vrot.lane.b32.xlu0 %v1252, 32
    %v1255 = vpop.permute.xlu0 %1254
    %v1257 = vadd.f32 %v1247, %v1255
    %v1258 = vtanh.pop %v1257
    %1260 = vrot.lane.b32.xlu0 %v1258, 32
    %v1261 = vpop.permute.xlu0 %1260
    %v1263 = vmul.f32 %v1242, %v1261
    %1265 = vrot.lane.b32.xlu0 %v1263, 64
    %v1266 = vpop.permute.xlu0 %1265
    %1268 = vst.msk [vmem:[#allocation4] sm:$0xc] %vm409, %v1266
    %v1269 = vld [vmem:[#allocation2 + $0x10] sm:$0xc0]
    %v1270 = vld [vmem:[#allocation9] sm:$0xff]
    %v1271 = vld [vmem:[#allocation9 + $0x8] sm:$0xff]
    %v1272 = vld [vmem:[#allocation9 + $0x10] sm:$0xff]
    %v1273 = vld [vmem:[#allocation9 + $0x18] sm:$0xff]
    %v1274 = vrot.slane %v1184, 4
    %1275 = vrot.lane.b32.xlu0 %v1274, 64
    %v1276 = vpop.permute.xlu0 %1275
    %v1277 = vsel %vm194, %v1276, 0
    %1279 = vmatpush.msra.mxu0 0.0
    %1280 = vmatpush.msra.mxu0 0.0
    %1281 = vmatpush.msra.mxu0 0.0
    %1282 = vmatpush.msra.mxu0 0.0
    %1283 = vmatpush.msra.mxu0 0.0
    %1284 = vmatpush.msra.mxu0 0.0
    %1285 = vmatpush.msra.mxu0 0.0
    %1286 = vmatpush.msra.mxu0 0.0
    %1287 = vmatpush.msra.mxu0 0.0
    %1288 = vmatpush.msra.mxu0 0.0
    %1289 = vmatpush.msra.mxu0 0.0
    %1290 = vmatpush.msra.mxu0 0.0
    %1291 = vmatpush.msra.mxu0 %v1273
    %1292 = vmatpush.msra.mxu0 %v1272
    %1293 = vmatpush.msra.mxu0 %v1271
    %1294 = vmatpush.msra.mxu0 %v1270
    %1295 = vmatmul.f32.gmra.mxu0 %v1277
    %v1296 = vpop.f32.mrf.mxu0
    %v1297 = vadd.f32 0.0, %v1296
    %1298 = vdwg.mxu0
    %v1300 = vrot.slane %v1297, 2
    %v1302 = vadd.f32 %v1269, %v1300
    %v1303 = vxor.u32 %v1302, 2147483648
    %v1304 = vmul.f32 %v1303, 1.442695
    %v1305 = vpow.pop %v1304
    %v1306 = vadd.f32 %v1305, 1.0
    %v1307 = vrcp.pop %v1306
    %v1308 = vmul.f32 %v1306, %v1307
    %v1309 = vsub.f32 1.0, %v1308
    %v1310 = vmul.f32 %v1307, %v1309
    %v1311 = vadd.f32 %v1307, %v1310
    %vm1312 = vweird.f32 %v1306
    %vm1313 = vweird.f32 %v1307
    %vm1314 = vmor %vm1312, %vm1313
    %v1315 = vsel %vm1314, %v1307, %v1311
    %v1316 = vand.u32 2147483647, %v1306
    %vm1317 = vcmp.eq.f32.partialorder %v1316, 8.507059e+37
    %v1318 = vand.u32 %v1306, 2147483648
    %v1319 = vor.u32 1.1754944e-38, %v1318
    %v1320 = vsel %vm1317, %v1319, %v1315
    %v1321 = vmul.f32 1.0, %v1320
    %v1322 = vtanh.pop %v1302
    %v1324 = vrot.slane %v1178, 6
    %v1326 = vmul.f32 %v1321, %v1324
    %1328 = vrot.lane.b32.xlu0 %v1322, 32
    %v1329 = vpop.permute.xlu0 %1328
    %v1331 = vmul.f32 %v1321, %v1329
    %1333 = vrot.lane.b32.xlu0 %v1331, 32
    %v1334 = vpop.permute.xlu0 %1333
    %v1336 = vadd.f32 %v1326, %v1334
    %v1337 = vtanh.pop %v1336
    %1339 = vrot.lane.b32.xlu0 %v1337, 32
    %v1340 = vpop.permute.xlu0 %1339
    %v1342 = vmul.f32 %v1321, %v1340
    %1344 = vrot.lane.b32.xlu0 %v1342, 64
    %v1345 = vpop.permute.xlu0 %1344
    %1347 = vst.msk [vmem:[#allocation3 + $0x8] sm:$0xc0] %vm332, %v1345
    %v1348 = vld [vmem:[#allocation2 + $0x8] sm:$0x3]
    %v1349 = vld [vmem:[#allocation11] sm:$0xff]
    %v1350 = vld [vmem:[#allocation11 + $0x8] sm:$0xff]
    %v1351 = vld [vmem:[#allocation11 + $0x10] sm:$0xff]
    %v1352 = vld [vmem:[#allocation11 + $0x18] sm:$0xff]
    %v1353 = vrot.slane %v1263, 2
    %1354 = vrot.lane.b32.xlu0 %v1353, 64
    %v1355 = vpop.permute.xlu0 %1354
    %v1356 = vsel %vm194, %v1355, 0
    %1358 = vmatpush.msra.mxu0 0.0
    %1359 = vmatpush.msra.mxu0 0.0
    %1360 = vmatpush.msra.mxu0 0.0
    %1361 = vmatpush.msra.mxu0 0.0
    %1362 = vmatpush.msra.mxu0 0.0
    %1363 = vmatpush.msra.mxu0 0.0
    %1364 = vmatpush.msra.mxu0 0.0
    %1365 = vmatpush.msra.mxu0 0.0
    %1366 = vmatpush.msra.mxu0 0.0
    %1367 = vmatpush.msra.mxu0 0.0
    %1368 = vmatpush.msra.mxu0 0.0
    %1369 = vmatpush.msra.mxu0 0.0
    %1370 = vmatpush.msra.mxu0 %v1352
    %1371 = vmatpush.msra.mxu0 %v1351
    %1372 = vmatpush.msra.mxu0 %v1350
    %1373 = vmatpush.msra.mxu0 %v1349
    %1374 = vmatmul.f32.gmra.mxu0 %v1356
    %v1375 = vpop.f32.mrf.mxu0
    %v1376 = vadd.f32 0.0, %v1375
    %1377 = vdwg.mxu0
    %v1378 = vadd.f32 %v1348, %v1376
    %v1379 = vxor.u32 %v1378, 2147483648
    %v1380 = vmul.f32 %v1379, 1.442695
    %v1381 = vpow.pop %v1380
    %v1382 = vadd.f32 %v1381, 1.0
    %v1383 = vrcp.pop %v1382
    %v1384 = vmul.f32 %v1382, %v1383
    %v1385 = vsub.f32 1.0, %v1384
    %v1386 = vmul.f32 %v1383, %v1385
    %v1387 = vadd.f32 %v1383, %v1386
    %vm1388 = vweird.f32 %v1382
    %vm1389 = vweird.f32 %v1383
    %vm1390 = vmor %vm1388, %vm1389
    %v1391 = vsel %vm1390, %v1383, %v1387
    %v1392 = vand.u32 2147483647, %v1382
    %vm1393 = vcmp.eq.f32.partialorder %v1392, 8.507059e+37
    %v1394 = vand.u32 %v1382, 2147483648
    %v1395 = vor.u32 1.1754944e-38, %v1394
    %v1396 = vsel %vm1393, %v1395, %v1391
    %v1397 = vmul.f32 1.0, %v1396
    %v1398 = vtanh.pop %v1378
    %v1400 = vrot.slane %v1257, 2
    %v1402 = vmul.f32 %v1397, %v1400
    %1404 = vrot.lane.b32.xlu0 %v1398, 32
    %v1405 = vpop.permute.xlu0 %1404
    %v1407 = vmul.f32 %v1397, %v1405
    %1409 = vrot.lane.b32.xlu0 %v1407, 32
    %v1410 = vpop.permute.xlu0 %1409
    %v1412 = vadd.f32 %v1402, %v1410
    %v1413 = vtanh.pop %v1412
    %1415 = vrot.lane.b32.xlu0 %v1413, 32
    %v1416 = vpop.permute.xlu0 %1415
    %v1418 = vmul.f32 %v1397, %v1416
    %1420 = vrot.lane.b32.xlu0 %v1418, 64
    %v1421 = vpop.permute.xlu0 %1420
    %1423 = vst.msk [vmem:[#allocation4] sm:$0x3] %vm260, %v1421
    %v1424 = vld [vmem:[#allocation3] sm:$0xff]
    %v1425 = vld [vmem:[#allocation3 + $0x8] sm:$0xff]
    %v1426 = vld [vmem:[%s5] sm:$0xff]
    %v1427 = vld [vmem:[%s5 + $0x8] sm:$0xff]
    %v1428 = vld [vmem:[%s5 + $0x10] sm:$0xff]
    %v1429 = vld [vmem:[%s5 + $0x18] sm:$0xff]
    %v1430 = vld [vmem:[#allocation4] sm:$0xff]
    %v1431 = vld [vmem:[#allocation4 + $0x8] sm:$0xff]
    %v1432 = vld [vmem:[%s5 + $0x20] sm:$0xff]
    %v1433 = vld [vmem:[%s5 + $0x28] sm:$0xff]
    %v1434 = vld [vmem:[%s5 + $0x30] sm:$0xff]
    %v1435 = vld [vmem:[%s5 + $0x38] sm:$0xff]
    %v1437 = vsel %vm194, %v1430, 0
    %v1440 = vsel %vm194, %v1431, 0
    %1442 = vmatpush.msra.mxu0 0.0
    %1443 = vmatpush.msra.mxu0 0.0
    %1444 = vmatpush.msra.mxu0 0.0
    %1445 = vmatpush.msra.mxu0 0.0
    %1446 = vmatpush.msra.mxu0 0.0
    %1447 = vmatpush.msra.mxu0 0.0
    %1448 = vmatpush.msra.mxu0 0.0
    %1449 = vmatpush.msra.mxu0 0.0
    %1450 = vmatpush.msra.mxu0 0.0
    %1451 = vmatpush.msra.mxu0 0.0
    %1452 = vmatpush.msra.mxu0 0.0
    %1453 = vmatpush.msra.mxu0 0.0
    %1454 = vmatpush.msra.mxu0 %v1435
    %1455 = vmatpush.msra.mxu0 %v1434
    %1456 = vmatpush.msra.mxu0 %v1433
    %1457 = vmatpush.msra.mxu0 %v1432
    %1458 = vmatmul.f32.gmra.mxu0 %v1437
    %v1459 = vpop.f32.mrf.mxu0
    %v1460 = vadd.f32 0.0, %v1459
    %1461 = vmatmul.f32.gmra.mxu0 %v1440
    %v1462 = vpop.f32.mrf.mxu0
    %v1463 = vadd.f32 0.0, %v1462
    %1464 = vdwg.mxu0
    %v1466 = vsel %vm194, %v1424, 0
    %v1469 = vsel %vm194, %v1425, 0
    %1471 = vmatpush.msra.mxu0 0.0
    %1472 = vmatpush.msra.mxu0 0.0
    %1473 = vmatpush.msra.mxu0 0.0
    %1474 = vmatpush.msra.mxu0 0.0
    %1475 = vmatpush.msra.mxu0 0.0
    %1476 = vmatpush.msra.mxu0 0.0
    %1477 = vmatpush.msra.mxu0 0.0
    %1478 = vmatpush.msra.mxu0 0.0
    %1479 = vmatpush.msra.mxu0 0.0
    %1480 = vmatpush.msra.mxu0 0.0
    %1481 = vmatpush.msra.mxu0 0.0
    %1482 = vmatpush.msra.mxu0 0.0
    %1483 = vmatpush.msra.mxu0 %v1429
    %1484 = vmatpush.msra.mxu0 %v1428
    %1485 = vmatpush.msra.mxu0 %v1427
    %1486 = vmatpush.msra.mxu0 %v1426
    %1487 = vmatmul.f32.gmra.mxu0 %v1466
    %v1488 = vpop.f32.mrf.mxu0
    %v1489 = vadd.f32 %v1460, %v1488
    %1490 = vmatmul.f32.gmra.mxu0 %v1469
    %v1491 = vpop.f32.mrf.mxu0
    %v1492 = vadd.f32 %v1463, %v1491
    %1493 = vdwg.mxu0
    %v1494 = vld [vmem:[%s7] sm:$0x1]
    %v1496 = vperm.slane %v1494, 0
    %v1498 = vadd.f32 %v1489, %v1496
    %v1499 = vadd.f32 %v1492, %v1496
    %1500 = vst [vmem:[#allocation5] sm:$0xff] %v1498
    %1501 = vst [vmem:[#allocation5 + $0x8] sm:$0xff] %v1499
    %v1502 = vld [vmem:[#allocation5] sm:$0x3]
    %v1503 = vld [vmem:[#allocation12] sm:$0xff]
    %v1504 = vld [vmem:[#allocation12 + $0x8] sm:$0xff]
    %v1505 = vld [vmem:[#allocation12 + $0x10] sm:$0xff]
    %v1506 = vld [vmem:[#allocation12 + $0x18] sm:$0xff]
    %1507 = vmatpush.msra.mxu0 0.0
    %1508 = vmatpush.msra.mxu0 0.0
    %1509 = vmatpush.msra.mxu0 0.0
    %1510 = vmatpush.msra.mxu0 0.0
    %1511 = vmatpush.msra.mxu0 0.0
    %1512 = vmatpush.msra.mxu0 0.0
    %1513 = vmatpush.msra.mxu0 0.0
    %1514 = vmatpush.msra.mxu0 0.0
    %1515 = vmatpush.msra.mxu0 0.0
    %1516 = vmatpush.msra.mxu0 0.0
    %1517 = vmatpush.msra.mxu0 0.0
    %1518 = vmatpush.msra.mxu0 0.0
    %1519 = vmatpush.msra.mxu0 %v1506
    %1520 = vmatpush.msra.mxu0 %v1505
    %1521 = vmatpush.msra.mxu0 %v1504
    %1522 = vmatpush.msra.mxu0 %v1503
    %1523 = vmatmul.f32.gmra.mxu0 %v196
    %v1524 = vpop.f32.mrf.mxu0
    %v1525 = vadd.f32 0.0, %v1524
    %1526 = vdwg.mxu0
    %v1527 = vadd.f32 %v1502, %v1525
    %v1528 = vxor.u32 %v1527, 2147483648
    %v1529 = vmul.f32 %v1528, 1.442695
    %v1530 = vpow.pop %v1529
    %v1531 = vadd.f32 %v1530, 1.0
    %v1532 = vrcp.pop %v1531
    %v1533 = vmul.f32 %v1531, %v1532
    %v1534 = vsub.f32 1.0, %v1533
    %v1535 = vmul.f32 %v1532, %v1534
    %v1536 = vadd.f32 %v1532, %v1535
    %vm1537 = vweird.f32 %v1531
    %vm1538 = vweird.f32 %v1532
    %vm1539 = vmor %vm1537, %vm1538
    %v1540 = vsel %vm1539, %v1532, %v1536
    %v1541 = vand.u32 2147483647, %v1531
    %vm1542 = vcmp.eq.f32.partialorder %v1541, 8.507059e+37
    %v1543 = vand.u32 %v1531, 2147483648
    %v1544 = vor.u32 1.1754944e-38, %v1543
    %v1545 = vsel %vm1542, %v1544, %v1540
    %v1546 = vmul.f32 1.0, %v1545
    %v1547 = vtanh.pop %v1527
    %v1548 = vmul.f32 %v1546, 0.0
    %1550 = vrot.lane.b32.xlu0 %v1547, 32
    %v1551 = vpop.permute.xlu0 %1550
    %v1553 = vmul.f32 %v1546, %v1551
    %1555 = vrot.lane.b32.xlu0 %v1553, 32
    %v1556 = vpop.permute.xlu0 %1555
    %v1558 = vadd.f32 %v1548, %v1556
    %v1559 = vtanh.pop %v1558
    %1561 = vrot.lane.b32.xlu0 %v1559, 32
    %v1562 = vpop.permute.xlu0 %1561
    %v1564 = vmul.f32 %v1546, %v1562
    %v1565 = vld [vmem:[#allocation5 + $0x2] sm:$0x3]
    %1567 = vrot.lane.b32.xlu0 %v1564, 64
    %v1568 = vpop.permute.xlu0 %1567
    %v1569 = vsel %vm194, %v1568, 0
    %1571 = vmatpush.msra.mxu0 0.0
    %1572 = vmatpush.msra.mxu0 0.0
    %1573 = vmatpush.msra.mxu0 0.0
    %1574 = vmatpush.msra.mxu0 0.0
    %1575 = vmatpush.msra.mxu0 0.0
    %1576 = vmatpush.msra.mxu0 0.0
    %1577 = vmatpush.msra.mxu0 0.0
    %1578 = vmatpush.msra.mxu0 0.0
    %1579 = vmatpush.msra.mxu0 0.0
    %1580 = vmatpush.msra.mxu0 0.0
    %1581 = vmatpush.msra.mxu0 0.0
    %1582 = vmatpush.msra.mxu0 0.0
    %1583 = vmatpush.msra.mxu0 %v1506
    %1584 = vmatpush.msra.mxu0 %v1505
    %1585 = vmatpush.msra.mxu0 %v1504
    %1586 = vmatpush.msra.mxu0 %v1503
    %1587 = vmatmul.f32.gmra.mxu0 %v1569
    %v1588 = vpop.f32.mrf.mxu0
    %v1589 = vadd.f32 0.0, %v1588
    %1590 = vdwg.mxu0
    %v1591 = vadd.f32 %v1565, %v1589
    %v1592 = vxor.u32 %v1591, 2147483648
    %v1593 = vmul.f32 %v1592, 1.442695
    %v1594 = vpow.pop %v1593
    %v1595 = vadd.f32 %v1594, 1.0
    %v1596 = vrcp.pop %v1595
    %v1597 = vmul.f32 %v1595, %v1596
    %v1598 = vsub.f32 1.0, %v1597
    %v1599 = vmul.f32 %v1596, %v1598
    %v1600 = vadd.f32 %v1596, %v1599
    %vm1601 = vweird.f32 %v1595
    %vm1602 = vweird.f32 %v1596
    %vm1603 = vmor %vm1601, %vm1602
    %v1604 = vsel %vm1603, %v1596, %v1600
    %v1605 = vand.u32 2147483647, %v1595
    %vm1606 = vcmp.eq.f32.partialorder %v1605, 8.507059e+37
    %v1607 = vand.u32 %v1595, 2147483648
    %v1608 = vor.u32 1.1754944e-38, %v1607
    %v1609 = vsel %vm1606, %v1608, %v1604
    %v1610 = vmul.f32 1.0, %v1609
    %v1611 = vtanh.pop %v1591
    %v1612 = vmul.f32 %v1610, %v1558
    %1614 = vrot.lane.b32.xlu0 %v1611, 32
    %v1615 = vpop.permute.xlu0 %1614
    %v1617 = vmul.f32 %v1610, %v1615
    %1619 = vrot.lane.b32.xlu0 %v1617, 32
    %v1620 = vpop.permute.xlu0 %1619
    %v1622 = vadd.f32 %v1612, %v1620
    %v1623 = vtanh.pop %v1622
    %1625 = vrot.lane.b32.xlu0 %v1623, 32
    %v1626 = vpop.permute.xlu0 %1625
    %v1628 = vmul.f32 %v1610, %v1626
    %v1629 = vld [vmem:[#allocation5 + $0x4] sm:$0x3]
    %1631 = vrot.lane.b32.xlu0 %v1628, 64
    %v1632 = vpop.permute.xlu0 %1631
    %v1633 = vsel %vm194, %v1632, 0
    %1635 = vmatpush.msra.mxu0 0.0
    %1636 = vmatpush.msra.mxu0 0.0
    %1637 = vmatpush.msra.mxu0 0.0
    %1638 = vmatpush.msra.mxu0 0.0
    %1639 = vmatpush.msra.mxu0 0.0
    %1640 = vmatpush.msra.mxu0 0.0
    %1641 = vmatpush.msra.mxu0 0.0
    %1642 = vmatpush.msra.mxu0 0.0
    %1643 = vmatpush.msra.mxu0 0.0
    %1644 = vmatpush.msra.mxu0 0.0
    %1645 = vmatpush.msra.mxu0 0.0
    %1646 = vmatpush.msra.mxu0 0.0
    %1647 = vmatpush.msra.mxu0 %v1506
    %1648 = vmatpush.msra.mxu0 %v1505
    %1649 = vmatpush.msra.mxu0 %v1504
    %1650 = vmatpush.msra.mxu0 %v1503
    %1651 = vmatmul.f32.gmra.mxu0 %v1633
    %v1652 = vpop.f32.mrf.mxu0
    %v1653 = vadd.f32 0.0, %v1652
    %1654 = vdwg.mxu0
    %v1655 = vadd.f32 %v1629, %v1653
    %v1656 = vxor.u32 %v1655, 2147483648
    %v1657 = vmul.f32 %v1656, 1.442695
    %v1658 = vpow.pop %v1657
    %v1659 = vadd.f32 %v1658, 1.0
    %v1660 = vrcp.pop %v1659
    %v1661 = vmul.f32 %v1659, %v1660
    %v1662 = vsub.f32 1.0, %v1661
    %v1663 = vmul.f32 %v1660, %v1662
    %v1664 = vadd.f32 %v1660, %v1663
    %vm1665 = vweird.f32 %v1659
    %vm1666 = vweird.f32 %v1660
    %vm1667 = vmor %vm1665, %vm1666
    %v1668 = vsel %vm1667, %v1660, %v1664
    %v1669 = vand.u32 2147483647, %v1659
    %vm1670 = vcmp.eq.f32.partialorder %v1669, 8.507059e+37
    %v1671 = vand.u32 %v1659, 2147483648
    %v1672 = vor.u32 1.1754944e-38, %v1671
    %v1673 = vsel %vm1670, %v1672, %v1668
    %v1674 = vmul.f32 1.0, %v1673
    %v1675 = vtanh.pop %v1655
    %v1676 = vmul.f32 %v1674, %v1622
    %1678 = vrot.lane.b32.xlu0 %v1675, 32
    %v1679 = vpop.permute.xlu0 %1678
    %v1681 = vmul.f32 %v1674, %v1679
    %1683 = vrot.lane.b32.xlu0 %v1681, 32
    %v1684 = vpop.permute.xlu0 %1683
    %v1686 = vadd.f32 %v1676, %v1684
    %v1687 = vtanh.pop %v1686
    %1689 = vrot.lane.b32.xlu0 %v1687, 32
    %v1690 = vpop.permute.xlu0 %1689
    %v1692 = vmul.f32 %v1674, %v1690
    %v1693 = vld [vmem:[#allocation5 + $0x6] sm:$0x3]
    %1695 = vrot.lane.b32.xlu0 %v1692, 64
    %v1696 = vpop.permute.xlu0 %1695
    %v1697 = vsel %vm194, %v1696, 0
    %1699 = vmatpush.msra.mxu0 0.0
    %1700 = vmatpush.msra.mxu0 0.0
    %1701 = vmatpush.msra.mxu0 0.0
    %1702 = vmatpush.msra.mxu0 0.0
    %1703 = vmatpush.msra.mxu0 0.0
    %1704 = vmatpush.msra.mxu0 0.0
    %1705 = vmatpush.msra.mxu0 0.0
    %1706 = vmatpush.msra.mxu0 0.0
    %1707 = vmatpush.msra.mxu0 0.0
    %1708 = vmatpush.msra.mxu0 0.0
    %1709 = vmatpush.msra.mxu0 0.0
    %1710 = vmatpush.msra.mxu0 0.0
    %1711 = vmatpush.msra.mxu0 %v1506
    %1712 = vmatpush.msra.mxu0 %v1505
    %1713 = vmatpush.msra.mxu0 %v1504
    %1714 = vmatpush.msra.mxu0 %v1503
    %1715 = vmatmul.f32.gmra.mxu0 %v1697
    %v1716 = vpop.f32.mrf.mxu0
    %v1717 = vadd.f32 0.0, %v1716
    %1718 = vdwg.mxu0
    %v1719 = vadd.f32 %v1693, %v1717
    %v1720 = vxor.u32 %v1719, 2147483648
    %v1721 = vmul.f32 %v1720, 1.442695
    %v1722 = vpow.pop %v1721
    %v1723 = vadd.f32 %v1722, 1.0
    %v1724 = vrcp.pop %v1723
    %v1725 = vmul.f32 %v1723, %v1724
    %v1726 = vsub.f32 1.0, %v1725
    %v1727 = vmul.f32 %v1724, %v1726
    %v1728 = vadd.f32 %v1724, %v1727
    %vm1729 = vweird.f32 %v1723
    %vm1730 = vweird.f32 %v1724
    %vm1731 = vmor %vm1729, %vm1730
    %v1732 = vsel %vm1731, %v1724, %v1728
    %v1733 = vand.u32 2147483647, %v1723
    %vm1734 = vcmp.eq.f32.partialorder %v1733, 8.507059e+37
    %v1735 = vand.u32 %v1723, 2147483648
    %v1736 = vor.u32 1.1754944e-38, %v1735
    %v1737 = vsel %vm1734, %v1736, %v1732
    %v1738 = vmul.f32 1.0, %v1737
    %v1739 = vtanh.pop %v1719
    %v1740 = vmul.f32 %v1738, %v1686
    %1742 = vrot.lane.b32.xlu0 %v1739, 32
    %v1743 = vpop.permute.xlu0 %1742
    %v1745 = vmul.f32 %v1738, %v1743
    %1747 = vrot.lane.b32.xlu0 %v1745, 32
    %v1748 = vpop.permute.xlu0 %1747
    %v1750 = vadd.f32 %v1740, %v1748
    %v1751 = vtanh.pop %v1750
    %1753 = vrot.lane.b32.xlu0 %v1751, 32
    %v1754 = vpop.permute.xlu0 %1753
    %v1756 = vmul.f32 %v1738, %v1754
    %v1757 = vld [vmem:[#allocation5 + $0x8] sm:$0x3]
    %1759 = vrot.lane.b32.xlu0 %v1756, 64
    %v1760 = vpop.permute.xlu0 %1759
    %v1761 = vsel %vm194, %v1760, 0
    %1763 = vmatpush.msra.mxu0 0.0
    %1764 = vmatpush.msra.mxu0 0.0
    %1765 = vmatpush.msra.mxu0 0.0
    %1766 = vmatpush.msra.mxu0 0.0
    %1767 = vmatpush.msra.mxu0 0.0
    %1768 = vmatpush.msra.mxu0 0.0
    %1769 = vmatpush.msra.mxu0 0.0
    %1770 = vmatpush.msra.mxu0 0.0
    %1771 = vmatpush.msra.mxu0 0.0
    %1772 = vmatpush.msra.mxu0 0.0
    %1773 = vmatpush.msra.mxu0 0.0
    %1774 = vmatpush.msra.mxu0 0.0
    %1775 = vmatpush.msra.mxu0 %v1506
    %1776 = vmatpush.msra.mxu0 %v1505
    %1777 = vmatpush.msra.mxu0 %v1504
    %1778 = vmatpush.msra.mxu0 %v1503
    %1779 = vmatmul.f32.gmra.mxu0 %v1761
    %v1780 = vpop.f32.mrf.mxu0
    %v1781 = vadd.f32 0.0, %v1780
    %1782 = vdwg.mxu0
    %v1783 = vadd.f32 %v1757, %v1781
    %v1784 = vxor.u32 %v1783, 2147483648
    %v1785 = vmul.f32 %v1784, 1.442695
    %v1786 = vpow.pop %v1785
    %v1787 = vadd.f32 %v1786, 1.0
    %v1788 = vrcp.pop %v1787
    %v1789 = vmul.f32 %v1787, %v1788
    %v1790 = vsub.f32 1.0, %v1789
    %v1791 = vmul.f32 %v1788, %v1790
    %v1792 = vadd.f32 %v1788, %v1791
    %vm1793 = vweird.f32 %v1787
    %vm1794 = vweird.f32 %v1788
    %vm1795 = vmor %vm1793, %vm1794
    %v1796 = vsel %vm1795, %v1788, %v1792
    %v1797 = vand.u32 2147483647, %v1787
    %vm1798 = vcmp.eq.f32.partialorder %v1797, 8.507059e+37
    %v1799 = vand.u32 %v1787, 2147483648
    %v1800 = vor.u32 1.1754944e-38, %v1799
    %v1801 = vsel %vm1798, %v1800, %v1796
    %v1802 = vmul.f32 1.0, %v1801
    %v1803 = vtanh.pop %v1783
    %v1804 = vmul.f32 %v1802, %v1750
    %1806 = vrot.lane.b32.xlu0 %v1803, 32
    %v1807 = vpop.permute.xlu0 %1806
    %v1809 = vmul.f32 %v1802, %v1807
    %1811 = vrot.lane.b32.xlu0 %v1809, 32
    %v1812 = vpop.permute.xlu0 %1811
    %v1814 = vadd.f32 %v1804, %v1812
    %v1815 = vtanh.pop %v1814
    %1817 = vrot.lane.b32.xlu0 %v1815, 32
    %v1818 = vpop.permute.xlu0 %1817
    %v1820 = vmul.f32 %v1802, %v1818
    %v1821 = vld [vmem:[#allocation5 + $0xa] sm:$0x3]
    %1823 = vrot.lane.b32.xlu0 %v1820, 64
    %v1824 = vpop.permute.xlu0 %1823
    %v1825 = vsel %vm194, %v1824, 0
    %1827 = vmatpush.msra.mxu0 0.0
    %1828 = vmatpush.msra.mxu0 0.0
    %1829 = vmatpush.msra.mxu0 0.0
    %1830 = vmatpush.msra.mxu0 0.0
    %1831 = vmatpush.msra.mxu0 0.0
    %1832 = vmatpush.msra.mxu0 0.0
    %1833 = vmatpush.msra.mxu0 0.0
    %1834 = vmatpush.msra.mxu0 0.0
    %1835 = vmatpush.msra.mxu0 0.0
    %1836 = vmatpush.msra.mxu0 0.0
    %1837 = vmatpush.msra.mxu0 0.0
    %1838 = vmatpush.msra.mxu0 0.0
    %1839 = vmatpush.msra.mxu0 %v1506
    %1840 = vmatpush.msra.mxu0 %v1505
    %1841 = vmatpush.msra.mxu0 %v1504
    %1842 = vmatpush.msra.mxu0 %v1503
    %1843 = vmatmul.f32.gmra.mxu0 %v1825
    %v1844 = vpop.f32.mrf.mxu0
    %v1845 = vadd.f32 0.0, %v1844
    %1846 = vdwg.mxu0
    %v1847 = vadd.f32 %v1821, %v1845
    %v1848 = vxor.u32 %v1847, 2147483648
    %v1849 = vmul.f32 %v1848, 1.442695
    %v1850 = vpow.pop %v1849
    %v1851 = vadd.f32 %v1850, 1.0
    %v1852 = vrcp.pop %v1851
    %v1853 = vmul.f32 %v1851, %v1852
    %v1854 = vsub.f32 1.0, %v1853
    %v1855 = vmul.f32 %v1852, %v1854
    %v1856 = vadd.f32 %v1852, %v1855
    %vm1857 = vweird.f32 %v1851
    %vm1858 = vweird.f32 %v1852
    %vm1859 = vmor %vm1857, %vm1858
    %v1860 = vsel %vm1859, %v1852, %v1856
    %v1861 = vand.u32 2147483647, %v1851
    %vm1862 = vcmp.eq.f32.partialorder %v1861, 8.507059e+37
    %v1863 = vand.u32 %v1851, 2147483648
    %v1864 = vor.u32 1.1754944e-38, %v1863
    %v1865 = vsel %vm1862, %v1864, %v1860
    %v1866 = vmul.f32 1.0, %v1865
    %v1867 = vtanh.pop %v1847
    %v1868 = vmul.f32 %v1866, %v1814
    %1870 = vrot.lane.b32.xlu0 %v1867, 32
    %v1871 = vpop.permute.xlu0 %1870
    %v1873 = vmul.f32 %v1866, %v1871
    %1875 = vrot.lane.b32.xlu0 %v1873, 32
    %v1876 = vpop.permute.xlu0 %1875
    %v1878 = vadd.f32 %v1868, %v1876
    %v1879 = vtanh.pop %v1878
    %1881 = vrot.lane.b32.xlu0 %v1879, 32
    %v1882 = vpop.permute.xlu0 %1881
    %v1884 = vmul.f32 %v1866, %v1882
    %v1885 = vld [vmem:[#allocation5 + $0xc] sm:$0x3]
    %1887 = vrot.lane.b32.xlu0 %v1884, 64
    %v1888 = vpop.permute.xlu0 %1887
    %v1889 = vsel %vm194, %v1888, 0
    %1891 = vmatpush.msra.mxu0 0.0
    %1892 = vmatpush.msra.mxu0 0.0
    %1893 = vmatpush.msra.mxu0 0.0
    %1894 = vmatpush.msra.mxu0 0.0
    %1895 = vmatpush.msra.mxu0 0.0
    %1896 = vmatpush.msra.mxu0 0.0
    %1897 = vmatpush.msra.mxu0 0.0
    %1898 = vmatpush.msra.mxu0 0.0
    %1899 = vmatpush.msra.mxu0 0.0
    %1900 = vmatpush.msra.mxu0 0.0
    %1901 = vmatpush.msra.mxu0 0.0
    %1902 = vmatpush.msra.mxu0 0.0
    %1903 = vmatpush.msra.mxu0 %v1506
    %1904 = vmatpush.msra.mxu0 %v1505
    %1905 = vmatpush.msra.mxu0 %v1504
    %1906 = vmatpush.msra.mxu0 %v1503
    %1907 = vmatmul.f32.gmra.mxu0 %v1889
    %v1908 = vpop.f32.mrf.mxu0
    %v1909 = vadd.f32 0.0, %v1908
    %1910 = vdwg.mxu0
    %v1911 = vadd.f32 %v1885, %v1909
    %v1912 = vxor.u32 %v1911, 2147483648
    %v1913 = vmul.f32 %v1912, 1.442695
    %v1914 = vpow.pop %v1913
    %v1915 = vadd.f32 %v1914, 1.0
    %v1916 = vrcp.pop %v1915
    %v1917 = vmul.f32 %v1915, %v1916
    %v1918 = vsub.f32 1.0, %v1917
    %v1919 = vmul.f32 %v1916, %v1918
    %v1920 = vadd.f32 %v1916, %v1919
    %vm1921 = vweird.f32 %v1915
    %vm1922 = vweird.f32 %v1916
    %vm1923 = vmor %vm1921, %vm1922
    %v1924 = vsel %vm1923, %v1916, %v1920
    %v1925 = vand.u32 2147483647, %v1915
    %vm1926 = vcmp.eq.f32.partialorder %v1925, 8.507059e+37
    %v1927 = vand.u32 %v1915, 2147483648
    %v1928 = vor.u32 1.1754944e-38, %v1927
    %v1929 = vsel %vm1926, %v1928, %v1924
    %v1930 = vmul.f32 1.0, %v1929
    %v1931 = vtanh.pop %v1911
    %v1932 = vmul.f32 %v1930, %v1878
    %1934 = vrot.lane.b32.xlu0 %v1931, 32
    %v1935 = vpop.permute.xlu0 %1934
    %v1937 = vmul.f32 %v1930, %v1935
    %1939 = vrot.lane.b32.xlu0 %v1937, 32
    %v1940 = vpop.permute.xlu0 %1939
    %v1942 = vadd.f32 %v1932, %v1940
    %v1943 = vtanh.pop %v1942
    %1945 = vrot.lane.b32.xlu0 %v1943, 32
    %v1946 = vpop.permute.xlu0 %1945
    %v1948 = vmul.f32 %v1930, %v1946
    %v1949 = vld [vmem:[#allocation5 + $0xe] sm:$0x3]
    %1951 = vrot.lane.b32.xlu0 %v1948, 64
    %v1952 = vpop.permute.xlu0 %1951
    %v1953 = vsel %vm194, %v1952, 0
    %1955 = vmatpush.msra.mxu0 0.0
    %1956 = vmatpush.msra.mxu0 0.0
    %1957 = vmatpush.msra.mxu0 0.0
    %1958 = vmatpush.msra.mxu0 0.0
    %1959 = vmatpush.msra.mxu0 0.0
    %1960 = vmatpush.msra.mxu0 0.0
    %1961 = vmatpush.msra.mxu0 0.0
    %1962 = vmatpush.msra.mxu0 0.0
    %1963 = vmatpush.msra.mxu0 0.0
    %1964 = vmatpush.msra.mxu0 0.0
    %1965 = vmatpush.msra.mxu0 0.0
    %1966 = vmatpush.msra.mxu0 0.0
    %1967 = vmatpush.msra.mxu0 %v1506
    %1968 = vmatpush.msra.mxu0 %v1505
    %1969 = vmatpush.msra.mxu0 %v1504
    %1970 = vmatpush.msra.mxu0 %v1503
    %1971 = vmatmul.f32.gmra.mxu0 %v1953
    %v1972 = vpop.f32.mrf.mxu0
    %v1973 = vadd.f32 0.0, %v1972
    %1974 = vdwg.mxu0
    %v1975 = vadd.f32 %v1949, %v1973
    %v1976 = vxor.u32 %v1975, 2147483648
    %v1977 = vmul.f32 %v1976, 1.442695
    %v1978 = vpow.pop %v1977
    %v1979 = vadd.f32 %v1978, 1.0
    %v1980 = vrcp.pop %v1979
    %v1981 = vmul.f32 %v1979, %v1980
    %v1982 = vsub.f32 1.0, %v1981
    %v1983 = vmul.f32 %v1980, %v1982
    %v1984 = vadd.f32 %v1980, %v1983
    %vm1985 = vweird.f32 %v1979
    %vm1986 = vweird.f32 %v1980
    %vm1987 = vmor %vm1985, %vm1986
    %v1988 = vsel %vm1987, %v1980, %v1984
    %v1989 = vand.u32 2147483647, %v1979
    %vm1990 = vcmp.eq.f32.partialorder %v1989, 8.507059e+37
    %v1991 = vand.u32 %v1979, 2147483648
    %v1992 = vor.u32 1.1754944e-38, %v1991
    %v1993 = vsel %vm1990, %v1992, %v1988
    %v1994 = vmul.f32 1.0, %v1993
    %v1995 = vtanh.pop %v1975
    %v1996 = vmul.f32 %v1994, %v1942
    %1998 = vrot.lane.b32.xlu0 %v1995, 32
    %v1999 = vpop.permute.xlu0 %1998
    %v2001 = vmul.f32 %v1994, %v1999
    %2003 = vrot.lane.b32.xlu0 %v2001, 32
    %v2004 = vpop.permute.xlu0 %2003
    %v2006 = vadd.f32 %v1996, %v2004
    %v2007 = vtanh.pop %v2006
    %2009 = vrot.lane.b32.xlu0 %v2007, 32
    %v2010 = vpop.permute.xlu0 %2009
    %v2012 = vmul.f32 %v1994, %v2010
    %v2013 = vld [vmem:[#allocation14] sm:$0xff]
    %v2014 = vld [vmem:[#allocation14 + $0x8] sm:$0xff]
    %v2015 = vld [vmem:[#allocation14 + $0x10] sm:$0xff]
    %v2016 = vld [vmem:[#allocation14 + $0x18] sm:$0xff]
    %v2017 = vld [vmem:[%s9] sm:$0x1]
    %v2019 = vperm.slane %v2017, 0
    %2022 = vrot.lane.b32.xlu0 %v2012, 64
    %v2023 = vpop.permute.xlu0 %2022
    %v2024 = vsel %vm194, %v2023, 0
    %2026 = vmatpush.msra.mxu0 0.0
    %2027 = vmatpush.msra.mxu0 0.0
    %2028 = vmatpush.msra.mxu0 0.0
    %2029 = vmatpush.msra.mxu0 0.0
    %2030 = vmatpush.msra.mxu0 0.0
    %2031 = vmatpush.msra.mxu0 0.0
    %2032 = vmatpush.msra.mxu0 0.0
    %2033 = vmatpush.msra.mxu0 0.0
    %2034 = vmatpush.msra.mxu0 0.0
    %2035 = vmatpush.msra.mxu0 0.0
    %2036 = vmatpush.msra.mxu0 0.0
    %2037 = vmatpush.msra.mxu0 0.0
    %2038 = vmatpush.msra.mxu0 %v2016
    %2039 = vmatpush.msra.mxu0 %v2015
    %2040 = vmatpush.msra.mxu0 %v2014
    %2041 = vmatpush.msra.mxu0 %v2013
    %2042 = vmatmul.f32.gmra.mxu0 %v2024
    %v2043 = vpop.f32.mrf.mxu0
    %v2044 = vadd.f32 %v2019, %v2043
    %2045 = vdwg.mxu0
    %v2046 = vmax.f32 %v2044, 0.0
    %v2047 = vld [vmem:[%s10] sm:$0xff]
    %v2048 = vld [vmem:[%s10 + $0x8] sm:$0xff]
    %v2049 = vld [vmem:[%s10 + $0x10] sm:$0xff]
    %v2050 = vld [vmem:[%s10 + $0x18] sm:$0xff]
    %v2051 = vld [vmem:[%s10 + $0x20] sm:$0xff]
    %v2052 = vld [vmem:[%s10 + $0x28] sm:$0xff]
    %v2053 = vld [vmem:[%s10 + $0x30] sm:$0xff]
    %v2054 = vld [vmem:[%s10 + $0x38] sm:$0xff]
    %v2055 = vld [vmem:[%s11] sm:$0x1]
    %v2057 = vperm.slane %v2055, 0
    %vm2059 = vcmask 523264
    %v2061 = vsel %vm2059, %v2046, 0
    %2063 = vmatpush.msra.mxu0 0.0
    %2064 = vmatpush.msra.mxu0 0.0
    %2065 = vmatpush.msra.mxu0 0.0
    %2066 = vmatpush.msra.mxu0 0.0
    %2067 = vmatpush.msra.mxu0 0.0
    %2068 = vmatpush.msra.mxu0 0.0
    %2069 = vmatpush.msra.mxu0 0.0
    %2070 = vmatpush.msra.mxu0 0.0
    %2071 = vmatpush.msra.mxu0 %v2054
    %2072 = vmatpush.msra.mxu0 %v2053
    %2073 = vmatpush.msra.mxu0 %v2052
    %2074 = vmatpush.msra.mxu0 %v2051
    %2075 = vmatpush.msra.mxu0 %v2050
    %2076 = vmatpush.msra.mxu0 %v2049
    %2077 = vmatpush.msra.mxu0 %v2048
    %2078 = vmatpush.msra.mxu0 %v2047
    %2079 = vmatmul.f32.gmra.mxu0 %v2061
    %v2080 = vpop.f32.mrf.mxu0
    %v2081 = vadd.f32 %v2057, %v2080
    %2082 = vdwg.mxu0
    %vm2083 = vcmask 74752
    %2084 = vst.msk [vmem:[#allocation15] sm:$0x3] %vm2083, %v2081
    // Predicated region
    $region70: #{tpu_custom_call.1} parent=1 // pred_check
      _
    $region71: #{tpu_custom_call.1} parent=1 // pred_check_branch
      %2086 = sbr.rel (0) target = $region73
    $region72: #{tpu_custom_call.1} parent=1 // pred_region
      %2088 = vsyncadd [#allocation8], 0
      %s2090 = sshll.u32 [#allocation15], 4
      %s2091 = int_to_ptr.vmem [resolvable:$true] %s2090
      %s2092 = sshll.u32 %s12, 4
      %s2093 = int_to_ptr.hbm [resolvable:$true] %s2092
      %2095 = dma.vmem_to_hbm [thread:$0]  %s2091, 32, %s2093, [#allocation8]
    $region73: #{tpu_custom_call.1} parent=1 // pred_fallthru
      _
    // Predicated region
    $region74: #{tpu_custom_call.1} parent=1 // pred_check
      _
    $region75: #{tpu_custom_call.1} parent=1 // pred_check_branch
      %2097 = sbr.rel (0) target = $region77
    $region76: #{tpu_custom_call.1} parent=1 // pred_region
      %2099 = dma.done [#allocation8], 32
    $region77: #{tpu_custom_call.1} parent=1 // pred_fallthru
      _
    %2100 = vsyncpa [#allocation7], 1
    %2101 = vsyncpa [#allocation10], 1
    %2102 = vsyncpa [#allocation13], 1
    %2103 = vsyncpa [#allocation8], 1

</llo_original>
